<compile_context>
chip_gen: v7x
topology: tpu7x:2x2x1
jax: 0.10.0
libtpu: 0.0.40
codegen_flags: <defaults>
</compile_context>

<pallas_src>
import functools
import math

import jax
import jax.numpy as jnp
from jax.experimental import pallas as pl
from jax.experimental.pallas import tpu as pltpu


# ------------------------------ fused kernel --------------------------------

def _encoder_kernel(*refs, n_head, eps, tb, s_len, has_mask):
    idx = 0
    x_ref = refs[idx]; idx += 1                       # (TB*S, D) f32 activations
    if has_mask:
        mask_ref = refs[idx]; idx += 1                # (S, S) additive mask, f32
    else:
        mask_ref = None
    (wqkv_ref, bqkv_ref,                              # (1, D, 3D) bf16, (1, 1, 3D) f32
     wo_ref, bo_ref,                                  # (1, D, D)  bf16, (1, 1, D)  f32
     ln1g_ref, ln1b_ref,                              # (1, 1, D) f32 x2
     w1_ref, b1_ref,                                  # (1, D, H)  bf16, (1, 1, H)  f32
     w2_ref, b2_ref,                                  # (1, H, D)  bf16, (1, 1, D)  f32
     ln2g_ref, ln2b_ref) = refs[idx:idx + 12]         # (1, 1, D) f32 x2
    idx += 12
    o_ref = refs[idx]; idx += 1                       # (TB*S, D) output block
    x_scr, attn_scr = refs[idx:idx + 2]               # VMEM scratches (TB*S, D) f32

    layer = pl.program_id(1)
    n_layer = pl.num_programs(1)
    M, D = x_scr.shape
    Dh = D // n_head
    scale = 1.0 / math.sqrt(Dh)

    # First layer of this batch tile: load activations into the carried scratch.
    @pl.when(layer == 0)
    def _():
        x_scr[...] = x_ref[...]

    x = x_scr[...]                                    # (M, D) f32

    def layer_norm(h, g_ref, b_ref):
        mu = jnp.mean(h, axis=-1, keepdims=True)
        var = jnp.mean(jnp.square(h - mu), axis=-1, keepdims=True)  # biased (torch)
        return (h - mu) * jax.lax.rsqrt(var + eps) * g_ref[0] + b_ref[0]

    def proj(h_bf16, w_ref, b_ref):
        # bf16 weights (stored), bf16 activations, f32 MXU accumulation.
        return jnp.dot(h_bf16, w_ref[0],
                       preferred_element_type=jnp.float32) + b_ref[0]

    # ---- fused QKV projection: one (M,D) x (D,3D) MXU pass -------------------
    qkv = proj(x.astype(jnp.bfloat16), wqkv_ref, bqkv_ref)       # (M, 3D) f32
    qkv_b = qkv.astype(jnp.bfloat16)

    if has_mask:
        mask = mask_ref[...]

    # ---- self-attention: per sequence / per head, in-place head writes -------
    for t in range(tb):                               # static unroll, tb small
        r0 = t * s_len
        for hd in range(n_head):
            c0 = hd * Dh
            qh = qkv_b[r0:r0 + s_len, c0:c0 + Dh]
            kh = qkv_b[r0:r0 + s_len, D + c0:D + c0 + Dh]
            vh = qkv_b[r0:r0 + s_len, 2 * D + c0:2 * D + c0 + Dh]
            s_qk = jax.lax.dot_general(qh, kh, (((1,), (1,)), ((), ())),
                                       preferred_element_type=jnp.float32)
            s_qk = s_qk * scale
            if has_mask:
                s_qk = s_qk + mask
            s_qk = s_qk - jnp.max(s_qk, axis=-1, keepdims=True)
            p = jnp.exp(s_qk)
            # TODO(synk): guard fully -inf-masked rows (denominator == 0) if
            #             such masks can occur.
            p = p * pl.reciprocal(jnp.sum(p, axis=-1, keepdims=True), approx=True)
            attn_scr[r0:r0 + s_len, c0:c0 + Dh] = jnp.dot(
                p.astype(jnp.bfloat16), vh, preferred_element_type=jnp.float32)

    # ---- output projection + add & norm --------------------------------------
    a = proj(attn_scr[...].astype(jnp.bfloat16), wo_ref, bo_ref)
    x = layer_norm(x + a, ln1g_ref, ln1b_ref)

    # ---- FFN (ReLU) + add & norm ----------------------------------------------
    f = jnp.maximum(proj(x.astype(jnp.bfloat16), w1_ref, b1_ref), 0.0)
    f = proj(f.astype(jnp.bfloat16), w2_ref, b2_ref)
    x = layer_norm(x + f, ln2g_ref, ln2b_ref)

    x_scr[...] = x                                    # carry to next layer

    @pl.when(layer == n_layer - 1)
    def _():
        o_ref[...] = x.astype(o_ref.dtype)


# ------------------------------ wrapper --------------------------------------

def _pick_batch_tile(batch, seq, max_rows=256):
    """Largest #sequences per grid step with sublane-aligned rows (tb*seq % 8 == 0)
    and tb*seq <= max_rows, preferring >= 2 grid steps (keeps both v7x TCs busy)."""
    cands = [tb for tb in range(1, batch + 1)
             if batch % tb == 0 and (tb * seq) % 8 == 0 and tb * seq <= max_rows]
    if not cands:
        return batch
    multi = [tb for tb in cands if batch // tb >= 2]
    return max(multi) if multi else max(cands)


def encoder_forward(params, inp, mask=None, *, n_head, seqs_per_tile=None):
    B, S = inp.shape
    V, D = params["embed"].shape
    L = params["wqkv"].shape[0]
    H = params["w1"].shape[-1]
    assert D % n_head == 0

    # Embedding gather + positional encoding in the wrapper (no VMEM-resident
    # vocab table, no serial in-kernel gather).  Dropout = identity (eval).
    x = jnp.take(params["embed"], inp.astype(jnp.int32), axis=0)      # (B, S, D)
    x = x + params["pe"][:S][None]
    x = x.reshape(B * S, D)

    tb = seqs_per_tile if seqs_per_tile is not None else _pick_batch_tile(B, S)
    assert B % tb == 0
    m_tile = tb * S
    n_btiles = B // tb
    has_mask = mask is not None

    kernel = functools.partial(_encoder_kernel, n_head=n_head, eps=1e-5,
                               tb=tb, s_len=S, has_mask=has_mask)

    w3 = lambda b, l: (l, 0, 0)          # stream layer l's weights
    act = lambda b, l: (b, 0)            # batch tile stays resident across L

    in_specs = [pl.BlockSpec((m_tile, D), act)]
    operands = [x]
    if has_mask:
        in_specs.append(pl.BlockSpec((S, S), lambda b, l: (0, 0)))
        operands.append(mask.astype(jnp.float32))
    in_specs += [
        pl.BlockSpec((1, D, 3 * D), w3), pl.BlockSpec((1, 1, 3 * D), w3),
        pl.BlockSpec((1, D, D), w3),     pl.BlockSpec((1, 1, D), w3),
        pl.BlockSpec((1, 1, D), w3),     pl.BlockSpec((1, 1, D), w3),
        pl.BlockSpec((1, D, H), w3),     pl.BlockSpec((1, 1, H), w3),
        pl.BlockSpec((1, H, D), w3),     pl.BlockSpec((1, 1, D), w3),
        pl.BlockSpec((1, 1, D), w3),     pl.BlockSpec((1, 1, D), w3),
    ]
    operands += [params["wqkv"], params["bqkv"], params["wo"], params["bo"],
                 params["ln1_g"], params["ln1_b"],
                 params["w1"], params["b1"], params["w2"], params["b2"],
                 params["ln2_g"], params["ln2_b"]]

    # advisory cost estimate for the XLA scheduler
    flops_per_row = 2 * D * 3 * D + 2 * D * D + 4 * D * H + 4 * S * D
    cost = pl.CostEstimate(
        flops=int(B * S * L * flops_per_row),
        transcendentals=int(B * L * n_head * S * S),
        bytes_accessed=int(sum(int(a.size) * a.dtype.itemsize for a in operands)
                           + B * S * D * 4))

    out = pl.pallas_call(
        kernel,
        out_shape=jax.ShapeDtypeStruct((B * S, D), jnp.float32),
        grid_spec=pltpu.PrefetchScalarGridSpec(
            num_scalar_prefetch=0,
            grid=(n_btiles, L),                      # L innermost: x_scr carries
            in_specs=in_specs,
            out_specs=pl.BlockSpec((m_tile, D), act),
            scratch_shapes=[pltpu.VMEM((m_tile, D), jnp.float32),   # x carry
                            pltpu.VMEM((m_tile, D), jnp.float32)],  # head outputs
        ),
        compiler_params=pltpu.CompilerParams(
            dimension_semantics=("parallel", "arbitrary"),
            vmem_limit_bytes=32 * 1024 * 1024),      # explicit; safe on v5e/v6e/v7x
        cost_estimate=cost,
    )(*operands)
    return out.reshape(B, S, D)


# -------------------------- parameter construction ---------------------------

def sinusoidal_pe(max_len, d_model):
    pos = jnp.arange(max_len, dtype=jnp.float32)[:, None]
    div = jnp.exp(jnp.arange(0, d_model, 2, dtype=jnp.float32)
                  * (-math.log(10000.0) / d_model))
    pe = jnp.zeros((max_len, d_model), jnp.float32)
    pe = pe.at[:, 0::2].set(jnp.sin(pos * div))
    pe = pe.at[:, 1::2].set(jnp.cos(pos * div))
    return pe


def init_params(key, n_vocab, d_model, n_hidden, n_layer, max_len=64):
    def dense(k, shape, dtype=jnp.bfloat16):
        return (jax.random.normal(k, shape, jnp.float32) * 0.02).astype(dtype)

    keys = jax.random.split(key, 5)
    return {
        "embed": dense(keys[0], (n_vocab, d_model), jnp.float32),
        "pe": sinusoidal_pe(max_len, d_model),
        # per-layer weights stacked on a leading L axis; matrices stored bf16
        "wqkv": dense(keys[1], (n_layer, d_model, 3 * d_model)),
        "bqkv": jnp.zeros((n_layer, 1, 3 * d_model), jnp.float32),
        "wo": dense(keys[2], (n_layer, d_model, d_model)),
        "bo": jnp.zeros((n_layer, 1, d_model), jnp.float32),
        "ln1_g": jnp.ones((n_layer, 1, d_model), jnp.float32),
        "ln1_b": jnp.zeros((n_layer, 1, d_model), jnp.float32),
        "w1": dense(keys[3], (n_layer, d_model, n_hidden)),
        "b1": jnp.zeros((n_layer, 1, n_hidden), jnp.float32),
        "w2": dense(keys[4], (n_layer, n_hidden, d_model)),
        "b2": jnp.zeros((n_layer, 1, d_model), jnp.float32),
        "ln2_g": jnp.ones((n_layer, 1, d_model), jnp.float32),
        "ln2_b": jnp.zeros((n_layer, 1, d_model), jnp.float32),
    }


# ---------------------------------- main --------------------------------------

if __name__ == "__main__":
    # lane-dense d_model (multiple of 128); 2 batch tiles for the parallel axis
    n_vocab, d_model, n_hidden, n_head, n_layer = 50, 128, 256, 4, 2
    B, S = 4, 16

    key = jax.random.PRNGKey(0)
    k_par, k_ids = jax.random.split(key, 2)

    params = init_params(k_par, n_vocab, d_model, n_hidden, n_layer)
    inp = jax.random.randint(k_ids, (B, S), 0, n_vocab, jnp.int32)

    out = encoder_forward(params, inp, mask=None, n_head=n_head)
    out = jax.block_until_ready(out)

    assert out.shape == (B, S, d_model)
    assert bool(jnp.all(jnp.isfinite(out)))
    print("KERNEL_OK")
</pallas_src>

<mosaic_0001>
module attributes {stable_mosaic.version = 11 : i64} {
  func.func @_encoder_kernel(%arg0: i32, %arg1: i32, %arg2: memref<32x128xf32, #tpu.memory_space<vmem>>, %arg3: memref<1x128x384xbf16, #tpu.memory_space<vmem>>, %arg4: memref<1x1x384xf32, #tpu.memory_space<vmem>>, %arg5: memref<1x128x128xbf16, #tpu.memory_space<vmem>>, %arg6: memref<1x1x128xf32, #tpu.memory_space<vmem>>, %arg7: memref<1x1x128xf32, #tpu.memory_space<vmem>>, %arg8: memref<1x1x128xf32, #tpu.memory_space<vmem>>, %arg9: memref<1x128x256xbf16, #tpu.memory_space<vmem>>, %arg10: memref<1x1x256xf32, #tpu.memory_space<vmem>>, %arg11: memref<1x256x128xbf16, #tpu.memory_space<vmem>>, %arg12: memref<1x1x128xf32, #tpu.memory_space<vmem>>, %arg13: memref<1x1x128xf32, #tpu.memory_space<vmem>>, %arg14: memref<1x1x128xf32, #tpu.memory_space<vmem>>, %arg15: memref<32x128xf32, #tpu.memory_space<vmem>>, %arg16: memref<32x128xf32, #tpu.memory_space<vmem>>, %arg17: memref<32x128xf32, #tpu.memory_space<vmem>>) attributes {dimension_semantics = [#tpu.dimension_semantics<parallel>, #tpu.dimension_semantics<arbitrary>], iteration_bounds = array<i64: 2, 2>, scalar_prefetch = 0 : i64, scratch_operands = 2 : i64, tpu.core_type = #tpu.core_type<tc>, window_params = [{transform_indices = @transform_0, window_bounds = array<i64: 32, 128>}, {transform_indices = @transform_1, window_bounds = array<i64: 1, 128, 384>}, {transform_indices = @transform_2, window_bounds = array<i64: 1, 1, 384>}, {transform_indices = @transform_3, window_bounds = array<i64: 1, 128, 128>}, {transform_indices = @transform_4, window_bounds = array<i64: 1, 1, 128>}, {transform_indices = @transform_5, window_bounds = array<i64: 1, 1, 128>}, {transform_indices = @transform_6, window_bounds = array<i64: 1, 1, 128>}, {transform_indices = @transform_7, window_bounds = array<i64: 1, 128, 256>}, {transform_indices = @transform_8, window_bounds = array<i64: 1, 1, 256>}, {transform_indices = @transform_9, window_bounds = array<i64: 1, 256, 128>}, {transform_indices = @transform_10, window_bounds = array<i64: 1, 1, 128>}, {transform_indices = @transform_11, window_bounds = array<i64: 1, 1, 128>}, {transform_indices = @transform_12, window_bounds = array<i64: 1, 1, 128>}, {transform_indices = @transform_13, window_bounds = array<i64: 32, 128>}]} {
    %c0_i32 = arith.constant 0 : i32
    %0 = arith.cmpi eq, %arg1, %c0_i32 : i32
    %1 = arith.extui %0 : i1 to i32
    %c0_i32_0 = arith.constant 0 : i32
    %2 = arith.cmpi ne, %1, %c0_i32_0 : i32
    scf.if %2 {
      %c0_109 = arith.constant 0 : index
      %c0_110 = arith.constant 0 : index
      %250 = vector.load %arg2[%c0_109, %c0_110] : memref<32x128xf32, #tpu.memory_space<vmem>>, vector<32x128xf32>
      %c0_111 = arith.constant 0 : index
      %c0_112 = arith.constant 0 : index
      %251 = vector.load %arg16[%c0_111, %c0_112] : memref<32x128xf32, #tpu.memory_space<vmem>>, vector<32x128xf32>
      tpu.vector_store %arg16[%c0_111, %c0_112], %250 {strides = array<i32>} : memref<32x128xf32, #tpu.memory_space<vmem>>, vector<32x128xf32>,
    } else {
    }
    %c0 = arith.constant 0 : index
    %c0_1 = arith.constant 0 : index
    %3 = vector.load %arg16[%c0, %c0_1] : memref<32x128xf32, #tpu.memory_space<vmem>>, vector<32x128xf32>
    %4 = arith.truncf %3 : vector<32x128xf32> to vector<32x128xbf16>
    %c0_2 = arith.constant 0 : index
    %c0_3 = arith.constant 0 : index
    %c0_4 = arith.constant 0 : index
    %5 = vector.load %arg3[%c0_2, %c0_3, %c0_4] : memref<1x128x384xbf16, #tpu.memory_space<vmem>>, vector<1x128x384xbf16>
    %6 = vector.shape_cast %5 : vector<1x128x384xbf16> to vector<128x384xbf16>
    %cst = arith.constant dense<0.000000e+00> : vector<32x384xf32>
    %7 = tpu.matmul %4, %6, %cst {dimension_numbers = #tpu.dot_dimension_numbers<[1], [0], [0], [1], [0, 0, 1, 1], [], []>} : vector<32x128xbf16>, vector<128x384xbf16>, vector<32x384xf32> -> vector<32x384xf32>
    %c0_5 = arith.constant 0 : index
    %c0_6 = arith.constant 0 : index
    %c0_7 = arith.constant 0 : index
    %8 = vector.load %arg4[%c0_5, %c0_6, %c0_7] : memref<1x1x384xf32, #tpu.memory_space<vmem>>, vector<1x1x384xf32>
    %9 = vector.shape_cast %8 : vector<1x1x384xf32> to vector<1x384xf32>
    %10 = vector.broadcast %9 : vector<1x384xf32> to vector<32x384xf32>
    %11 = arith.addf %7, %10 : vector<32x384xf32>
    %12 = arith.truncf %11 : vector<32x384xf32> to vector<32x384xbf16>
    %13 = vector.extract_strided_slice %12 {offsets = [0, 0], sizes = [16, 32], strides = [1, 1]} : vector<32x384xbf16> to vector<16x32xbf16>
    %14 = vector.extract_strided_slice %12 {offsets = [0, 128], sizes = [16, 32], strides = [1, 1]} : vector<32x384xbf16> to vector<16x32xbf16>
    %15 = vector.extract_strided_slice %12 {offsets = [0, 256], sizes = [16, 32], strides = [1, 1]} : vector<32x384xbf16> to vector<16x32xbf16>
    %cst_8 = arith.constant dense<0.000000e+00> : vector<16x16xf32>
    %16 = tpu.matmul %13, %14, %cst_8 {dimension_numbers = #tpu.dot_dimension_numbers<[1], [1], [0], [0], [0, 0, 1, 0], [], []>} : vector<16x32xbf16>, vector<16x32xbf16>, vector<16x16xf32> -> vector<16x16xf32>
    %cst_9 = arith.constant 0.176776692 : f32
    %17 = vector.broadcast %cst_9 : f32 to vector<16x16xf32>
    %18 = arith.mulf %16, %17 : vector<16x16xf32>
    %cst_10 = arith.constant dense<0xFF800000> : vector<16xf32>
    %19 = vector.multi_reduction <maximumf>, %18, %cst_10 [1] : vector<16x16xf32> to vector<16xf32>
    %20 = vector.shape_cast %19 : vector<16xf32> to vector<16x1xf32>
    %21 = vector.broadcast %20 : vector<16x1xf32> to vector<16x16xf32>
    %22 = arith.subf %18, %21 : vector<16x16xf32>
    %23 = math.exp %22 : vector<16x16xf32>
    %cst_11 = arith.constant dense<0.000000e+00> : vector<16xf32>
    %24 = vector.multi_reduction <add>, %23, %cst_11 [1] : vector<16x16xf32> to vector<16xf32>
    %25 = vector.shape_cast %24 : vector<16xf32> to vector<16x1xf32>
    %26 = tpu.reciprocal %25 {approx = true} : vector<16x1xf32> -> vector<16x1xf32>
    %27 = vector.broadcast %26 : vector<16x1xf32> to vector<16x16xf32>
    %28 = arith.mulf %23, %27 : vector<16x16xf32>
    %29 = arith.truncf %28 : vector<16x16xf32> to vector<16x16xbf16>
    %cst_12 = arith.constant dense<0.000000e+00> : vector<16x32xf32>
    %30 = tpu.matmul %29, %15, %cst_12 {dimension_numbers = #tpu.dot_dimension_numbers<[1], [0], [0], [1], [0, 0, 1, 1], [], []>} : vector<16x16xbf16>, vector<16x32xbf16>, vector<16x32xf32> -> vector<16x32xf32>
    %c0_13 = arith.constant 0 : index
    %c0_14 = arith.constant 0 : index
    %31 = vector.load %arg17[%c0_13, %c0_14] : memref<32x128xf32, #tpu.memory_space<vmem>>, vector<16x32xf32>
    tpu.vector_store %arg17[%c0_13, %c0_14], %30 {strides = array<i32>} : memref<32x128xf32, #tpu.memory_space<vmem>>, vector<16x32xf32>,
    %32 = vector.extract_strided_slice %12 {offsets = [0, 32], sizes = [16, 32], strides = [1, 1]} : vector<32x384xbf16> to vector<16x32xbf16>
    %33 = vector.extract_strided_slice %12 {offsets = [0, 160], sizes = [16, 32], strides = [1, 1]} : vector<32x384xbf16> to vector<16x32xbf16>
    %34 = vector.extract_strided_slice %12 {offsets = [0, 288], sizes = [16, 32], strides = [1, 1]} : vector<32x384xbf16> to vector<16x32xbf16>
    %cst_15 = arith.constant dense<0.000000e+00> : vector<16x16xf32>
    %35 = tpu.matmul %32, %33, %cst_15 {dimension_numbers = #tpu.dot_dimension_numbers<[1], [1], [0], [0], [0, 0, 1, 0], [], []>} : vector<16x32xbf16>, vector<16x32xbf16>, vector<16x16xf32> -> vector<16x16xf32>
    %cst_16 = arith.constant 0.176776692 : f32
    %36 = vector.broadcast %cst_16 : f32 to vector<16x16xf32>
    %37 = arith.mulf %35, %36 : vector<16x16xf32>
    %cst_17 = arith.constant dense<0xFF800000> : vector<16xf32>
    %38 = vector.multi_reduction <maximumf>, %37, %cst_17 [1] : vector<16x16xf32> to vector<16xf32>
    %39 = vector.shape_cast %38 : vector<16xf32> to vector<16x1xf32>
    %40 = vector.broadcast %39 : vector<16x1xf32> to vector<16x16xf32>
    %41 = arith.subf %37, %40 : vector<16x16xf32>
    %42 = math.exp %41 : vector<16x16xf32>
    %cst_18 = arith.constant dense<0.000000e+00> : vector<16xf32>
    %43 = vector.multi_reduction <add>, %42, %cst_18 [1] : vector<16x16xf32> to vector<16xf32>
    %44 = vector.shape_cast %43 : vector<16xf32> to vector<16x1xf32>
    %45 = tpu.reciprocal %44 {approx = true} : vector<16x1xf32> -> vector<16x1xf32>
    %46 = vector.broadcast %45 : vector<16x1xf32> to vector<16x16xf32>
    %47 = arith.mulf %42, %46 : vector<16x16xf32>
    %48 = arith.truncf %47 : vector<16x16xf32> to vector<16x16xbf16>
    %cst_19 = arith.constant dense<0.000000e+00> : vector<16x32xf32>
    %49 = tpu.matmul %48, %34, %cst_19 {dimension_numbers = #tpu.dot_dimension_numbers<[1], [0], [0], [1], [0, 0, 1, 1], [], []>} : vector<16x16xbf16>, vector<16x32xbf16>, vector<16x32xf32> -> vector<16x32xf32>
    %c0_20 = arith.constant 0 : index
    %c32 = arith.constant 32 : index
    %50 = vector.load %arg17[%c0_20, %c32] : memref<32x128xf32, #tpu.memory_space<vmem>>, vector<16x32xf32>
    tpu.vector_store %arg17[%c0_20, %c32], %49 {strides = array<i32>} : memref<32x128xf32, #tpu.memory_space<vmem>>, vector<16x32xf32>,
    %51 = vector.extract_strided_slice %12 {offsets = [0, 64], sizes = [16, 32], strides = [1, 1]} : vector<32x384xbf16> to vector<16x32xbf16>
    %52 = vector.extract_strided_slice %12 {offsets = [0, 192], sizes = [16, 32], strides = [1, 1]} : vector<32x384xbf16> to vector<16x32xbf16>
    %53 = vector.extract_strided_slice %12 {offsets = [0, 320], sizes = [16, 32], strides = [1, 1]} : vector<32x384xbf16> to vector<16x32xbf16>
    %cst_21 = arith.constant dense<0.000000e+00> : vector<16x16xf32>
    %54 = tpu.matmul %51, %52, %cst_21 {dimension_numbers = #tpu.dot_dimension_numbers<[1], [1], [0], [0], [0, 0, 1, 0], [], []>} : vector<16x32xbf16>, vector<16x32xbf16>, vector<16x16xf32> -> vector<16x16xf32>
    %cst_22 = arith.constant 0.176776692 : f32
    %55 = vector.broadcast %cst_22 : f32 to vector<16x16xf32>
    %56 = arith.mulf %54, %55 : vector<16x16xf32>
    %cst_23 = arith.constant dense<0xFF800000> : vector<16xf32>
    %57 = vector.multi_reduction <maximumf>, %56, %cst_23 [1] : vector<16x16xf32> to vector<16xf32>
    %58 = vector.shape_cast %57 : vector<16xf32> to vector<16x1xf32>
    %59 = vector.broadcast %58 : vector<16x1xf32> to vector<16x16xf32>
    %60 = arith.subf %56, %59 : vector<16x16xf32>
    %61 = math.exp %60 : vector<16x16xf32>
    %cst_24 = arith.constant dense<0.000000e+00> : vector<16xf32>
    %62 = vector.multi_reduction <add>, %61, %cst_24 [1] : vector<16x16xf32> to vector<16xf32>
    %63 = vector.shape_cast %62 : vector<16xf32> to vector<16x1xf32>
    %64 = tpu.reciprocal %63 {approx = true} : vector<16x1xf32> -> vector<16x1xf32>
    %65 = vector.broadcast %64 : vector<16x1xf32> to vector<16x16xf32>
    %66 = arith.mulf %61, %65 : vector<16x16xf32>
    %67 = arith.truncf %66 : vector<16x16xf32> to vector<16x16xbf16>
    %cst_25 = arith.constant dense<0.000000e+00> : vector<16x32xf32>
    %68 = tpu.matmul %67, %53, %cst_25 {dimension_numbers = #tpu.dot_dimension_numbers<[1], [0], [0], [1], [0, 0, 1, 1], [], []>} : vector<16x16xbf16>, vector<16x32xbf16>, vector<16x32xf32> -> vector<16x32xf32>
    %c0_26 = arith.constant 0 : index
    %c64 = arith.constant 64 : index
    %69 = vector.load %arg17[%c0_26, %c64] : memref<32x128xf32, #tpu.memory_space<vmem>>, vector<16x32xf32>
    tpu.vector_store %arg17[%c0_26, %c64], %68 {strides = array<i32>} : memref<32x128xf32, #tpu.memory_space<vmem>>, vector<16x32xf32>,
    %70 = vector.extract_strided_slice %12 {offsets = [0, 96], sizes = [16, 32], strides = [1, 1]} : vector<32x384xbf16> to vector<16x32xbf16>
    %71 = vector.extract_strided_slice %12 {offsets = [0, 224], sizes = [16, 32], strides = [1, 1]} : vector<32x384xbf16> to vector<16x32xbf16>
    %72 = vector.extract_strided_slice %12 {offsets = [0, 352], sizes = [16, 32], strides = [1, 1]} : vector<32x384xbf16> to vector<16x32xbf16>
    %cst_27 = arith.constant dense<0.000000e+00> : vector<16x16xf32>
    %73 = tpu.matmul %70, %71, %cst_27 {dimension_numbers = #tpu.dot_dimension_numbers<[1], [1], [0], [0], [0, 0, 1, 0], [], []>} : vector<16x32xbf16>, vector<16x32xbf16>, vector<16x16xf32> -> vector<16x16xf32>
    %cst_28 = arith.constant 0.176776692 : f32
    %74 = vector.broadcast %cst_28 : f32 to vector<16x16xf32>
    %75 = arith.mulf %73, %74 : vector<16x16xf32>
    %cst_29 = arith.constant dense<0xFF800000> : vector<16xf32>
    %76 = vector.multi_reduction <maximumf>, %75, %cst_29 [1] : vector<16x16xf32> to vector<16xf32>
    %77 = vector.shape_cast %76 : vector<16xf32> to vector<16x1xf32>
    %78 = vector.broadcast %77 : vector<16x1xf32> to vector<16x16xf32>
    %79 = arith.subf %75, %78 : vector<16x16xf32>
    %80 = math.exp %79 : vector<16x16xf32>
    %cst_30 = arith.constant dense<0.000000e+00> : vector<16xf32>
    %81 = vector.multi_reduction <add>, %80, %cst_30 [1] : vector<16x16xf32> to vector<16xf32>
    %82 = vector.shape_cast %81 : vector<16xf32> to vector<16x1xf32>
    %83 = tpu.reciprocal %82 {approx = true} : vector<16x1xf32> -> vector<16x1xf32>
    %84 = vector.broadcast %83 : vector<16x1xf32> to vector<16x16xf32>
    %85 = arith.mulf %80, %84 : vector<16x16xf32>
    %86 = arith.truncf %85 : vector<16x16xf32> to vector<16x16xbf16>
    %cst_31 = arith.constant dense<0.000000e+00> : vector<16x32xf32>
    %87 = tpu.matmul %86, %72, %cst_31 {dimension_numbers = #tpu.dot_dimension_numbers<[1], [0], [0], [1], [0, 0, 1, 1], [], []>} : vector<16x16xbf16>, vector<16x32xbf16>, vector<16x32xf32> -> vector<16x32xf32>
    %c0_32 = arith.constant 0 : index
    %c96 = arith.constant 96 : index
    %88 = vector.load %arg17[%c0_32, %c96] : memref<32x128xf32, #tpu.memory_space<vmem>>, vector<16x32xf32>
    tpu.vector_store %arg17[%c0_32, %c96], %87 {strides = array<i32>} : memref<32x128xf32, #tpu.memory_space<vmem>>, vector<16x32xf32>,
    %89 = vector.extract_strided_slice %12 {offsets = [16, 0], sizes = [16, 32], strides = [1, 1]} : vector<32x384xbf16> to vector<16x32xbf16>
    %90 = vector.extract_strided_slice %12 {offsets = [16, 128], sizes = [16, 32], strides = [1, 1]} : vector<32x384xbf16> to vector<16x32xbf16>
    %91 = vector.extract_strided_slice %12 {offsets = [16, 256], sizes = [16, 32], strides = [1, 1]} : vector<32x384xbf16> to vector<16x32xbf16>
    %cst_33 = arith.constant dense<0.000000e+00> : vector<16x16xf32>
    %92 = tpu.matmul %89, %90, %cst_33 {dimension_numbers = #tpu.dot_dimension_numbers<[1], [1], [0], [0], [0, 0, 1, 0], [], []>} : vector<16x32xbf16>, vector<16x32xbf16>, vector<16x16xf32> -> vector<16x16xf32>
    %cst_34 = arith.constant 0.176776692 : f32
    %93 = vector.broadcast %cst_34 : f32 to vector<16x16xf32>
    %94 = arith.mulf %92, %93 : vector<16x16xf32>
    %cst_35 = arith.constant dense<0xFF800000> : vector<16xf32>
    %95 = vector.multi_reduction <maximumf>, %94, %cst_35 [1] : vector<16x16xf32> to vector<16xf32>
    %96 = vector.shape_cast %95 : vector<16xf32> to vector<16x1xf32>
    %97 = vector.broadcast %96 : vector<16x1xf32> to vector<16x16xf32>
    %98 = arith.subf %94, %97 : vector<16x16xf32>
    %99 = math.exp %98 : vector<16x16xf32>
    %cst_36 = arith.constant dense<0.000000e+00> : vector<16xf32>
    %100 = vector.multi_reduction <add>, %99, %cst_36 [1] : vector<16x16xf32> to vector<16xf32>
    %101 = vector.shape_cast %100 : vector<16xf32> to vector<16x1xf32>
    %102 = tpu.reciprocal %101 {approx = true} : vector<16x1xf32> -> vector<16x1xf32>
    %103 = vector.broadcast %102 : vector<16x1xf32> to vector<16x16xf32>
    %104 = arith.mulf %99, %103 : vector<16x16xf32>
    %105 = arith.truncf %104 : vector<16x16xf32> to vector<16x16xbf16>
    %cst_37 = arith.constant dense<0.000000e+00> : vector<16x32xf32>
    %106 = tpu.matmul %105, %91, %cst_37 {dimension_numbers = #tpu.dot_dimension_numbers<[1], [0], [0], [1], [0, 0, 1, 1], [], []>} : vector<16x16xbf16>, vector<16x32xbf16>, vector<16x32xf32> -> vector<16x32xf32>
    %c16 = arith.constant 16 : index
    %c0_38 = arith.constant 0 : index
    %107 = vector.load %arg17[%c16, %c0_38] : memref<32x128xf32, #tpu.memory_space<vmem>>, vector<16x32xf32>
    tpu.vector_store %arg17[%c16, %c0_38], %106 {strides = array<i32>} : memref<32x128xf32, #tpu.memory_space<vmem>>, vector<16x32xf32>,
    %108 = vector.extract_strided_slice %12 {offsets = [16, 32], sizes = [16, 32], strides = [1, 1]} : vector<32x384xbf16> to vector<16x32xbf16>
    %109 = vector.extract_strided_slice %12 {offsets = [16, 160], sizes = [16, 32], strides = [1, 1]} : vector<32x384xbf16> to vector<16x32xbf16>
    %110 = vector.extract_strided_slice %12 {offsets = [16, 288], sizes = [16, 32], strides = [1, 1]} : vector<32x384xbf16> to vector<16x32xbf16>
    %cst_39 = arith.constant dense<0.000000e+00> : vector<16x16xf32>
    %111 = tpu.matmul %108, %109, %cst_39 {dimension_numbers = #tpu.dot_dimension_numbers<[1], [1], [0], [0], [0, 0, 1, 0], [], []>} : vector<16x32xbf16>, vector<16x32xbf16>, vector<16x16xf32> -> vector<16x16xf32>
    %cst_40 = arith.constant 0.176776692 : f32
    %112 = vector.broadcast %cst_40 : f32 to vector<16x16xf32>
    %113 = arith.mulf %111, %112 : vector<16x16xf32>
    %cst_41 = arith.constant dense<0xFF800000> : vector<16xf32>
    %114 = vector.multi_reduction <maximumf>, %113, %cst_41 [1] : vector<16x16xf32> to vector<16xf32>
    %115 = vector.shape_cast %114 : vector<16xf32> to vector<16x1xf32>
    %116 = vector.broadcast %115 : vector<16x1xf32> to vector<16x16xf32>
    %117 = arith.subf %113, %116 : vector<16x16xf32>
    %118 = math.exp %117 : vector<16x16xf32>
    %cst_42 = arith.constant dense<0.000000e+00> : vector<16xf32>
    %119 = vector.multi_reduction <add>, %118, %cst_42 [1] : vector<16x16xf32> to vector<16xf32>
    %120 = vector.shape_cast %119 : vector<16xf32> to vector<16x1xf32>
    %121 = tpu.reciprocal %120 {approx = true} : vector<16x1xf32> -> vector<16x1xf32>
    %122 = vector.broadcast %121 : vector<16x1xf32> to vector<16x16xf32>
    %123 = arith.mulf %118, %122 : vector<16x16xf32>
    %124 = arith.truncf %123 : vector<16x16xf32> to vector<16x16xbf16>
    %cst_43 = arith.constant dense<0.000000e+00> : vector<16x32xf32>
    %125 = tpu.matmul %124, %110, %cst_43 {dimension_numbers = #tpu.dot_dimension_numbers<[1], [0], [0], [1], [0, 0, 1, 1], [], []>} : vector<16x16xbf16>, vector<16x32xbf16>, vector<16x32xf32> -> vector<16x32xf32>
    %c16_44 = arith.constant 16 : index
    %c32_45 = arith.constant 32 : index
    %126 = vector.load %arg17[%c16_44, %c32_45] : memref<32x128xf32, #tpu.memory_space<vmem>>, vector<16x32xf32>
    tpu.vector_store %arg17[%c16_44, %c32_45], %125 {strides = array<i32>} : memref<32x128xf32, #tpu.memory_space<vmem>>, vector<16x32xf32>,
    %127 = vector.extract_strided_slice %12 {offsets = [16, 64], sizes = [16, 32], strides = [1, 1]} : vector<32x384xbf16> to vector<16x32xbf16>
    %128 = vector.extract_strided_slice %12 {offsets = [16, 192], sizes = [16, 32], strides = [1, 1]} : vector<32x384xbf16> to vector<16x32xbf16>
    %129 = vector.extract_strided_slice %12 {offsets = [16, 320], sizes = [16, 32], strides = [1, 1]} : vector<32x384xbf16> to vector<16x32xbf16>
    %cst_46 = arith.constant dense<0.000000e+00> : vector<16x16xf32>
    %130 = tpu.matmul %127, %128, %cst_46 {dimension_numbers = #tpu.dot_dimension_numbers<[1], [1], [0], [0], [0, 0, 1, 0], [], []>} : vector<16x32xbf16>, vector<16x32xbf16>, vector<16x16xf32> -> vector<16x16xf32>
    %cst_47 = arith.constant 0.176776692 : f32
    %131 = vector.broadcast %cst_47 : f32 to vector<16x16xf32>
    %132 = arith.mulf %130, %131 : vector<16x16xf32>
    %cst_48 = arith.constant dense<0xFF800000> : vector<16xf32>
    %133 = vector.multi_reduction <maximumf>, %132, %cst_48 [1] : vector<16x16xf32> to vector<16xf32>
    %134 = vector.shape_cast %133 : vector<16xf32> to vector<16x1xf32>
    %135 = vector.broadcast %134 : vector<16x1xf32> to vector<16x16xf32>
    %136 = arith.subf %132, %135 : vector<16x16xf32>
    %137 = math.exp %136 : vector<16x16xf32>
    %cst_49 = arith.constant dense<0.000000e+00> : vector<16xf32>
    %138 = vector.multi_reduction <add>, %137, %cst_49 [1] : vector<16x16xf32> to vector<16xf32>
    %139 = vector.shape_cast %138 : vector<16xf32> to vector<16x1xf32>
    %140 = tpu.reciprocal %139 {approx = true} : vector<16x1xf32> -> vector<16x1xf32>
    %141 = vector.broadcast %140 : vector<16x1xf32> to vector<16x16xf32>
    %142 = arith.mulf %137, %141 : vector<16x16xf32>
    %143 = arith.truncf %142 : vector<16x16xf32> to vector<16x16xbf16>
    %cst_50 = arith.constant dense<0.000000e+00> : vector<16x32xf32>
    %144 = tpu.matmul %143, %129, %cst_50 {dimension_numbers = #tpu.dot_dimension_numbers<[1], [0], [0], [1], [0, 0, 1, 1], [], []>} : vector<16x16xbf16>, vector<16x32xbf16>, vector<16x32xf32> -> vector<16x32xf32>
    %c16_51 = arith.constant 16 : index
    %c64_52 = arith.constant 64 : index
    %145 = vector.load %arg17[%c16_51, %c64_52] : memref<32x128xf32, #tpu.memory_space<vmem>>, vector<16x32xf32>
    tpu.vector_store %arg17[%c16_51, %c64_52], %144 {strides = array<i32>} : memref<32x128xf32, #tpu.memory_space<vmem>>, vector<16x32xf32>,
    %146 = vector.extract_strided_slice %12 {offsets = [16, 96], sizes = [16, 32], strides = [1, 1]} : vector<32x384xbf16> to vector<16x32xbf16>
    %147 = vector.extract_strided_slice %12 {offsets = [16, 224], sizes = [16, 32], strides = [1, 1]} : vector<32x384xbf16> to vector<16x32xbf16>
    %148 = vector.extract_strided_slice %12 {offsets = [16, 352], sizes = [16, 32], strides = [1, 1]} : vector<32x384xbf16> to vector<16x32xbf16>
    %cst_53 = arith.constant dense<0.000000e+00> : vector<16x16xf32>
    %149 = tpu.matmul %146, %147, %cst_53 {dimension_numbers = #tpu.dot_dimension_numbers<[1], [1], [0], [0], [0, 0, 1, 0], [], []>} : vector<16x32xbf16>, vector<16x32xbf16>, vector<16x16xf32> -> vector<16x16xf32>
    %cst_54 = arith.constant 0.176776692 : f32
    %150 = vector.broadcast %cst_54 : f32 to vector<16x16xf32>
    %151 = arith.mulf %149, %150 : vector<16x16xf32>
    %cst_55 = arith.constant dense<0xFF800000> : vector<16xf32>
    %152 = vector.multi_reduction <maximumf>, %151, %cst_55 [1] : vector<16x16xf32> to vector<16xf32>
    %153 = vector.shape_cast %152 : vector<16xf32> to vector<16x1xf32>
    %154 = vector.broadcast %153 : vector<16x1xf32> to vector<16x16xf32>
    %155 = arith.subf %151, %154 : vector<16x16xf32>
    %156 = math.exp %155 : vector<16x16xf32>
    %cst_56 = arith.constant dense<0.000000e+00> : vector<16xf32>
    %157 = vector.multi_reduction <add>, %156, %cst_56 [1] : vector<16x16xf32> to vector<16xf32>
    %158 = vector.shape_cast %157 : vector<16xf32> to vector<16x1xf32>
    %159 = tpu.reciprocal %158 {approx = true} : vector<16x1xf32> -> vector<16x1xf32>
    %160 = vector.broadcast %159 : vector<16x1xf32> to vector<16x16xf32>
    %161 = arith.mulf %156, %160 : vector<16x16xf32>
    %162 = arith.truncf %161 : vector<16x16xf32> to vector<16x16xbf16>
    %cst_57 = arith.constant dense<0.000000e+00> : vector<16x32xf32>
    %163 = tpu.matmul %162, %148, %cst_57 {dimension_numbers = #tpu.dot_dimension_numbers<[1], [0], [0], [1], [0, 0, 1, 1], [], []>} : vector<16x16xbf16>, vector<16x32xbf16>, vector<16x32xf32> -> vector<16x32xf32>
    %c16_58 = arith.constant 16 : index
    %c96_59 = arith.constant 96 : index
    %164 = vector.load %arg17[%c16_58, %c96_59] : memref<32x128xf32, #tpu.memory_space<vmem>>, vector<16x32xf32>
    tpu.vector_store %arg17[%c16_58, %c96_59], %163 {strides = array<i32>} : memref<32x128xf32, #tpu.memory_space<vmem>>, vector<16x32xf32>,
    %c0_60 = arith.constant 0 : index
    %c0_61 = arith.constant 0 : index
    %165 = vector.load %arg17[%c0_60, %c0_61] : memref<32x128xf32, #tpu.memory_space<vmem>>, vector<32x128xf32>
    %166 = arith.truncf %165 : vector<32x128xf32> to vector<32x128xbf16>
    %c0_62 = arith.constant 0 : index
    %c0_63 = arith.constant 0 : index
    %c0_64 = arith.constant 0 : index
    %167 = vector.load %arg5[%c0_62, %c0_63, %c0_64] : memref<1x128x128xbf16, #tpu.memory_space<vmem>>, vector<1x128x128xbf16>
    %168 = vector.shape_cast %167 : vector<1x128x128xbf16> to vector<128x128xbf16>
    %cst_65 = arith.constant dense<0.000000e+00> : vector<32x128xf32>
    %169 = tpu.matmul %166, %168, %cst_65 {dimension_numbers = #tpu.dot_dimension_numbers<[1], [0], [0], [1], [0, 0, 1, 1], [], []>} : vector<32x128xbf16>, vector<128x128xbf16>, vector<32x128xf32> -> vector<32x128xf32>
    %c0_66 = arith.constant 0 : index
    %c0_67 = arith.constant 0 : index
    %c0_68 = arith.constant 0 : index
    %170 = vector.load %arg6[%c0_66, %c0_67, %c0_68] : memref<1x1x128xf32, #tpu.memory_space<vmem>>, vector<1x1x128xf32>
    %171 = vector.shape_cast %170 : vector<1x1x128xf32> to vector<1x128xf32>
    %172 = vector.broadcast %171 : vector<1x128xf32> to vector<32x128xf32>
    %173 = arith.addf %169, %172 : vector<32x128xf32>
    %174 = arith.addf %3, %173 : vector<32x128xf32>
    %cst_69 = arith.constant dense<0.000000e+00> : vector<32xf32>
    %175 = vector.multi_reduction <add>, %174, %cst_69 [1] : vector<32x128xf32> to vector<32xf32>
    %176 = vector.shape_cast %175 : vector<32xf32> to vector<32x1xf32>
    %cst_70 = arith.constant 1.280000e+02 : f32
    %177 = vector.broadcast %cst_70 : f32 to vector<32x1xf32>
    %178 = arith.divf %176, %177 : vector<32x1xf32>
    %179 = vector.broadcast %178 : vector<32x1xf32> to vector<32x128xf32>
    %180 = arith.subf %174, %179 : vector<32x128xf32>
    %181 = arith.mulf %180, %180 : vector<32x128xf32>
    %cst_71 = arith.constant dense<0.000000e+00> : vector<32xf32>
    %182 = vector.multi_reduction <add>, %181, %cst_71 [1] : vector<32x128xf32> to vector<32xf32>
    %183 = vector.shape_cast %182 : vector<32xf32> to vector<32x1xf32>
    %cst_72 = arith.constant 1.280000e+02 : f32
    %184 = vector.broadcast %cst_72 : f32 to vector<32x1xf32>
    %185 = arith.divf %183, %184 : vector<32x1xf32>
    %186 = vector.broadcast %178 : vector<32x1xf32> to vector<32x128xf32>
    %187 = arith.subf %174, %186 : vector<32x128xf32>
    %cst_73 = arith.constant 9.99999974E-6 : f32
    %188 = vector.broadcast %cst_73 : f32 to vector<32x1xf32>
    %189 = arith.addf %185, %188 : vector<32x1xf32>
    %190 = math.rsqrt %189 : vector<32x1xf32>
    %191 = vector.broadcast %190 : vector<32x1xf32> to vector<32x128xf32>
    %192 = arith.mulf %187, %191 : vector<32x128xf32>
    %c0_74 = arith.constant 0 : index
    %c0_75 = arith.constant 0 : index
    %c0_76 = arith.constant 0 : index
    %193 = vector.load %arg7[%c0_74, %c0_75, %c0_76] : memref<1x1x128xf32, #tpu.memory_space<vmem>>, vector<1x1x128xf32>
    %194 = vector.shape_cast %193 : vector<1x1x128xf32> to vector<1x128xf32>
    %195 = vector.broadcast %194 : vector<1x128xf32> to vector<32x128xf32>
    %196 = arith.mulf %192, %195 : vector<32x128xf32>
    %c0_77 = arith.constant 0 : index
    %c0_78 = arith.constant 0 : index
    %c0_79 = arith.constant 0 : index
    %197 = vector.load %arg8[%c0_77, %c0_78, %c0_79] : memref<1x1x128xf32, #tpu.memory_space<vmem>>, vector<1x1x128xf32>
    %198 = vector.shape_cast %197 : vector<1x1x128xf32> to vector<1x128xf32>
    %199 = vector.broadcast %198 : vector<1x128xf32> to vector<32x128xf32>
    %200 = arith.addf %196, %199 : vector<32x128xf32>
    %201 = arith.truncf %200 : vector<32x128xf32> to vector<32x128xbf16>
    %c0_80 = arith.constant 0 : index
    %c0_81 = arith.constant 0 : index
    %c0_82 = arith.constant 0 : index
    %202 = vector.load %arg9[%c0_80, %c0_81, %c0_82] : memref<1x128x256xbf16, #tpu.memory_space<vmem>>, vector<1x128x256xbf16>
    %203 = vector.shape_cast %202 : vector<1x128x256xbf16> to vector<128x256xbf16>
    %cst_83 = arith.constant dense<0.000000e+00> : vector<32x256xf32>
    %204 = tpu.matmul %201, %203, %cst_83 {dimension_numbers = #tpu.dot_dimension_numbers<[1], [0], [0], [1], [0, 0, 1, 1], [], []>} : vector<32x128xbf16>, vector<128x256xbf16>, vector<32x256xf32> -> vector<32x256xf32>
    %c0_84 = arith.constant 0 : index
    %c0_85 = arith.constant 0 : index
    %c0_86 = arith.constant 0 : index
    %205 = vector.load %arg10[%c0_84, %c0_85, %c0_86] : memref<1x1x256xf32, #tpu.memory_space<vmem>>, vector<1x1x256xf32>
    %206 = vector.shape_cast %205 : vector<1x1x256xf32> to vector<1x256xf32>
    %207 = vector.broadcast %206 : vector<1x256xf32> to vector<32x256xf32>
    %208 = arith.addf %204, %207 : vector<32x256xf32>
    %cst_87 = arith.constant 0.000000e+00 : f32
    %209 = vector.broadcast %cst_87 : f32 to vector<32x256xf32>
    %210 = arith.maximumf %208, %209 : vector<32x256xf32>
    %211 = arith.truncf %210 : vector<32x256xf32> to vector<32x256xbf16>
    %c0_88 = arith.constant 0 : index
    %c0_89 = arith.constant 0 : index
    %c0_90 = arith.constant 0 : index
    %212 = vector.load %arg11[%c0_88, %c0_89, %c0_90] : memref<1x256x128xbf16, #tpu.memory_space<vmem>>, vector<1x256x128xbf16>
    %213 = vector.shape_cast %212 : vector<1x256x128xbf16> to vector<256x128xbf16>
    %cst_91 = arith.constant dense<0.000000e+00> : vector<32x128xf32>
    %214 = tpu.matmul %211, %213, %cst_91 {dimension_numbers = #tpu.dot_dimension_numbers<[1], [0], [0], [1], [0, 0, 1, 1], [], []>} : vector<32x256xbf16>, vector<256x128xbf16>, vector<32x128xf32> -> vector<32x128xf32>
    %c0_92 = arith.constant 0 : index
    %c0_93 = arith.constant 0 : index
    %c0_94 = arith.constant 0 : index
    %215 = vector.load %arg12[%c0_92, %c0_93, %c0_94] : memref<1x1x128xf32, #tpu.memory_space<vmem>>, vector<1x1x128xf32>
    %216 = vector.shape_cast %215 : vector<1x1x128xf32> to vector<1x128xf32>
    %217 = vector.broadcast %216 : vector<1x128xf32> to vector<32x128xf32>
    %218 = arith.addf %214, %217 : vector<32x128xf32>
    %219 = arith.addf %200, %218 : vector<32x128xf32>
    %cst_95 = arith.constant dense<0.000000e+00> : vector<32xf32>
    %220 = vector.multi_reduction <add>, %219, %cst_95 [1] : vector<32x128xf32> to vector<32xf32>
    %221 = vector.shape_cast %220 : vector<32xf32> to vector<32x1xf32>
    %cst_96 = arith.constant 1.280000e+02 : f32
    %222 = vector.broadcast %cst_96 : f32 to vector<32x1xf32>
    %223 = arith.divf %221, %222 : vector<32x1xf32>
    %224 = vector.broadcast %223 : vector<32x1xf32> to vector<32x128xf32>
    %225 = arith.subf %219, %224 : vector<32x128xf32>
    %226 = arith.mulf %225, %225 : vector<32x128xf32>
    %cst_97 = arith.constant dense<0.000000e+00> : vector<32xf32>
    %227 = vector.multi_reduction <add>, %226, %cst_97 [1] : vector<32x128xf32> to vector<32xf32>
    %228 = vector.shape_cast %227 : vector<32xf32> to vector<32x1xf32>
    %cst_98 = arith.constant 1.280000e+02 : f32
    %229 = vector.broadcast %cst_98 : f32 to vector<32x1xf32>
    %230 = arith.divf %228, %229 : vector<32x1xf32>
    %231 = vector.broadcast %223 : vector<32x1xf32> to vector<32x128xf32>
    %232 = arith.subf %219, %231 : vector<32x128xf32>
    %cst_99 = arith.constant 9.99999974E-6 : f32
    %233 = vector.broadcast %cst_99 : f32 to vector<32x1xf32>
    %234 = arith.addf %230, %233 : vector<32x1xf32>
    %235 = math.rsqrt %234 : vector<32x1xf32>
    %236 = vector.broadcast %235 : vector<32x1xf32> to vector<32x128xf32>
    %237 = arith.mulf %232, %236 : vector<32x128xf32>
    %c0_100 = arith.constant 0 : index
    %c0_101 = arith.constant 0 : index
    %c0_102 = arith.constant 0 : index
    %238 = vector.load %arg13[%c0_100, %c0_101, %c0_102] : memref<1x1x128xf32, #tpu.memory_space<vmem>>, vector<1x1x128xf32>
    %239 = vector.shape_cast %238 : vector<1x1x128xf32> to vector<1x128xf32>
    %240 = vector.broadcast %239 : vector<1x128xf32> to vector<32x128xf32>
    %241 = arith.mulf %237, %240 : vector<32x128xf32>
    %c0_103 = arith.constant 0 : index
    %c0_104 = arith.constant 0 : index
    %c0_105 = arith.constant 0 : index
    %242 = vector.load %arg14[%c0_103, %c0_104, %c0_105] : memref<1x1x128xf32, #tpu.memory_space<vmem>>, vector<1x1x128xf32>
    %243 = vector.shape_cast %242 : vector<1x1x128xf32> to vector<1x128xf32>
    %244 = vector.broadcast %243 : vector<1x128xf32> to vector<32x128xf32>
    %245 = arith.addf %241, %244 : vector<32x128xf32>
    %c0_106 = arith.constant 0 : index
    %c0_107 = arith.constant 0 : index
    %246 = vector.load %arg16[%c0_106, %c0_107] : memref<32x128xf32, #tpu.memory_space<vmem>>, vector<32x128xf32>
    tpu.vector_store %arg16[%c0_106, %c0_107], %245 {strides = array<i32>} : memref<32x128xf32, #tpu.memory_space<vmem>>, vector<32x128xf32>,
    %c1_i32 = arith.constant 1 : i32
    %247 = arith.cmpi eq, %arg1, %c1_i32 : i32
    %248 = arith.extui %247 : i1 to i32
    %c0_i32_108 = arith.constant 0 : i32
    %249 = arith.cmpi ne, %248, %c0_i32_108 : i32
    scf.if %249 {
      %c0_109 = arith.constant 0 : index
      %c0_110 = arith.constant 0 : index
      %250 = vector.load %arg15[%c0_109, %c0_110] : memref<32x128xf32, #tpu.memory_space<vmem>>, vector<32x128xf32>
      tpu.vector_store %arg15[%c0_109, %c0_110], %245 {strides = array<i32>} : memref<32x128xf32, #tpu.memory_space<vmem>>, vector<32x128xf32>,
    } else {
    }
    return
  }
  func.func @transform_0(%arg0: i32, %arg1: i32) -> (i32, i32) {
    %c0_i32 = arith.constant 0 : i32
    %c0_i32_0 = arith.constant 0 : i32
    return %arg0, %c0_i32 : i32, i32
  }
  func.func @transform_1(%arg0: i32, %arg1: i32) -> (i32, i32, i32) {
    %c0_i32 = arith.constant 0 : i32
    %c0_i32_0 = arith.constant 0 : i32
    %c0_i32_1 = arith.constant 0 : i32
    return %arg1, %c0_i32, %c0_i32_0 : i32, i32, i32
  }
  func.func @transform_2(%arg0: i32, %arg1: i32) -> (i32, i32, i32) {
    %c0_i32 = arith.constant 0 : i32
    %c0_i32_0 = arith.constant 0 : i32
    %c0_i32_1 = arith.constant 0 : i32
    return %arg1, %c0_i32, %c0_i32_0 : i32, i32, i32
  }
  func.func @transform_3(%arg0: i32, %arg1: i32) -> (i32, i32, i32) {
    %c0_i32 = arith.constant 0 : i32
    %c0_i32_0 = arith.constant 0 : i32
    %c0_i32_1 = arith.constant 0 : i32
    return %arg1, %c0_i32, %c0_i32_0 : i32, i32, i32
  }
  func.func @transform_4(%arg0: i32, %arg1: i32) -> (i32, i32, i32) {
    %c0_i32 = arith.constant 0 : i32
    %c0_i32_0 = arith.constant 0 : i32
    %c0_i32_1 = arith.constant 0 : i32
    return %arg1, %c0_i32, %c0_i32_0 : i32, i32, i32
  }
  func.func @transform_5(%arg0: i32, %arg1: i32) -> (i32, i32, i32) {
    %c0_i32 = arith.constant 0 : i32
    %c0_i32_0 = arith.constant 0 : i32
    %c0_i32_1 = arith.constant 0 : i32
    return %arg1, %c0_i32, %c0_i32_0 : i32, i32, i32
  }
  func.func @transform_6(%arg0: i32, %arg1: i32) -> (i32, i32, i32) {
    %c0_i32 = arith.constant 0 : i32
    %c0_i32_0 = arith.constant 0 : i32
    %c0_i32_1 = arith.constant 0 : i32
    return %arg1, %c0_i32, %c0_i32_0 : i32, i32, i32
  }
  func.func @transform_7(%arg0: i32, %arg1: i32) -> (i32, i32, i32) {
    %c0_i32 = arith.constant 0 : i32
    %c0_i32_0 = arith.constant 0 : i32
    %c0_i32_1 = arith.constant 0 : i32
    return %arg1, %c0_i32, %c0_i32_0 : i32, i32, i32
  }
  func.func @transform_8(%arg0: i32, %arg1: i32) -> (i32, i32, i32) {
    %c0_i32 = arith.constant 0 : i32
    %c0_i32_0 = arith.constant 0 : i32
    %c0_i32_1 = arith.constant 0 : i32
    return %arg1, %c0_i32, %c0_i32_0 : i32, i32, i32
  }
  func.func @transform_9(%arg0: i32, %arg1: i32) -> (i32, i32, i32) {
    %c0_i32 = arith.constant 0 : i32
    %c0_i32_0 = arith.constant 0 : i32
    %c0_i32_1 = arith.constant 0 : i32
    return %arg1, %c0_i32, %c0_i32_0 : i32, i32, i32
  }
  func.func @transform_10(%arg0: i32, %arg1: i32) -> (i32, i32, i32) {
    %c0_i32 = arith.constant 0 : i32
    %c0_i32_0 = arith.constant 0 : i32
    %c0_i32_1 = arith.constant 0 : i32
    return %arg1, %c0_i32, %c0_i32_0 : i32, i32, i32
  }
  func.func @transform_11(%arg0: i32, %arg1: i32) -> (i32, i32, i32) {
    %c0_i32 = arith.constant 0 : i32
    %c0_i32_0 = arith.constant 0 : i32
    %c0_i32_1 = arith.constant 0 : i32
    return %arg1, %c0_i32, %c0_i32_0 : i32, i32, i32
  }
  func.func @transform_12(%arg0: i32, %arg1: i32) -> (i32, i32, i32) {
    %c0_i32 = arith.constant 0 : i32
    %c0_i32_0 = arith.constant 0 : i32
    %c0_i32_1 = arith.constant 0 : i32
    return %arg1, %c0_i32, %c0_i32_0 : i32, i32, i32
  }
  func.func @transform_13(%arg0: i32, %arg1: i32) -> (i32, i32) {
    %c0_i32 = arith.constant 0 : i32
    %c0_i32_0 = arith.constant 0 : i32
    return %arg0, %c0_i32 : i32, i32
  }
}

</mosaic_0001>

<llo_original>
// kernel: tpu_custom_call.1
$region0: #{tpu_custom_call.1}
  #allocation0 [shape = 'u32[]', space=smem, size = 0x4, offset = 0x4, fixed_abs, tag = 'smem constant byte address 0x4 - core index']
  #allocation1 [shape = 'u32[144,128]{1,0:T(1,128)}', space=vmem, size = 0x12000, scoped, tag = 'internal scratch']
  #allocation2 [shape = 'f32[32,128]{1,0:T(8,128)}', space=vmem, size = 0x4000, scoped, tag = 'scratch operand']
  #allocation3 [shape = 'f32[32,128]{1,0:T(8,128)}', space=vmem, size = 0x4000, scoped, tag = 'scratch operand']
  %s0 = inlined_call_operand.hbm [shape: f32[64,128], index: 0, kind: input, shape index: {}]
  %s1 = inlined_call_operand.hbm [shape: bf16[2,128,384], index: 1, kind: input, shape index: {}]
  %s2 = inlined_call_operand.vmem [shape: f32[2,1,384], index: 2, kind: input, shape index: {}]
  %s3 = inlined_call_operand.hbm [shape: bf16[2,128,128], index: 3, kind: input, shape index: {}]
  %s4 = inlined_call_operand.vmem [shape: f32[2,1,128], index: 4, kind: input, shape index: {}]
  %s5 = inlined_call_operand.vmem [shape: f32[2,1,128], index: 5, kind: input, shape index: {}]
  %s6 = inlined_call_operand.vmem [shape: f32[2,1,128], index: 6, kind: input, shape index: {}]
  %s7 = inlined_call_operand.hbm [shape: bf16[2,128,256], index: 7, kind: input, shape index: {}]
  %s8 = inlined_call_operand.vmem [shape: f32[2,1,256], index: 8, kind: input, shape index: {}]
  %s9 = inlined_call_operand.hbm [shape: bf16[2,256,128], index: 9, kind: input, shape index: {}]
  %s10 = inlined_call_operand.vmem [shape: f32[2,1,128], index: 10, kind: input, shape index: {}]
  %s11 = inlined_call_operand.vmem [shape: f32[2,1,128], index: 11, kind: input, shape index: {}]
  %s12 = inlined_call_operand.vmem [shape: f32[2,1,128], index: 12, kind: input, shape index: {}]
  %s13 = inlined_call_operand.hbm [shape: f32[64,128], index: 13, kind: output, shape index: {}]
  %s14 = sld [smem:[#allocation0]]
  $region113: #{tpu_custom_call.1} parent=0
    _
  %s16 = ssub.s32 1, %s14
  %s17 = scalar_select 0, %s16, %s14
  $region1: #{tpu_custom_call.1} parent=0
    #allocation4 [shape = 'u8[32768]{0}', space=vmem, size = 0x8000, scoped, tag = 'input window, operand 0']
    #allocation5 [shape = 's32[2]{0}', space=sflag, size = 0x8, scoped, tag = 'scoped memory for tpu_custom_call.1']
    #allocation6 [shape = 's32[2]{0}', space=sflag, size = 0x8, scoped, tag = 'scoped memory for tpu_custom_call.1']
    #allocation7 [shape = 'u8[196608]{0}', space=vmem, size = 0x30000, scoped, tag = 'input window, operand 1']
    #allocation8 [shape = 's32[2]{0}', space=sflag, size = 0x8, scoped, tag = 'scoped memory for tpu_custom_call.1']
    #allocation9 [shape = 'u8[65536]{0}', space=vmem, size = 0x10000, scoped, tag = 'input window, operand 3']
    #allocation10 [shape = 'u8[131072]{0}', space=vmem, size = 0x20000, scoped, tag = 'input window, operand 7']
    #allocation11 [shape = 's32[2]{0}', space=sflag, size = 0x8, scoped, tag = 'scoped memory for tpu_custom_call.1']
    #allocation12 [shape = 'u8[131072]{0}', space=vmem, size = 0x20000, scoped, tag = 'input window, operand 9']
    #allocation13 [shape = 'u8[32768]{0}', space=vmem, size = 0x8000, scoped, tag = 'output window, operand 0']
    %18 = vsyncpa [#allocation5], 0
    %s19 = scalar_lea.sflag [#allocation5], 1
    %20 = vsyncpa %s19, 0
    %21 = vsyncpa [#allocation8], 0
    %s22 = scalar_lea.sflag [#allocation8], 1
    %23 = vsyncpa %s22, 0
    %24 = vsyncpa [#allocation11], 0
    %s25 = scalar_lea.sflag [#allocation11], 1
    %26 = vsyncpa %s25, 0
    %27 = vsyncpa [#allocation6], 0
    %s28 = scalar_lea.sflag [#allocation6], 1
    %29 = vsyncpa %s28, 0
    loop: start=0, step=1, limit=6
    $region2: #{tpu_custom_call.1} parent=1 // loop_pre_header
      _
    $region3: #{tpu_custom_call.1} parent=1 // loop_header
      %s31 = sphi 0, %s35
      %p32 = scmp.ge.s32.totalorder %s31, 6
      %s38 = sphi 0, %s50
      %s39 = sphi 0, %s46
      %s40 = sphi 0, %s38
      %s41 = sphi 0, %s39
      %s42 = sphi 0, %s40
      %s43 = sphi 0, %s41
      %s53 = sphi 0, %s55
      %s56 = sphi 0, %s53
      %s57 = sphi 0, %s56
      %s73 = sphi 0, %s57
      %s79 = sphi 0, %s81
      %s82 = sphi 0, %s79
      %s83 = sphi 0, %s82
      %s99 = sphi 0, %s83
      %s105 = sphi 0, %s107
      %s108 = sphi 0, %s105
      %s109 = sphi 0, %s108
      %s125 = sphi 0, %s109
      %s131 = sphi 0, %s133
      %s134 = sphi 0, %s131
      %s135 = sphi 0, %s134
      %s151 = sphi 0, %s135
      %s157 = sphi 0, %s159
      %s160 = sphi 0, %s157
      %s161 = sphi 0, %s160
      %s177 = sphi 0, %s161
      %s183 = sphi 0, %s185
      %s186 = sphi 0, %s183
      %s187 = sphi 0, %s186
      %s203 = sphi 0, %s187
      %s209 = sphi 0, %s211
      %s212 = sphi 0, %s209
      %s213 = sphi 0, %s212
      %s229 = sphi 0, %s213
      %s235 = sphi 0, %s237
      %s238 = sphi 0, %s235
      %s239 = sphi 0, %s238
      %s255 = sphi 0, %s239
      %s261 = sphi 0, %s263
      %s264 = sphi 0, %s261
      %s265 = sphi 0, %s264
      %s281 = sphi 0, %s265
      %s287 = sphi 0, %s289
      %s290 = sphi 0, %s287
      %s291 = sphi 0, %s290
      %s307 = sphi 0, %s291
      %s313 = sphi 0, %s315
      %s316 = sphi 0, %s313
      %s317 = sphi 0, %s316
      %s333 = sphi 0, %s317
      %s339 = sphi 0, %s341
      %s342 = sphi 0, %s339
      %s343 = sphi 0, %s342
      %s359 = sphi 0, %s343
      %s365 = sphi 0, %s367
      %s368 = sphi 0, %s365
      %s369 = sphi 0, %s368
      %s385 = sphi 0, %s369
      %s391 = sphi 0, %s393
      %s394 = sphi 0, %s391
      %s395 = sphi 0, %s394
      %s411 = sphi 0, %s395
    $region4: #{tpu_custom_call.1} parent=1 // loop_header_branch
      %34 = sbr.rel (%p32) target = $region8
    $region5: #{tpu_custom_call.1} parent=1 // loop_body
      %s36 = ssub.s32 %s31, 1
      %s37 = ssub.s32 %s31, 2
      %s44 = sadd.s32 1, %s39
      %p45 = scmp.ge.s32.totalorder %s44, 2
      %s46 = scalar_select %p45, 0, %s44
      %s47 = sadd.s32 1, %s38
      %s48 = scalar_select %p45, %s47, %s38
      %p49 = scmp.ge.s32.totalorder %s48, 2
      %s50 = scalar_select %p49, 0, %s48
      %s51 = ssub.s32 %s38, %s50
      %p52 = scmp.eq.s32.totalorder %s51, 0
      %s54 = sadd.s32 %s53, 1
      %s55 = scalar_select %p52, %s53, %s54
      %p58 = pneg %p52
      %p59 = scmp.eq.s32.totalorder %s31, 3
      %p60 = por %p58, %p59
      %p61 = scmp.ne.s32.totalorder %s53, %s56
      %p62 = scmp.eq.s32.totalorder %s31, 0
      %p63 = por %p61, %p62
      %p64 = scmp.ne.s32.totalorder %s53, %s56
      %p65 = scmp.eq.s32.totalorder %s36, 3
      %p66 = por %p64, %p65
      %p67 = scmp.ne.s32.totalorder %s56, %s57
      %p68 = scmp.eq.s32.totalorder %s36, 0
      %p69 = por %p67, %p68
      %p70 = scmp.ne.s32.totalorder %s56, %s57
      %p71 = scmp.eq.s32.totalorder %s37, 3
      %p72 = por %p70, %p71
      %p74 = scmp.ne.s32.totalorder %s57, %s73
      %p75 = scmp.eq.s32.totalorder %s37, 0
      %p76 = por %p74, %p75
      %s77 = ssub.s32 %s39, %s46
      %p78 = scmp.eq.s32.totalorder %s77, 0
      %s80 = sadd.s32 %s79, 1
      %s81 = scalar_select %p78, %s79, %s80
      %p84 = pneg %p78
      %p85 = scmp.eq.s32.totalorder %s31, 3
      %p86 = por %p84, %p85
      %p87 = scmp.ne.s32.totalorder %s79, %s82
      %p88 = scmp.eq.s32.totalorder %s31, 0
      %p89 = por %p87, %p88
      %p90 = scmp.ne.s32.totalorder %s79, %s82
      %p91 = scmp.eq.s32.totalorder %s36, 3
      %p92 = por %p90, %p91
      %p93 = scmp.ne.s32.totalorder %s82, %s83
      %p94 = scmp.eq.s32.totalorder %s36, 0
      %p95 = por %p93, %p94
      %p96 = scmp.ne.s32.totalorder %s82, %s83
      %p97 = scmp.eq.s32.totalorder %s37, 3
      %p98 = por %p96, %p97
      %p100 = scmp.ne.s32.totalorder %s83, %s99
      %p101 = scmp.eq.s32.totalorder %s37, 0
      %p102 = por %p100, %p101
      %s103 = ssub.s32 %s39, %s46
      %p104 = scmp.eq.s32.totalorder %s103, 0
      %s106 = sadd.s32 %s105, 1
      %s107 = scalar_select %p104, %s105, %s106
      %p110 = pneg %p104
      %p111 = scmp.eq.s32.totalorder %s31, 3
      %p112 = por %p110, %p111
      %p113 = scmp.ne.s32.totalorder %s105, %s108
      %p114 = scmp.eq.s32.totalorder %s31, 0
      %p115 = por %p113, %p114
      %p116 = scmp.ne.s32.totalorder %s105, %s108
      %p117 = scmp.eq.s32.totalorder %s36, 3
      %p118 = por %p116, %p117
      %p119 = scmp.ne.s32.totalorder %s108, %s109
      %p120 = scmp.eq.s32.totalorder %s36, 0
      %p121 = por %p119, %p120
      %p122 = scmp.ne.s32.totalorder %s108, %s109
      %p123 = scmp.eq.s32.totalorder %s37, 3
      %p124 = por %p122, %p123
      %p126 = scmp.ne.s32.totalorder %s109, %s125
      %p127 = scmp.eq.s32.totalorder %s37, 0
      %p128 = por %p126, %p127
      %s129 = ssub.s32 %s39, %s46
      %p130 = scmp.eq.s32.totalorder %s129, 0
      %s132 = sadd.s32 %s131, 1
      %s133 = scalar_select %p130, %s131, %s132
      %p136 = pneg %p130
      %p137 = scmp.eq.s32.totalorder %s31, 3
      %p138 = por %p136, %p137
      %p139 = scmp.ne.s32.totalorder %s131, %s134
      %p140 = scmp.eq.s32.totalorder %s31, 0
      %p141 = por %p139, %p140
      %p142 = scmp.ne.s32.totalorder %s131, %s134
      %p143 = scmp.eq.s32.totalorder %s36, 3
      %p144 = por %p142, %p143
      %p145 = scmp.ne.s32.totalorder %s134, %s135
      %p146 = scmp.eq.s32.totalorder %s36, 0
      %p147 = por %p145, %p146
      %p148 = scmp.ne.s32.totalorder %s134, %s135
      %p149 = scmp.eq.s32.totalorder %s37, 3
      %p150 = por %p148, %p149
      %p152 = scmp.ne.s32.totalorder %s135, %s151
      %p153 = scmp.eq.s32.totalorder %s37, 0
      %p154 = por %p152, %p153
      %s155 = ssub.s32 %s39, %s46
      %p156 = scmp.eq.s32.totalorder %s155, 0
      %s158 = sadd.s32 %s157, 1
      %s159 = scalar_select %p156, %s157, %s158
      %p162 = pneg %p156
      %p163 = scmp.eq.s32.totalorder %s31, 3
      %p164 = por %p162, %p163
      %p165 = scmp.ne.s32.totalorder %s157, %s160
      %p166 = scmp.eq.s32.totalorder %s31, 0
      %p167 = por %p165, %p166
      %p168 = scmp.ne.s32.totalorder %s157, %s160
      %p169 = scmp.eq.s32.totalorder %s36, 3
      %p170 = por %p168, %p169
      %p171 = scmp.ne.s32.totalorder %s160, %s161
      %p172 = scmp.eq.s32.totalorder %s36, 0
      %p173 = por %p171, %p172
      %p174 = scmp.ne.s32.totalorder %s160, %s161
      %p175 = scmp.eq.s32.totalorder %s37, 3
      %p176 = por %p174, %p175
      %p178 = scmp.ne.s32.totalorder %s161, %s177
      %p179 = scmp.eq.s32.totalorder %s37, 0
      %p180 = por %p178, %p179
      %s181 = ssub.s32 %s39, %s46
      %p182 = scmp.eq.s32.totalorder %s181, 0
      %s184 = sadd.s32 %s183, 1
      %s185 = scalar_select %p182, %s183, %s184
      %p188 = pneg %p182
      %p189 = scmp.eq.s32.totalorder %s31, 3
      %p190 = por %p188, %p189
      %p191 = scmp.ne.s32.totalorder %s183, %s186
      %p192 = scmp.eq.s32.totalorder %s31, 0
      %p193 = por %p191, %p192
      %p194 = scmp.ne.s32.totalorder %s183, %s186
      %p195 = scmp.eq.s32.totalorder %s36, 3
      %p196 = por %p194, %p195
      %p197 = scmp.ne.s32.totalorder %s186, %s187
      %p198 = scmp.eq.s32.totalorder %s36, 0
      %p199 = por %p197, %p198
      %p200 = scmp.ne.s32.totalorder %s186, %s187
      %p201 = scmp.eq.s32.totalorder %s37, 3
      %p202 = por %p200, %p201
      %p204 = scmp.ne.s32.totalorder %s187, %s203
      %p205 = scmp.eq.s32.totalorder %s37, 0
      %p206 = por %p204, %p205
      %s207 = ssub.s32 %s39, %s46
      %p208 = scmp.eq.s32.totalorder %s207, 0
      %s210 = sadd.s32 %s209, 1
      %s211 = scalar_select %p208, %s209, %s210
      %p214 = pneg %p208
      %p215 = scmp.eq.s32.totalorder %s31, 3
      %p216 = por %p214, %p215
      %p217 = scmp.ne.s32.totalorder %s209, %s212
      %p218 = scmp.eq.s32.totalorder %s31, 0
      %p219 = por %p217, %p218
      %p220 = scmp.ne.s32.totalorder %s209, %s212
      %p221 = scmp.eq.s32.totalorder %s36, 3
      %p222 = por %p220, %p221
      %p223 = scmp.ne.s32.totalorder %s212, %s213
      %p224 = scmp.eq.s32.totalorder %s36, 0
      %p225 = por %p223, %p224
      %p226 = scmp.ne.s32.totalorder %s212, %s213
      %p227 = scmp.eq.s32.totalorder %s37, 3
      %p228 = por %p226, %p227
      %p230 = scmp.ne.s32.totalorder %s213, %s229
      %p231 = scmp.eq.s32.totalorder %s37, 0
      %p232 = por %p230, %p231
      %s233 = ssub.s32 %s39, %s46
      %p234 = scmp.eq.s32.totalorder %s233, 0
      %s236 = sadd.s32 %s235, 1
      %s237 = scalar_select %p234, %s235, %s236
      %p240 = pneg %p234
      %p241 = scmp.eq.s32.totalorder %s31, 3
      %p242 = por %p240, %p241
      %p243 = scmp.ne.s32.totalorder %s235, %s238
      %p244 = scmp.eq.s32.totalorder %s31, 0
      %p245 = por %p243, %p244
      %p246 = scmp.ne.s32.totalorder %s235, %s238
      %p247 = scmp.eq.s32.totalorder %s36, 3
      %p248 = por %p246, %p247
      %p249 = scmp.ne.s32.totalorder %s238, %s239
      %p250 = scmp.eq.s32.totalorder %s36, 0
      %p251 = por %p249, %p250
      %p252 = scmp.ne.s32.totalorder %s238, %s239
      %p253 = scmp.eq.s32.totalorder %s37, 3
      %p254 = por %p252, %p253
      %p256 = scmp.ne.s32.totalorder %s239, %s255
      %p257 = scmp.eq.s32.totalorder %s37, 0
      %p258 = por %p256, %p257
      %s259 = ssub.s32 %s39, %s46
      %p260 = scmp.eq.s32.totalorder %s259, 0
      %s262 = sadd.s32 %s261, 1
      %s263 = scalar_select %p260, %s261, %s262
      %p266 = pneg %p260
      %p267 = scmp.eq.s32.totalorder %s31, 3
      %p268 = por %p266, %p267
      %p269 = scmp.ne.s32.totalorder %s261, %s264
      %p270 = scmp.eq.s32.totalorder %s31, 0
      %p271 = por %p269, %p270
      %p272 = scmp.ne.s32.totalorder %s261, %s264
      %p273 = scmp.eq.s32.totalorder %s36, 3
      %p274 = por %p272, %p273
      %p275 = scmp.ne.s32.totalorder %s264, %s265
      %p276 = scmp.eq.s32.totalorder %s36, 0
      %p277 = por %p275, %p276
      %p278 = scmp.ne.s32.totalorder %s264, %s265
      %p279 = scmp.eq.s32.totalorder %s37, 3
      %p280 = por %p278, %p279
      %p282 = scmp.ne.s32.totalorder %s265, %s281
      %p283 = scmp.eq.s32.totalorder %s37, 0
      %p284 = por %p282, %p283
      %s285 = ssub.s32 %s39, %s46
      %p286 = scmp.eq.s32.totalorder %s285, 0
      %s288 = sadd.s32 %s287, 1
      %s289 = scalar_select %p286, %s287, %s288
      %p292 = pneg %p286
      %p293 = scmp.eq.s32.totalorder %s31, 3
      %p294 = por %p292, %p293
      %p295 = scmp.ne.s32.totalorder %s287, %s290
      %p296 = scmp.eq.s32.totalorder %s31, 0
      %p297 = por %p295, %p296
      %p298 = scmp.ne.s32.totalorder %s287, %s290
      %p299 = scmp.eq.s32.totalorder %s36, 3
      %p300 = por %p298, %p299
      %p301 = scmp.ne.s32.totalorder %s290, %s291
      %p302 = scmp.eq.s32.totalorder %s36, 0
      %p303 = por %p301, %p302
      %p304 = scmp.ne.s32.totalorder %s290, %s291
      %p305 = scmp.eq.s32.totalorder %s37, 3
      %p306 = por %p304, %p305
      %p308 = scmp.ne.s32.totalorder %s291, %s307
      %p309 = scmp.eq.s32.totalorder %s37, 0
      %p310 = por %p308, %p309
      %s311 = ssub.s32 %s39, %s46
      %p312 = scmp.eq.s32.totalorder %s311, 0
      %s314 = sadd.s32 %s313, 1
      %s315 = scalar_select %p312, %s313, %s314
      %p318 = pneg %p312
      %p319 = scmp.eq.s32.totalorder %s31, 3
      %p320 = por %p318, %p319
      %p321 = scmp.ne.s32.totalorder %s313, %s316
      %p322 = scmp.eq.s32.totalorder %s31, 0
      %p323 = por %p321, %p322
      %p324 = scmp.ne.s32.totalorder %s313, %s316
      %p325 = scmp.eq.s32.totalorder %s36, 3
      %p326 = por %p324, %p325
      %p327 = scmp.ne.s32.totalorder %s316, %s317
      %p328 = scmp.eq.s32.totalorder %s36, 0
      %p329 = por %p327, %p328
      %p330 = scmp.ne.s32.totalorder %s316, %s317
      %p331 = scmp.eq.s32.totalorder %s37, 3
      %p332 = por %p330, %p331
      %p334 = scmp.ne.s32.totalorder %s317, %s333
      %p335 = scmp.eq.s32.totalorder %s37, 0
      %p336 = por %p334, %p335
      %s337 = ssub.s32 %s39, %s46
      %p338 = scmp.eq.s32.totalorder %s337, 0
      %s340 = sadd.s32 %s339, 1
      %s341 = scalar_select %p338, %s339, %s340
      %p344 = pneg %p338
      %p345 = scmp.eq.s32.totalorder %s31, 3
      %p346 = por %p344, %p345
      %p347 = scmp.ne.s32.totalorder %s339, %s342
      %p348 = scmp.eq.s32.totalorder %s31, 0
      %p349 = por %p347, %p348
      %p350 = scmp.ne.s32.totalorder %s339, %s342
      %p351 = scmp.eq.s32.totalorder %s36, 3
      %p352 = por %p350, %p351
      %p353 = scmp.ne.s32.totalorder %s342, %s343
      %p354 = scmp.eq.s32.totalorder %s36, 0
      %p355 = por %p353, %p354
      %p356 = scmp.ne.s32.totalorder %s342, %s343
      %p357 = scmp.eq.s32.totalorder %s37, 3
      %p358 = por %p356, %p357
      %p360 = scmp.ne.s32.totalorder %s343, %s359
      %p361 = scmp.eq.s32.totalorder %s37, 0
      %p362 = por %p360, %p361
      %s363 = ssub.s32 %s39, %s46
      %p364 = scmp.eq.s32.totalorder %s363, 0
      %s366 = sadd.s32 %s365, 1
      %s367 = scalar_select %p364, %s365, %s366
      %p370 = pneg %p364
      %p371 = scmp.eq.s32.totalorder %s31, 3
      %p372 = por %p370, %p371
      %p373 = scmp.ne.s32.totalorder %s365, %s368
      %p374 = scmp.eq.s32.totalorder %s31, 0
      %p375 = por %p373, %p374
      %p376 = scmp.ne.s32.totalorder %s365, %s368
      %p377 = scmp.eq.s32.totalorder %s36, 3
      %p378 = por %p376, %p377
      %p379 = scmp.ne.s32.totalorder %s368, %s369
      %p380 = scmp.eq.s32.totalorder %s36, 0
      %p381 = por %p379, %p380
      %p382 = scmp.ne.s32.totalorder %s368, %s369
      %p383 = scmp.eq.s32.totalorder %s37, 3
      %p384 = por %p382, %p383
      %p386 = scmp.ne.s32.totalorder %s369, %s385
      %p387 = scmp.eq.s32.totalorder %s37, 0
      %p388 = por %p386, %p387
      %s389 = ssub.s32 %s38, %s50
      %p390 = scmp.eq.s32.totalorder %s389, 0
      %s392 = sadd.s32 %s391, 1
      %s393 = scalar_select %p390, %s391, %s392
      %p396 = pneg %p390
      %p397 = scmp.eq.s32.totalorder %s31, 3
      %p398 = por %p396, %p397
      %p399 = scmp.ne.s32.totalorder %s391, %s394
      %p400 = scmp.eq.s32.totalorder %s31, 0
      %p401 = por %p399, %p400
      %p402 = scmp.ne.s32.totalorder %s391, %s394
      %p403 = scmp.eq.s32.totalorder %s36, 3
      %p404 = por %p402, %p403
      %p405 = scmp.ne.s32.totalorder %s394, %s395
      %p406 = scmp.eq.s32.totalorder %s36, 0
      %p407 = por %p405, %p406
      %p408 = scmp.ne.s32.totalorder %s394, %s395
      %p409 = scmp.eq.s32.totalorder %s37, 3
      %p410 = por %p408, %p409
      %p412 = scmp.ne.s32.totalorder %s395, %s411
      %p413 = scmp.eq.s32.totalorder %s37, 0
      %p414 = por %p412, %p413
      %p415 = scmp.le.s32.totalorder 1, %s31
      %p416 = scmp.lt.s32.totalorder %s31, 5
      %p417 = pnand %p415, %p416
      %p418 = pneg %p417
      // Predicated region
      $region9: #{tpu_custom_call.1} parent=5 // pred_check
        _
      $region10: #{tpu_custom_call.1} parent=5 // pred_check_branch
        %420 = sbr.rel (%p417) target = $region12
      $region11: #{tpu_custom_call.1} parent=5 // pred_region
        %s421 = ssub.s32 %s31, 1
      $region12: #{tpu_custom_call.1} parent=5 // pred_fallthru
        _
      %p422 = scmp.lt.s32.totalorder %s31, 4
      // Predicated region
      $region13: #{tpu_custom_call.1} parent=5 // pred_check
        %p423 = pneg %p422
      $region14: #{tpu_custom_call.1} parent=5 // pred_check_branch
        %425 = sbr.rel (%p423) target = $region16
      $region15: #{tpu_custom_call.1} parent=5 // pred_region
        // Predicated region
        $region17: #{tpu_custom_call.1} parent=15 // pred_check
          %p426 = pneg %p63
        $region18: #{tpu_custom_call.1} parent=15 // pred_check_branch
          %428 = sbr.rel (%p426) target = $region20
        $region19: #{tpu_custom_call.1} parent=15 // pred_region
          %s429 = sand.u32 %s53, 1
          %s430 = scalar_lea.sflag [#allocation5], %s429
          %s431 = sand.u32 %s53, 1
          %s432 = smul.addr %s431, 32
          %s433 = scalar_lea.vmem [#allocation4], %s432
          %s434 = smul.u32 4, %s38
          %s436 = ssub.s32 512, 512
          %437 = vsyncadd %s430, %s436
          %s438 = smul.addr %s434, 128
          %s439 = scalar_lea.hbm %s0, %s438
          %s440 = sshll.u32 %s433, 4
          %s441 = int_to_ptr.vmem [resolvable:$true] %s440
          %446 = dma.hbm_to_vmem [thread:$0]  %s439, 512, %s441, %s430, 128, 128, 8
        $region20: #{tpu_custom_call.1} parent=15 // pred_fallthru
          _
        // Predicated region
        $region21: #{tpu_custom_call.1} parent=15 // pred_check
          %p447 = pneg %p89
        $region22: #{tpu_custom_call.1} parent=15 // pred_check_branch
          %449 = sbr.rel (%p447) target = $region24
        $region23: #{tpu_custom_call.1} parent=15 // pred_region
          %s450 = sand.u32 %s31, 1
          %s451 = scalar_lea.sflag [#allocation8], %s450
          %s452 = sand.u32 %s79, 1
          %s453 = smul.addr %s452, 192
          %s454 = scalar_lea.vmem [#allocation7], %s453
          %s456 = ssub.s32 3072, 3072
          %457 = vsyncadd %s451, %s456
          %s458 = smul.addr %s39, 48
          %s459 = smul.addr %s458, 64
          %s460 = scalar_lea.hbm %s1, %s459
          %s461 = sshll.u32 %s454, 4
          %s462 = int_to_ptr.vmem [resolvable:$true] %s461
          %467 = dma.hbm_to_vmem [thread:$0]  %s460, 3072, %s462, %s451, 192, 192, 12
        $region24: #{tpu_custom_call.1} parent=15 // pred_fallthru
          _
        // Predicated region
        $region25: #{tpu_custom_call.1} parent=15 // pred_check
          %p468 = pneg %p115
        $region26: #{tpu_custom_call.1} parent=15 // pred_check_branch
          %470 = sbr.rel (%p468) target = $region28
        $region27: #{tpu_custom_call.1} parent=15 // pred_region
          %p471 = scmp.lt.s32.totalorder %s39, 1
          %s472 = scalar_select %p471, %s39, 1
          %s473 = smul.addr %s472, 3
          %s474 = scalar_lea.vmem %s2, %s473
        $region28: #{tpu_custom_call.1} parent=15 // pred_fallthru
          _
        // Predicated region
        $region29: #{tpu_custom_call.1} parent=15 // pred_check
          %p475 = pneg %p141
        $region30: #{tpu_custom_call.1} parent=15 // pred_check_branch
          %477 = sbr.rel (%p475) target = $region32
        $region31: #{tpu_custom_call.1} parent=15 // pred_region
          %s478 = sand.u32 %s31, 1
          %s479 = scalar_lea.sflag [#allocation8], %s478
          %s480 = sand.u32 %s131, 1
          %s481 = smul.addr %s480, 64
          %s482 = scalar_lea.vmem [#allocation9], %s481
          %s484 = ssub.s32 1024, 1024
          %485 = vsyncadd %s479, %s484
          %s486 = smul.addr %s39, 16
          %s487 = smul.addr %s486, 64
          %s488 = scalar_lea.hbm %s3, %s487
          %s489 = sshll.u32 %s482, 4
          %s490 = int_to_ptr.vmem [resolvable:$true] %s489
          %495 = dma.hbm_to_vmem [thread:$0]  %s488, 1024, %s490, %s479, 64, 64, 4
        $region32: #{tpu_custom_call.1} parent=15 // pred_fallthru
          _
        // Predicated region
        $region33: #{tpu_custom_call.1} parent=15 // pred_check
          %p496 = pneg %p167
        $region34: #{tpu_custom_call.1} parent=15 // pred_check_branch
          %498 = sbr.rel (%p496) target = $region36
        $region35: #{tpu_custom_call.1} parent=15 // pred_region
          %p499 = scmp.lt.s32.totalorder %s39, 1
          %s500 = scalar_select %p499, %s39, 1
          %s501 = scalar_lea.vmem %s4, %s500
        $region36: #{tpu_custom_call.1} parent=15 // pred_fallthru
          _
        // Predicated region
        $region37: #{tpu_custom_call.1} parent=15 // pred_check
          %p502 = pneg %p193
        $region38: #{tpu_custom_call.1} parent=15 // pred_check_branch
          %504 = sbr.rel (%p502) target = $region40
        $region39: #{tpu_custom_call.1} parent=15 // pred_region
          %p505 = scmp.lt.s32.totalorder %s39, 1
          %s506 = scalar_select %p505, %s39, 1
          %s507 = scalar_lea.vmem %s5, %s506
        $region40: #{tpu_custom_call.1} parent=15 // pred_fallthru
          _
        // Predicated region
        $region41: #{tpu_custom_call.1} parent=15 // pred_check
          %p508 = pneg %p219
        $region42: #{tpu_custom_call.1} parent=15 // pred_check_branch
          %510 = sbr.rel (%p508) target = $region44
        $region43: #{tpu_custom_call.1} parent=15 // pred_region
          %p511 = scmp.lt.s32.totalorder %s39, 1
          %s512 = scalar_select %p511, %s39, 1
          %s513 = scalar_lea.vmem %s6, %s512
        $region44: #{tpu_custom_call.1} parent=15 // pred_fallthru
          _
        // Predicated region
        $region45: #{tpu_custom_call.1} parent=15 // pred_check
          %p514 = pneg %p245
        $region46: #{tpu_custom_call.1} parent=15 // pred_check_branch
          %516 = sbr.rel (%p514) target = $region48
        $region47: #{tpu_custom_call.1} parent=15 // pred_region
          %s517 = sand.u32 %s31, 1
          %s518 = scalar_lea.sflag [#allocation11], %s517
          %s519 = sand.u32 %s235, 1
          %s520 = smul.addr %s519, 128
          %s521 = scalar_lea.vmem [#allocation10], %s520
          %s523 = ssub.s32 2048, 2048
          %524 = vsyncadd %s518, %s523
          %s525 = smul.addr %s39, 32
          %s526 = smul.addr %s525, 64
          %s527 = scalar_lea.hbm %s7, %s526
          %s528 = sshll.u32 %s521, 4
          %s529 = int_to_ptr.vmem [resolvable:$true] %s528
          %534 = dma.hbm_to_vmem [thread:$0]  %s527, 2048, %s529, %s518, 128, 128, 8
        $region48: #{tpu_custom_call.1} parent=15 // pred_fallthru
          _
        // Predicated region
        $region49: #{tpu_custom_call.1} parent=15 // pred_check
          %p535 = pneg %p271
        $region50: #{tpu_custom_call.1} parent=15 // pred_check_branch
          %537 = sbr.rel (%p535) target = $region52
        $region51: #{tpu_custom_call.1} parent=15 // pred_region
          %p538 = scmp.lt.s32.totalorder %s39, 1
          %s539 = scalar_select %p538, %s39, 1
          %s540 = smul.addr %s539, 2
          %s541 = scalar_lea.vmem %s8, %s540
        $region52: #{tpu_custom_call.1} parent=15 // pred_fallthru
          _
        // Predicated region
        $region53: #{tpu_custom_call.1} parent=15 // pred_check
          %p542 = pneg %p297
        $region54: #{tpu_custom_call.1} parent=15 // pred_check_branch
          %544 = sbr.rel (%p542) target = $region56
        $region55: #{tpu_custom_call.1} parent=15 // pred_region
          %s545 = sand.u32 %s31, 1
          %s546 = scalar_lea.sflag [#allocation11], %s545
          %s547 = sand.u32 %s287, 1
          %s548 = smul.addr %s547, 128
          %s549 = scalar_lea.vmem [#allocation12], %s548
          %s551 = ssub.s32 2048, 2048
          %552 = vsyncadd %s546, %s551
          %s553 = smul.addr %s39, 32
          %s554 = smul.addr %s553, 64
          %s555 = scalar_lea.hbm %s9, %s554
          %s556 = sshll.u32 %s549, 4
          %s557 = int_to_ptr.vmem [resolvable:$true] %s556
          %562 = dma.hbm_to_vmem [thread:$0]  %s555, 2048, %s557, %s546, 64, 64, 4
        $region56: #{tpu_custom_call.1} parent=15 // pred_fallthru
          _
        // Predicated region
        $region57: #{tpu_custom_call.1} parent=15 // pred_check
          %p563 = pneg %p323
        $region58: #{tpu_custom_call.1} parent=15 // pred_check_branch
          %565 = sbr.rel (%p563) target = $region60
        $region59: #{tpu_custom_call.1} parent=15 // pred_region
          %p566 = scmp.lt.s32.totalorder %s39, 1
          %s567 = scalar_select %p566, %s39, 1
          %s568 = scalar_lea.vmem %s10, %s567
        $region60: #{tpu_custom_call.1} parent=15 // pred_fallthru
          _
        // Predicated region
        $region61: #{tpu_custom_call.1} parent=15 // pred_check
          %p569 = pneg %p349
        $region62: #{tpu_custom_call.1} parent=15 // pred_check_branch
          %571 = sbr.rel (%p569) target = $region64
        $region63: #{tpu_custom_call.1} parent=15 // pred_region
          %p572 = scmp.lt.s32.totalorder %s39, 1
          %s573 = scalar_select %p572, %s39, 1
          %s574 = scalar_lea.vmem %s11, %s573
        $region64: #{tpu_custom_call.1} parent=15 // pred_fallthru
          _
        // Predicated region
        $region65: #{tpu_custom_call.1} parent=15 // pred_check
          %p575 = pneg %p375
        $region66: #{tpu_custom_call.1} parent=15 // pred_check_branch
          %577 = sbr.rel (%p575) target = $region68
        $region67: #{tpu_custom_call.1} parent=15 // pred_region
          %p578 = scmp.lt.s32.totalorder %s39, 1
          %s579 = scalar_select %p578, %s39, 1
          %s580 = scalar_lea.vmem %s12, %s579
        $region68: #{tpu_custom_call.1} parent=15 // pred_fallthru
          _
      $region16: #{tpu_custom_call.1} parent=5 // pred_fallthru
        _
      %p581 = scmp.le.s32.totalorder 1, %s31
      %p582 = scmp.lt.s32.totalorder %s31, 5
      %p583 = pnand %p581, %p582
      %p584 = pneg %p583
      // Predicated region
      $region69: #{tpu_custom_call.1} parent=5 // pred_check
        _
      $region70: #{tpu_custom_call.1} parent=5 // pred_check_branch
        %586 = sbr.rel (%p583) target = $region72
      $region71: #{tpu_custom_call.1} parent=5 // pred_region
        %s587 = ssub.s32 %s31, 1
        %s588 = sand.u32 %s56, 1
        %s589 = scalar_lea.sflag [#allocation5], %s588
        %s590 = sand.u32 %s56, 1
        %s591 = smul.addr %s590, 32
        %s592 = scalar_lea.vmem [#allocation4], %s591
        // Predicated region
        $region73: #{tpu_custom_call.1} parent=71 // pred_check
          %p593 = pneg %p69
        $region74: #{tpu_custom_call.1} parent=71 // pred_check_branch
          %595 = sbr.rel (%p593) target = $region76
        $region75: #{tpu_custom_call.1} parent=71 // pred_region
          %596 = dma.done %s589, 512
        $region76: #{tpu_custom_call.1} parent=71 // pred_fallthru
          _
        %s597 = sand.u32 %s36, 1
        %s598 = scalar_lea.sflag [#allocation8], %s597
        %s599 = sand.u32 %s82, 1
        %s600 = smul.addr %s599, 192
        %s601 = scalar_lea.vmem [#allocation7], %s600
        // Predicated region
        $region77: #{tpu_custom_call.1} parent=71 // pred_check
          %p602 = pneg %p95
        $region78: #{tpu_custom_call.1} parent=71 // pred_check_branch
          %604 = sbr.rel (%p602) target = $region80
        $region79: #{tpu_custom_call.1} parent=71 // pred_region
          %605 = dma.done %s598, 3072
        $region80: #{tpu_custom_call.1} parent=71 // pred_fallthru
          _
        %s606 = sand.u32 %s36, 1
        %s607 = scalar_lea.sflag [#allocation8], %s606
        %s608 = sand.u32 %s134, 1
        %s609 = smul.addr %s608, 64
        %s610 = scalar_lea.vmem [#allocation9], %s609
        // Predicated region
        $region81: #{tpu_custom_call.1} parent=71 // pred_check
          %p611 = pneg %p147
        $region82: #{tpu_custom_call.1} parent=71 // pred_check_branch
          %613 = sbr.rel (%p611) target = $region84
        $region83: #{tpu_custom_call.1} parent=71 // pred_region
          %614 = dma.done %s607, 1024
        $region84: #{tpu_custom_call.1} parent=71 // pred_fallthru
          _
        %s615 = sand.u32 %s36, 1
        %s616 = scalar_lea.sflag [#allocation11], %s615
        %s617 = sand.u32 %s238, 1
        %s618 = smul.addr %s617, 128
        %s619 = scalar_lea.vmem [#allocation10], %s618
        // Predicated region
        $region85: #{tpu_custom_call.1} parent=71 // pred_check
          %p620 = pneg %p251
        $region86: #{tpu_custom_call.1} parent=71 // pred_check_branch
          %622 = sbr.rel (%p620) target = $region88
        $region87: #{tpu_custom_call.1} parent=71 // pred_region
          %623 = dma.done %s616, 2048
        $region88: #{tpu_custom_call.1} parent=71 // pred_fallthru
          _
        %s624 = sand.u32 %s36, 1
        %s625 = scalar_lea.sflag [#allocation11], %s624
        %s626 = sand.u32 %s290, 1
        %s627 = smul.addr %s626, 128
        %s628 = scalar_lea.vmem [#allocation12], %s627
        // Predicated region
        $region89: #{tpu_custom_call.1} parent=71 // pred_check
          %p629 = pneg %p303
        $region90: #{tpu_custom_call.1} parent=71 // pred_check_branch
          %631 = sbr.rel (%p629) target = $region92
        $region91: #{tpu_custom_call.1} parent=71 // pred_region
          %632 = dma.done %s625, 2048
        $region92: #{tpu_custom_call.1} parent=71 // pred_fallthru
          _
        %s633 = sand.u32 %s56, 1
        %s634 = scalar_lea.sflag [#allocation5], %s633
        %s635 = sand.u32 %s56, 1
        %s636 = smul.addr %s635, 32
        %s637 = scalar_lea.vmem [#allocation4], %s636
        %p638 = pneg %p69
        %p639 = pneg %p66
        %s640 = sand.u32 %s36, 1
        %s641 = scalar_lea.sflag [#allocation8], %s640
        %s642 = sand.u32 %s82, 1
        %s643 = smul.addr %s642, 192
        %s644 = scalar_lea.vmem [#allocation7], %s643
        %p645 = pneg %p95
        %p646 = pneg %p92
        %p647 = scmp.lt.s32.totalorder %s41, 1
        %s648 = scalar_select %p647, %s41, 1
        %s649 = smul.addr %s648, 3
        %s650 = scalar_lea.vmem %s2, %s649
        %p651 = pneg %p121
        %p652 = pneg %p118
        %s653 = sand.u32 %s36, 1
        %s654 = scalar_lea.sflag [#allocation8], %s653
        %s655 = sand.u32 %s134, 1
        %s656 = smul.addr %s655, 64
        %s657 = scalar_lea.vmem [#allocation9], %s656
        %p658 = pneg %p147
        %p659 = pneg %p144
        %p660 = scmp.lt.s32.totalorder %s41, 1
        %s661 = scalar_select %p660, %s41, 1
        %s662 = scalar_lea.vmem %s4, %s661
        %p663 = pneg %p173
        %p664 = pneg %p170
        %p665 = scmp.lt.s32.totalorder %s41, 1
        %s666 = scalar_select %p665, %s41, 1
        %s667 = scalar_lea.vmem %s5, %s666
        %p668 = pneg %p199
        %p669 = pneg %p196
        %p670 = scmp.lt.s32.totalorder %s41, 1
        %s671 = scalar_select %p670, %s41, 1
        %s672 = scalar_lea.vmem %s6, %s671
        %p673 = pneg %p225
        %p674 = pneg %p222
        %s675 = sand.u32 %s36, 1
        %s676 = scalar_lea.sflag [#allocation11], %s675
        %s677 = sand.u32 %s238, 1
        %s678 = smul.addr %s677, 128
        %s679 = scalar_lea.vmem [#allocation10], %s678
        %p680 = pneg %p251
        %p681 = pneg %p248
        %p682 = scmp.lt.s32.totalorder %s41, 1
        %s683 = scalar_select %p682, %s41, 1
        %s684 = smul.addr %s683, 2
        %s685 = scalar_lea.vmem %s8, %s684
        %p686 = pneg %p277
        %p687 = pneg %p274
        %s688 = sand.u32 %s36, 1
        %s689 = scalar_lea.sflag [#allocation11], %s688
        %s690 = sand.u32 %s290, 1
        %s691 = smul.addr %s690, 128
        %s692 = scalar_lea.vmem [#allocation12], %s691
        %p693 = pneg %p303
        %p694 = pneg %p300
        %p695 = scmp.lt.s32.totalorder %s41, 1
        %s696 = scalar_select %p695, %s41, 1
        %s697 = scalar_lea.vmem %s10, %s696
        %p698 = pneg %p329
        %p699 = pneg %p326
        %p700 = scmp.lt.s32.totalorder %s41, 1
        %s701 = scalar_select %p700, %s41, 1
        %s702 = scalar_lea.vmem %s11, %s701
        %p703 = pneg %p355
        %p704 = pneg %p352
        %p705 = scmp.lt.s32.totalorder %s41, 1
        %s706 = scalar_select %p705, %s41, 1
        %s707 = scalar_lea.vmem %s12, %s706
        %p708 = pneg %p381
        %p709 = pneg %p378
        %p710 = pneg %p407
        %p711 = pneg %p404
        %s712 = sand.u32 %s394, 1
        %s713 = scalar_lea.sflag [#allocation6], %s712
        %s714 = sand.u32 %s394, 1
        %s715 = smul.addr %s714, 32
        %s716 = scalar_lea.vmem [#allocation13], %s715
        %s717 = smul.u32 4, %s40
        %p718 = scmp.lt.s32.totalorder %s41, 1
        %s719 = scalar_select %p718, %s41, 1
        %s720 = smul.addr %s719, 3
        %s721 = scalar_lea.vmem %s2, %s720
        %p722 = scmp.lt.s32.totalorder %s41, 1
        %s723 = scalar_select %p722, %s41, 1
        %s724 = scalar_lea.vmem %s4, %s723
        %p725 = scmp.lt.s32.totalorder %s41, 1
        %s726 = scalar_select %p725, %s41, 1
        %s727 = scalar_lea.vmem %s5, %s726
        %p728 = scmp.lt.s32.totalorder %s41, 1
        %s729 = scalar_select %p728, %s41, 1
        %s730 = scalar_lea.vmem %s6, %s729
        %p731 = scmp.lt.s32.totalorder %s41, 1
        %s732 = scalar_select %p731, %s41, 1
        %s733 = smul.addr %s732, 2
        %s734 = scalar_lea.vmem %s8, %s733
        %p735 = scmp.lt.s32.totalorder %s41, 1
        %s736 = scalar_select %p735, %s41, 1
        %s737 = scalar_lea.vmem %s10, %s736
        %p738 = scmp.lt.s32.totalorder %s41, 1
        %s739 = scalar_select %p738, %s41, 1
        %s740 = scalar_lea.vmem %s11, %s739
        %p741 = scmp.lt.s32.totalorder %s41, 1
        %s742 = scalar_select %p741, %s41, 1
        %s743 = scalar_lea.vmem %s12, %s742
        %s744 = smul.u32 4, %s40
        %p746 = scmp.eq.s32.totalorder %s41, 0
        // Predicated region
        $region93: #{tpu_custom_call.1} parent=71 // pred_check
          %p747 = pneg %p746
        $region94: #{tpu_custom_call.1} parent=71 // pred_check_branch
          %749 = sbr.rel (%p747) target = $region96
        $region95: #{tpu_custom_call.1} parent=71 // pred_region
          %v750 = vld [vmem:[%s592] sm:$0xff]
          %v751 = vld [vmem:[%s592 + $0x8] sm:$0xff]
          %v752 = vld [vmem:[%s592 + $0x10] sm:$0xff]
          %v753 = vld [vmem:[%s592 + $0x18] sm:$0xff]
          %754 = vst [vmem:[#allocation2] sm:$0xff] %v750
          %755 = vst [vmem:[#allocation2 + $0x8] sm:$0xff] %v751
          %756 = vst [vmem:[#allocation2 + $0x10] sm:$0xff] %v752
          %757 = vst [vmem:[#allocation2 + $0x18] sm:$0xff] %v753
        $region96: #{tpu_custom_call.1} parent=71 // pred_fallthru
          _
        %v758 = vld [vmem:[#allocation2] sm:$0xff]
        %v759 = vld [vmem:[#allocation2 + $0x8] sm:$0xff]
        %v760 = vld [vmem:[#allocation2 + $0x10] sm:$0xff]
        %v761 = vld [vmem:[#allocation2 + $0x18] sm:$0xff]
        %v762 = vpack.c.bf16 %v759, %v758
        %v763 = vpack.c.bf16 %v761, %v760
        %v764 = vld [vmem:[%s601] sm:$0xff]
        %v765 = vld [vmem:[%s601 + $0x8] sm:$0xf]
        %v766 = vld [vmem:[%s601 + $0xc] sm:$0xff]
        %v767 = vld [vmem:[%s601 + $0x14] sm:$0xf]
        %v768 = vld [vmem:[%s601 + $0x18] sm:$0xff]
        %v769 = vld [vmem:[%s601 + $0x20] sm:$0xf]
        %v770 = vld [vmem:[%s601 + $0x24] sm:$0xff]
        %v771 = vld [vmem:[%s601 + $0x2c] sm:$0xf]
        %v772 = vld [vmem:[%s601 + $0x30] sm:$0xff]
        %v773 = vld [vmem:[%s601 + $0x38] sm:$0xf]
        %v774 = vld [vmem:[%s601 + $0x3c] sm:$0xff]
        %v775 = vld [vmem:[%s601 + $0x44] sm:$0xf]
        %v776 = vld [vmem:[%s601 + $0x48] sm:$0xff]
        %v777 = vld [vmem:[%s601 + $0x50] sm:$0xf]
        %v778 = vld [vmem:[%s601 + $0x54] sm:$0xff]
        %v779 = vld [vmem:[%s601 + $0x5c] sm:$0xf]
        %v780 = vld [vmem:[%s601 + $0x60] sm:$0xff]
        %v781 = vld [vmem:[%s601 + $0x68] sm:$0xf]
        %v782 = vld [vmem:[%s601 + $0x6c] sm:$0xff]
        %v783 = vld [vmem:[%s601 + $0x74] sm:$0xf]
        %v784 = vld [vmem:[%s601 + $0x78] sm:$0xff]
        %v785 = vld [vmem:[%s601 + $0x80] sm:$0xf]
        %v786 = vld [vmem:[%s601 + $0x84] sm:$0xff]
        %v787 = vld [vmem:[%s601 + $0x8c] sm:$0xf]
        %v788 = vld [vmem:[%s601 + $0x90] sm:$0xff]
        %v789 = vld [vmem:[%s601 + $0x98] sm:$0xf]
        %v790 = vld [vmem:[%s601 + $0x9c] sm:$0xff]
        %v791 = vld [vmem:[%s601 + $0xa4] sm:$0xf]
        %v792 = vld [vmem:[%s601 + $0xa8] sm:$0xff]
        %v793 = vld [vmem:[%s601 + $0xb0] sm:$0xf]
        %v794 = vld [vmem:[%s601 + $0xb4] sm:$0xff]
        %v795 = vld [vmem:[%s601 + $0xbc] sm:$0xf]
        %v796 = vld [vmem:[%s721] sm:$0x7]
        %v798 = vlaneseq
        %v799 = vshrl.u32 %v798, 7
        %v800 = vsub.s32 0, %v799
        %v801 = vrot.slane %v796, %v800
        %v802 = vlaneseq
        %v803 = vshrl.u32 %v802, 7
        %v804 = vsub.s32 1, %v803
        %v805 = vrot.slane %v796, %v804
        %v806 = vlaneseq
        %v807 = vshrl.u32 %v806, 7
        %v808 = vsub.s32 2, %v807
        %v809 = vrot.slane %v796, %v808
        %v845 = vunpack.c.l.b16 %v764
        %v846 = vunpack.c.h.b16 %v764
        %v847 = vunpack.c.l.b16 %v765
        %v848 = vunpack.c.l.b16 %v766
        %v849 = vunpack.c.h.b16 %v766
        %v850 = vunpack.c.l.b16 %v767
        %v851 = vunpack.c.l.b16 %v768
        %v852 = vunpack.c.h.b16 %v768
        %v853 = vunpack.c.l.b16 %v769
        %v854 = vunpack.c.l.b16 %v770
        %v855 = vunpack.c.h.b16 %v770
        %v856 = vunpack.c.l.b16 %v771
        %v857 = vunpack.c.l.b16 %v772
        %v858 = vunpack.c.h.b16 %v772
        %v859 = vunpack.c.l.b16 %v773
        %v860 = vunpack.c.l.b16 %v774
        %v861 = vunpack.c.h.b16 %v774
        %v862 = vunpack.c.l.b16 %v775
        %v863 = vunpack.c.l.b16 %v776
        %v864 = vunpack.c.h.b16 %v776
        %v865 = vunpack.c.l.b16 %v777
        %v866 = vunpack.c.l.b16 %v778
        %v867 = vunpack.c.h.b16 %v778
        %v868 = vunpack.c.l.b16 %v779
        %v869 = vunpack.c.l.b16 %v780
        %v870 = vunpack.c.h.b16 %v780
        %v871 = vunpack.c.l.b16 %v781
        %v872 = vunpack.c.l.b16 %v782
        %v873 = vunpack.c.h.b16 %v782
        %v874 = vunpack.c.l.b16 %v783
        %v875 = vunpack.c.l.b16 %v784
        %v876 = vunpack.c.h.b16 %v784
        %v877 = vunpack.c.l.b16 %v785
        %v878 = vunpack.c.l.b16 %v786
        %v879 = vunpack.c.h.b16 %v786
        %v880 = vunpack.c.l.b16 %v787
        %v881 = vunpack.c.l.b16 %v788
        %v882 = vunpack.c.h.b16 %v788
        %v883 = vunpack.c.l.b16 %v789
        %v884 = vunpack.c.l.b16 %v790
        %v885 = vunpack.c.h.b16 %v790
        %v886 = vunpack.c.l.b16 %v791
        %v887 = vunpack.c.l.b16 %v792
        %v888 = vunpack.c.h.b16 %v792
        %v889 = vunpack.c.l.b16 %v793
        %v890 = vunpack.c.l.b16 %v794
        %v891 = vunpack.c.h.b16 %v794
        %v892 = vunpack.c.l.b16 %v795
        %v893 = vpack.c.b16 %v848, %v845
        %v894 = vpack.c.b16 %v849, %v846
        %v895 = vpack.c.b16 %v850, %v847
        %v896 = vpack.c.b16 %v854, %v851
        %v897 = vpack.c.b16 %v855, %v852
        %v898 = vpack.c.b16 %v856, %v853
        %v899 = vpack.c.b16 %v860, %v857
        %v900 = vpack.c.b16 %v861, %v858
        %v901 = vpack.c.b16 %v862, %v859
        %v902 = vpack.c.b16 %v866, %v863
        %v903 = vpack.c.b16 %v867, %v864
        %v904 = vpack.c.b16 %v868, %v865
        %v905 = vpack.c.b16 %v872, %v869
        %v906 = vpack.c.b16 %v873, %v870
        %v907 = vpack.c.b16 %v874, %v871
        %v908 = vpack.c.b16 %v878, %v875
        %v909 = vpack.c.b16 %v879, %v876
        %v910 = vpack.c.b16 %v880, %v877
        %v911 = vpack.c.b16 %v884, %v881
        %v912 = vpack.c.b16 %v885, %v882
        %v913 = vpack.c.b16 %v886, %v883
        %v914 = vpack.c.b16 %v890, %v887
        %v915 = vpack.c.b16 %v891, %v888
        %v916 = vpack.c.b16 %v892, %v889
        %941 = vmatprep.subr.bf16.mxu0 %v894
        %942 = vmatpush1.bf16.msra.mxu0 %v893
        %943 = vmatprep.subr.bf16.mxu0 %v897
        %944 = vmatpush1.bf16.msra.mxu0 %v896
        %945 = vmatprep.subr.bf16.mxu0 %v900
        %946 = vmatpush1.bf16.msra.mxu0 %v899
        %947 = vmatprep.subr.bf16.mxu0 %v903
        %948 = vmatpush1.bf16.msra.mxu0 %v902
        %949 = vmatprep.subr.bf16.mxu0 %v906
        %950 = vmatpush1.bf16.msra.mxu0 %v905
        %951 = vmatprep.subr.bf16.mxu0 %v909
        %952 = vmatpush1.bf16.msra.mxu0 %v908
        %953 = vmatprep.subr.bf16.mxu0 %v912
        %954 = vmatpush1.bf16.msra.mxu0 %v911
        %955 = vmatprep.subr.bf16.mxu0 %v915
        %956 = vmatpush1.bf16.msra.mxu0 %v914
        %957 = vmatprep.subr.bf16.mxu0 0
        %958 = vmatpush1.bf16.msra.mxu0 0
        %959 = vmatprep.subr.bf16.mxu0 0
        %960 = vmatpush1.bf16.msra.mxu0 0
        %961 = vmatprep.subr.bf16.mxu0 0
        %962 = vmatpush1.bf16.msra.mxu0 0
        %963 = vmatprep.subr.bf16.mxu0 0
        %964 = vmatpush1.bf16.msra.mxu0 0
        %965 = vmatprep.subr.bf16.mxu0 0
        %966 = vmatpush1.bf16.msra.mxu0 0
        %967 = vmatprep.subr.bf16.mxu0 0
        %968 = vmatpush1.bf16.msra.mxu0 0
        %969 = vmatprep.subr.bf16.mxu0 0
        %970 = vmatpush1.bf16.msra.mxu0 0
        %971 = vmatprep.subr.bf16.mxu0 0
        %972 = vmatpush1.bf16.msra.mxu0 0
        %973 = vmatprep.mubr.bf16.mxu0 0
        %974 = vmatmul.mubr.bf16.gmra.mrb[0].mxu0 %v762
        %v975 = vpop.f32.mrb[0].mxu0
        %v976 = vadd.f32 %v801, %v975
        %v977 = vpop.f32.mrb[0].mxu0
        %v978 = vadd.f32 %v805, %v977
        %v979 = vpop.f32.mrb[0].mxu0
        %v980 = vadd.f32 %v801, %v979
        %v981 = vpop.f32.mrb[0].mxu0
        %v982 = vadd.f32 %v805, %v981
        %983 = vmatprep.mubr.bf16.mxu0 0
        %984 = vmatmul.mubr.bf16.gmra.mrb[0].mxu0 %v763
        %v985 = vpop.f32.mrb[0].mxu0
        %v986 = vadd.f32 %v801, %v985
        %v987 = vpop.f32.mrb[0].mxu0
        %v988 = vadd.f32 %v805, %v987
        %v989 = vpop.f32.mrb[0].mxu0
        %v990 = vadd.f32 %v801, %v989
        %v991 = vpop.f32.mrb[0].mxu0
        %v992 = vadd.f32 %v805, %v991
        %993 = vdwg.mxu0
        %994 = vmatprep.subr.bf16.mxu0 0
        %995 = vmatpush1.bf16.msra.mxu0 %v895
        %996 = vmatprep.subr.bf16.mxu0 0
        %997 = vmatpush1.bf16.msra.mxu0 %v898
        %998 = vmatprep.subr.bf16.mxu0 0
        %999 = vmatpush1.bf16.msra.mxu0 %v901
        %1000 = vmatprep.subr.bf16.mxu0 0
        %1001 = vmatpush1.bf16.msra.mxu0 %v904
        %1002 = vmatprep.subr.bf16.mxu0 0
        %1003 = vmatpush1.bf16.msra.mxu0 %v907
        %1004 = vmatprep.subr.bf16.mxu0 0
        %1005 = vmatpush1.bf16.msra.mxu0 %v910
        %1006 = vmatprep.subr.bf16.mxu0 0
        %1007 = vmatpush1.bf16.msra.mxu0 %v913
        %1008 = vmatprep.subr.bf16.mxu0 0
        %1009 = vmatpush1.bf16.msra.mxu0 %v916
        %1010 = vmatprep.subr.bf16.mxu0 0
        %1011 = vmatpush1.bf16.msra.mxu0 0
        %1012 = vmatprep.subr.bf16.mxu0 0
        %1013 = vmatpush1.bf16.msra.mxu0 0
        %1014 = vmatprep.subr.bf16.mxu0 0
        %1015 = vmatpush1.bf16.msra.mxu0 0
        %1016 = vmatprep.subr.bf16.mxu0 0
        %1017 = vmatpush1.bf16.msra.mxu0 0
        %1018 = vmatprep.subr.bf16.mxu0 0
        %1019 = vmatpush1.bf16.msra.mxu0 0
        %1020 = vmatprep.subr.bf16.mxu0 0
        %1021 = vmatpush1.bf16.msra.mxu0 0
        %1022 = vmatprep.subr.bf16.mxu0 0
        %1023 = vmatpush1.bf16.msra.mxu0 0
        %1024 = vmatprep.subr.bf16.mxu0 0
        %1025 = vmatpush1.bf16.msra.mxu0 0
        %1026 = vmatprep.mubr.bf16.mxu0 0
        %1027 = vmatmul.mubr.bf16.gmra.mrb[0].mxu0 %v762
        %v1028 = vpop.f32.mrb[0].mxu0
        %v1029 = vadd.f32 %v809, %v1028
        %v1030 = vpop.f32.mrb[0].mxu0
        %v1031 = vpop.f32.mrb[0].mxu0
        %v1032 = vadd.f32 %v809, %v1031
        %v1033 = vpop.f32.mrb[0].mxu0
        %1034 = vmatprep.mubr.bf16.mxu0 0
        %1035 = vmatmul.mubr.bf16.gmra.mrb[0].mxu0 %v763
        %v1036 = vpop.f32.mrb[0].mxu0
        %v1037 = vadd.f32 %v809, %v1036
        %v1038 = vpop.f32.mrb[0].mxu0
        %v1039 = vpop.f32.mrb[0].mxu0
        %v1040 = vadd.f32 %v809, %v1039
        %v1041 = vpop.f32.mrb[0].mxu0
        %1042 = vdwg.mxu0
        %v1043 = vpack.c.bf16 %v980, %v976
        %v1044 = vpack.c.bf16 %v982, %v978
        %v1045 = vpack.c.bf16 %v1032, %v1029
        %v1046 = vpack.c.bf16 %v990, %v986
        %v1047 = vpack.c.bf16 %v992, %v988
        %v1048 = vpack.c.bf16 %v1040, %v1037
        %vm1049 = vcmask 261120
        %v1051 = vsel %vm1049, %v1043, 0
        %v1054 = vsel %vm1049, %v1044, 0
        %1056 = vmatprep.subr.bf16.mxu0 0
        %1057 = vmatpush1.bf16.xpose.msra.mxu0 %v1054
        %1058 = vmatprep.subr.bf16.mxu0 0
        %1059 = vmatpush1.bf16.xpose.msra.mxu0 0
        %1060 = vmatprep.subr.bf16.mxu0 0
        %1061 = vmatpush1.bf16.xpose.msra.mxu0 0
        %1062 = vmatprep.subr.bf16.mxu0 0
        %1063 = vmatpush1.bf16.xpose.msra.mxu0 0
        %1064 = vmatprep.subr.bf16.mxu0 0
        %1065 = vmatpush1.bf16.xpose.msra.mxu0 0
        %1066 = vmatprep.subr.bf16.mxu0 0
        %1067 = vmatpush1.bf16.xpose.msra.mxu0 0
        %1068 = vmatprep.subr.bf16.mxu0 0
        %1069 = vmatpush1.bf16.xpose.msra.mxu0 0
        %1070 = vmatprep.subr.bf16.mxu0 0
        %1071 = vmatpush1.bf16.xpose.msra.mxu0 0
        %1072 = vmatprep.subr.bf16.mxu0 0
        %1073 = vmatpush1.bf16.xpose.msra.mxu0 0
        %1074 = vmatprep.subr.bf16.mxu0 0
        %1075 = vmatpush1.bf16.xpose.msra.mxu0 0
        %1076 = vmatprep.subr.bf16.mxu0 0
        %1077 = vmatpush1.bf16.xpose.msra.mxu0 0
        %1078 = vmatprep.subr.bf16.mxu0 0
        %1079 = vmatpush1.bf16.xpose.msra.mxu0 0
        %1080 = vmatprep.subr.bf16.mxu0 0
        %1081 = vmatpush1.bf16.xpose.msra.mxu0 0
        %1082 = vmatprep.subr.bf16.mxu0 0
        %1083 = vmatpush1.bf16.xpose.msra.mxu0 0
        %1084 = vmatprep.subr.bf16.mxu0 0
        %1085 = vmatpush1.bf16.xpose.msra.mxu0 0
        %1086 = vmatprep.subr.bf16.mxu0 0
        %1087 = vmatpush1.bf16.xpose.msra.mxu0 0
        %1088 = vmatprep.mubr.bf16.mxu0 0
        %1089 = vmatmul.mubr.bf16.gmra.mrb[0].mxu0 %v1051
        %v1090 = vpop.f32.mrb[0].mxu0
        %v1091 = vadd.f32 0.0, %v1090
        %v1092 = vpop.f32.mrb[0].mxu0
        %v1093 = vpop.f32.mrb[0].mxu0
        %v1094 = vadd.f32 0.0, %v1093
        %v1095 = vpop.f32.mrb[0].mxu0
        %1096 = vdwg.mxu0
        %v1097 = vmul.f32 %v1091, 0.17677669
        %v1098 = vmul.f32 %v1094, 0.17677669
        %vm1099 = vcmask 130048
        %v1100 = vsel %vm1099, %v1097, -inf
        %1101 = vmax.xlane.f32.xlu0 %v1100
        %v1102 = vpop.xlane.xlu0 %1101
        %v1103 = vsel %vm1099, %v1098, -inf
        %1104 = vmax.xlane.f32.xlu0 %v1103
        %v1105 = vpop.xlane.xlu0 %1104
        %v1106 = vsub.f32 %v1097, %v1102
        %v1107 = vsub.f32 %v1098, %v1105
        %v1108 = vmul.f32 %v1106, 1.442695
        %v1109 = vpow.pop %v1108
        %v1110 = vmul.f32 %v1107, 1.442695
        %v1111 = vpow.pop %v1110
        %v1112 = vsel %vm1099, %v1109, 0.0
        %1113 = vadd.xlane.f32.xlu0 %v1112
        %v1114 = vpop.xlane.xlu0 %1113
        %v1115 = vsel %vm1099, %v1111, 0.0
        %1116 = vadd.xlane.f32.xlu0 %v1115
        %v1117 = vpop.xlane.xlu0 %1116
        %v1118 = vrcp.pop %v1114
        %v1119 = vrcp.pop %v1117
        %v1120 = vmul.f32 %v1109, %v1118
        %v1121 = vmul.f32 %v1111, %v1119
        %v1122 = vpack.c.bf16 %v1121, %v1120
        %v1124 = vsel %vm1099, %v1122, 0
        %1126 = vmatprep.subr.bf16.mxu0 0
        %1127 = vmatpush1.bf16.msra.mxu0 %v1045
        %1128 = vmatprep.subr.bf16.mxu0 0
        %1129 = vmatpush1.bf16.msra.mxu0 0
        %1130 = vmatprep.subr.bf16.mxu0 0
        %1131 = vmatpush1.bf16.msra.mxu0 0
        %1132 = vmatprep.subr.bf16.mxu0 0
        %1133 = vmatpush1.bf16.msra.mxu0 0
        %1134 = vmatprep.subr.bf16.mxu0 0
        %1135 = vmatpush1.bf16.msra.mxu0 0
        %1136 = vmatprep.subr.bf16.mxu0 0
        %1137 = vmatpush1.bf16.msra.mxu0 0
        %1138 = vmatprep.subr.bf16.mxu0 0
        %1139 = vmatpush1.bf16.msra.mxu0 0
        %1140 = vmatprep.subr.bf16.mxu0 0
        %1141 = vmatpush1.bf16.msra.mxu0 0
        %1142 = vmatprep.subr.bf16.mxu0 0
        %1143 = vmatpush1.bf16.msra.mxu0 0
        %1144 = vmatprep.subr.bf16.mxu0 0
        %1145 = vmatpush1.bf16.msra.mxu0 0
        %1146 = vmatprep.subr.bf16.mxu0 0
        %1147 = vmatpush1.bf16.msra.mxu0 0
        %1148 = vmatprep.subr.bf16.mxu0 0
        %1149 = vmatpush1.bf16.msra.mxu0 0
        %1150 = vmatprep.subr.bf16.mxu0 0
        %1151 = vmatpush1.bf16.msra.mxu0 0
        %1152 = vmatprep.subr.bf16.mxu0 0
        %1153 = vmatpush1.bf16.msra.mxu0 0
        %1154 = vmatprep.subr.bf16.mxu0 0
        %1155 = vmatpush1.bf16.msra.mxu0 0
        %1156 = vmatprep.subr.bf16.mxu0 0
        %1157 = vmatpush1.bf16.msra.mxu0 0
        %1158 = vmatprep.mubr.bf16.mxu0 0
        %1159 = vmatmul.mubr.bf16.gmra.mrb[0].mxu0 %v1124
        %v1160 = vpop.f32.mrb[0].mxu0
        %v1161 = vadd.f32 0.0, %v1160
        %v1162 = vpop.f32.mrb[0].mxu0
        %v1163 = vpop.f32.mrb[0].mxu0
        %v1164 = vadd.f32 0.0, %v1163
        %v1165 = vpop.f32.mrb[0].mxu0
        %1166 = vdwg.mxu0
        %1167 = vst.msk [vmem:[#allocation3] sm:$0xff] %vm1049, %v1161
        %1168 = vst.msk [vmem:[#allocation3 + $0x8] sm:$0xff] %vm1049, %v1164
        %1170 = vrot.lane.b32.xlu0 %v1043, 96
        %v1171 = vpop.permute.xlu0 %1170
        %1173 = vrot.lane.b32.xlu0 %v1044, 96
        %v1174 = vpop.permute.xlu0 %1173
        %v1176 = vsel %vm1049, %v1171, 0
        %v1179 = vsel %vm1049, %v1174, 0
        %1181 = vmatprep.subr.bf16.mxu0 0
        %1182 = vmatpush1.bf16.xpose.msra.mxu0 %v1179
        %1183 = vmatprep.subr.bf16.mxu0 0
        %1184 = vmatpush1.bf16.xpose.msra.mxu0 0
        %1185 = vmatprep.subr.bf16.mxu0 0
        %1186 = vmatpush1.bf16.xpose.msra.mxu0 0
        %1187 = vmatprep.subr.bf16.mxu0 0
        %1188 = vmatpush1.bf16.xpose.msra.mxu0 0
        %1189 = vmatprep.subr.bf16.mxu0 0
        %1190 = vmatpush1.bf16.xpose.msra.mxu0 0
        %1191 = vmatprep.subr.bf16.mxu0 0
        %1192 = vmatpush1.bf16.xpose.msra.mxu0 0
        %1193 = vmatprep.subr.bf16.mxu0 0
        %1194 = vmatpush1.bf16.xpose.msra.mxu0 0
        %1195 = vmatprep.subr.bf16.mxu0 0
        %1196 = vmatpush1.bf16.xpose.msra.mxu0 0
        %1197 = vmatprep.subr.bf16.mxu0 0
        %1198 = vmatpush1.bf16.xpose.msra.mxu0 0
        %1199 = vmatprep.subr.bf16.mxu0 0
        %1200 = vmatpush1.bf16.xpose.msra.mxu0 0
        %1201 = vmatprep.subr.bf16.mxu0 0
        %1202 = vmatpush1.bf16.xpose.msra.mxu0 0
        %1203 = vmatprep.subr.bf16.mxu0 0
        %1204 = vmatpush1.bf16.xpose.msra.mxu0 0
        %1205 = vmatprep.subr.bf16.mxu0 0
        %1206 = vmatpush1.bf16.xpose.msra.mxu0 0
        %1207 = vmatprep.subr.bf16.mxu0 0
        %1208 = vmatpush1.bf16.xpose.msra.mxu0 0
        %1209 = vmatprep.subr.bf16.mxu0 0
        %1210 = vmatpush1.bf16.xpose.msra.mxu0 0
        %1211 = vmatprep.subr.bf16.mxu0 0
        %1212 = vmatpush1.bf16.xpose.msra.mxu0 0
        %1213 = vmatprep.mubr.bf16.mxu0 0
        %1214 = vmatmul.mubr.bf16.gmra.mrb[0].mxu0 %v1176
        %v1215 = vpop.f32.mrb[0].mxu0
        %v1216 = vadd.f32 0.0, %v1215
        %v1217 = vpop.f32.mrb[0].mxu0
        %v1218 = vpop.f32.mrb[0].mxu0
        %v1219 = vadd.f32 0.0, %v1218
        %v1220 = vpop.f32.mrb[0].mxu0
        %1221 = vdwg.mxu0
        %v1222 = vmul.f32 %v1216, 0.17677669
        %v1223 = vmul.f32 %v1219, 0.17677669
        %v1224 = vsel %vm1099, %v1222, -inf
        %1225 = vmax.xlane.f32.xlu0 %v1224
        %v1226 = vpop.xlane.xlu0 %1225
        %v1227 = vsel %vm1099, %v1223, -inf
        %1228 = vmax.xlane.f32.xlu0 %v1227
        %v1229 = vpop.xlane.xlu0 %1228
        %v1230 = vsub.f32 %v1222, %v1226
        %v1231 = vsub.f32 %v1223, %v1229
        %v1232 = vmul.f32 %v1230, 1.442695
        %v1233 = vpow.pop %v1232
        %v1234 = vmul.f32 %v1231, 1.442695
        %v1235 = vpow.pop %v1234
        %v1236 = vsel %vm1099, %v1233, 0.0
        %1237 = vadd.xlane.f32.xlu0 %v1236
        %v1238 = vpop.xlane.xlu0 %1237
        %v1239 = vsel %vm1099, %v1235, 0.0
        %1240 = vadd.xlane.f32.xlu0 %v1239
        %v1241 = vpop.xlane.xlu0 %1240
        %v1242 = vrcp.pop %v1238
        %v1243 = vrcp.pop %v1241
        %v1244 = vmul.f32 %v1233, %v1242
        %v1245 = vmul.f32 %v1235, %v1243
        %v1246 = vpack.c.bf16 %v1245, %v1244
        %1248 = vrot.lane.b32.xlu0 %v1045, 96
        %v1249 = vpop.permute.xlu0 %1248
        %v1252 = vsel %vm1099, %v1246, 0
        %1254 = vmatprep.subr.bf16.mxu0 0
        %1255 = vmatpush1.bf16.msra.mxu0 %v1249
        %1256 = vmatprep.subr.bf16.mxu0 0
        %1257 = vmatpush1.bf16.msra.mxu0 0
        %1258 = vmatprep.subr.bf16.mxu0 0
        %1259 = vmatpush1.bf16.msra.mxu0 0
        %1260 = vmatprep.subr.bf16.mxu0 0
        %1261 = vmatpush1.bf16.msra.mxu0 0
        %1262 = vmatprep.subr.bf16.mxu0 0
        %1263 = vmatpush1.bf16.msra.mxu0 0
        %1264 = vmatprep.subr.bf16.mxu0 0
        %1265 = vmatpush1.bf16.msra.mxu0 0
        %1266 = vmatprep.subr.bf16.mxu0 0
        %1267 = vmatpush1.bf16.msra.mxu0 0
        %1268 = vmatprep.subr.bf16.mxu0 0
        %1269 = vmatpush1.bf16.msra.mxu0 0
        %1270 = vmatprep.subr.bf16.mxu0 0
        %1271 = vmatpush1.bf16.msra.mxu0 0
        %1272 = vmatprep.subr.bf16.mxu0 0
        %1273 = vmatpush1.bf16.msra.mxu0 0
        %1274 = vmatprep.subr.bf16.mxu0 0
        %1275 = vmatpush1.bf16.msra.mxu0 0
        %1276 = vmatprep.subr.bf16.mxu0 0
        %1277 = vmatpush1.bf16.msra.mxu0 0
        %1278 = vmatprep.subr.bf16.mxu0 0
        %1279 = vmatpush1.bf16.msra.mxu0 0
        %1280 = vmatprep.subr.bf16.mxu0 0
        %1281 = vmatpush1.bf16.msra.mxu0 0
        %1282 = vmatprep.subr.bf16.mxu0 0
        %1283 = vmatpush1.bf16.msra.mxu0 0
        %1284 = vmatprep.subr.bf16.mxu0 0
        %1285 = vmatpush1.bf16.msra.mxu0 0
        %1286 = vmatprep.mubr.bf16.mxu0 0
        %1287 = vmatmul.mubr.bf16.gmra.mrb[0].mxu0 %v1252
        %v1288 = vpop.f32.mrb[0].mxu0
        %v1289 = vadd.f32 0.0, %v1288
        %v1290 = vpop.f32.mrb[0].mxu0
        %v1291 = vpop.f32.mrb[0].mxu0
        %v1292 = vadd.f32 0.0, %v1291
        %v1293 = vpop.f32.mrb[0].mxu0
        %1294 = vdwg.mxu0
        %1297 = vrot.lane.b32.xlu0 %v1289, 32
        %v1298 = vpop.permute.xlu0 %1297
        %1299 = vrot.lane.b32.xlu0 %v1292, 32
        %v1300 = vpop.permute.xlu0 %1299
        %vm1303 = vcmask 523520
        %1304 = vst.msk [vmem:[#allocation3] sm:$0xff] %vm1303, %v1298
        %1305 = vst.msk [vmem:[#allocation3 + $0x8] sm:$0xff] %vm1303, %v1300
        %1306 = vrot.lane.b32.xlu0 %v1043, 64
        %v1307 = vpop.permute.xlu0 %1306
        %1308 = vrot.lane.b32.xlu0 %v1044, 64
        %v1309 = vpop.permute.xlu0 %1308
        %v1311 = vsel %vm1049, %v1307, 0
        %v1314 = vsel %vm1049, %v1309, 0
        %1316 = vmatprep.subr.bf16.mxu0 0
        %1317 = vmatpush1.bf16.xpose.msra.mxu0 %v1314
        %1318 = vmatprep.subr.bf16.mxu0 0
        %1319 = vmatpush1.bf16.xpose.msra.mxu0 0
        %1320 = vmatprep.subr.bf16.mxu0 0
        %1321 = vmatpush1.bf16.xpose.msra.mxu0 0
        %1322 = vmatprep.subr.bf16.mxu0 0
        %1323 = vmatpush1.bf16.xpose.msra.mxu0 0
        %1324 = vmatprep.subr.bf16.mxu0 0
        %1325 = vmatpush1.bf16.xpose.msra.mxu0 0
        %1326 = vmatprep.subr.bf16.mxu0 0
        %1327 = vmatpush1.bf16.xpose.msra.mxu0 0
        %1328 = vmatprep.subr.bf16.mxu0 0
        %1329 = vmatpush1.bf16.xpose.msra.mxu0 0
        %1330 = vmatprep.subr.bf16.mxu0 0
        %1331 = vmatpush1.bf16.xpose.msra.mxu0 0
        %1332 = vmatprep.subr.bf16.mxu0 0
        %1333 = vmatpush1.bf16.xpose.msra.mxu0 0
        %1334 = vmatprep.subr.bf16.mxu0 0
        %1335 = vmatpush1.bf16.xpose.msra.mxu0 0
        %1336 = vmatprep.subr.bf16.mxu0 0
        %1337 = vmatpush1.bf16.xpose.msra.mxu0 0
        %1338 = vmatprep.subr.bf16.mxu0 0
        %1339 = vmatpush1.bf16.xpose.msra.mxu0 0
        %1340 = vmatprep.subr.bf16.mxu0 0
        %1341 = vmatpush1.bf16.xpose.msra.mxu0 0
        %1342 = vmatprep.subr.bf16.mxu0 0
        %1343 = vmatpush1.bf16.xpose.msra.mxu0 0
        %1344 = vmatprep.subr.bf16.mxu0 0
        %1345 = vmatpush1.bf16.xpose.msra.mxu0 0
        %1346 = vmatprep.subr.bf16.mxu0 0
        %1347 = vmatpush1.bf16.xpose.msra.mxu0 0
        %1348 = vmatprep.mubr.bf16.mxu0 0
        %1349 = vmatmul.mubr.bf16.gmra.mrb[0].mxu0 %v1311
        %v1350 = vpop.f32.mrb[0].mxu0
        %v1351 = vadd.f32 0.0, %v1350
        %v1352 = vpop.f32.mrb[0].mxu0
        %v1353 = vpop.f32.mrb[0].mxu0
        %v1354 = vadd.f32 0.0, %v1353
        %v1355 = vpop.f32.mrb[0].mxu0
        %1356 = vdwg.mxu0
        %v1357 = vmul.f32 %v1351, 0.17677669
        %v1358 = vmul.f32 %v1354, 0.17677669
        %v1359 = vsel %vm1099, %v1357, -inf
        %1360 = vmax.xlane.f32.xlu0 %v1359
        %v1361 = vpop.xlane.xlu0 %1360
        %v1362 = vsel %vm1099, %v1358, -inf
        %1363 = vmax.xlane.f32.xlu0 %v1362
        %v1364 = vpop.xlane.xlu0 %1363
        %v1365 = vsub.f32 %v1357, %v1361
        %v1366 = vsub.f32 %v1358, %v1364
        %v1367 = vmul.f32 %v1365, 1.442695
        %v1368 = vpow.pop %v1367
        %v1369 = vmul.f32 %v1366, 1.442695
        %v1370 = vpow.pop %v1369
        %v1371 = vsel %vm1099, %v1368, 0.0
        %1372 = vadd.xlane.f32.xlu0 %v1371
        %v1373 = vpop.xlane.xlu0 %1372
        %v1374 = vsel %vm1099, %v1370, 0.0
        %1375 = vadd.xlane.f32.xlu0 %v1374
        %v1376 = vpop.xlane.xlu0 %1375
        %v1377 = vrcp.pop %v1373
        %v1378 = vrcp.pop %v1376
        %v1379 = vmul.f32 %v1368, %v1377
        %v1380 = vmul.f32 %v1370, %v1378
        %v1381 = vpack.c.bf16 %v1380, %v1379
        %1382 = vrot.lane.b32.xlu0 %v1045, 64
        %v1383 = vpop.permute.xlu0 %1382
        %v1386 = vsel %vm1099, %v1381, 0
        %1388 = vmatprep.subr.bf16.mxu0 0
        %1389 = vmatpush1.bf16.msra.mxu0 %v1383
        %1390 = vmatprep.subr.bf16.mxu0 0
        %1391 = vmatpush1.bf16.msra.mxu0 0
        %1392 = vmatprep.subr.bf16.mxu0 0
        %1393 = vmatpush1.bf16.msra.mxu0 0
        %1394 = vmatprep.subr.bf16.mxu0 0
        %1395 = vmatpush1.bf16.msra.mxu0 0
        %1396 = vmatprep.subr.bf16.mxu0 0
        %1397 = vmatpush1.bf16.msra.mxu0 0
        %1398 = vmatprep.subr.bf16.mxu0 0
        %1399 = vmatpush1.bf16.msra.mxu0 0
        %1400 = vmatprep.subr.bf16.mxu0 0
        %1401 = vmatpush1.bf16.msra.mxu0 0
        %1402 = vmatprep.subr.bf16.mxu0 0
        %1403 = vmatpush1.bf16.msra.mxu0 0
        %1404 = vmatprep.subr.bf16.mxu0 0
        %1405 = vmatpush1.bf16.msra.mxu0 0
        %1406 = vmatprep.subr.bf16.mxu0 0
        %1407 = vmatpush1.bf16.msra.mxu0 0
        %1408 = vmatprep.subr.bf16.mxu0 0
        %1409 = vmatpush1.bf16.msra.mxu0 0
        %1410 = vmatprep.subr.bf16.mxu0 0
        %1411 = vmatpush1.bf16.msra.mxu0 0
        %1412 = vmatprep.subr.bf16.mxu0 0
        %1413 = vmatpush1.bf16.msra.mxu0 0
        %1414 = vmatprep.subr.bf16.mxu0 0
        %1415 = vmatpush1.bf16.msra.mxu0 0
        %1416 = vmatprep.subr.bf16.mxu0 0
        %1417 = vmatpush1.bf16.msra.mxu0 0
        %1418 = vmatprep.subr.bf16.mxu0 0
        %1419 = vmatpush1.bf16.msra.mxu0 0
        %1420 = vmatprep.mubr.bf16.mxu0 0
        %1421 = vmatmul.mubr.bf16.gmra.mrb[0].mxu0 %v1386
        %v1422 = vpop.f32.mrb[0].mxu0
        %v1423 = vadd.f32 0.0, %v1422
        %v1424 = vpop.f32.mrb[0].mxu0
        %v1425 = vpop.f32.mrb[0].mxu0
        %v1426 = vadd.f32 0.0, %v1425
        %v1427 = vpop.f32.mrb[0].mxu0
        %1428 = vdwg.mxu0
        %1431 = vrot.lane.b32.xlu0 %v1423, 64
        %v1432 = vpop.permute.xlu0 %1431
        %1433 = vrot.lane.b32.xlu0 %v1426, 64
        %v1434 = vpop.permute.xlu0 %1433
        %vm1437 = vcmask 785920
        %1438 = vst.msk [vmem:[#allocation3] sm:$0xff] %vm1437, %v1432
        %1439 = vst.msk [vmem:[#allocation3 + $0x8] sm:$0xff] %vm1437, %v1434
        %1440 = vrot.lane.b32.xlu0 %v1043, 32
        %v1441 = vpop.permute.xlu0 %1440
        %1442 = vrot.lane.b32.xlu0 %v1044, 32
        %v1443 = vpop.permute.xlu0 %1442
        %v1445 = vsel %vm1049, %v1441, 0
        %v1448 = vsel %vm1049, %v1443, 0
        %1450 = vmatprep.subr.bf16.mxu0 0
        %1451 = vmatpush1.bf16.xpose.msra.mxu0 %v1448
        %1452 = vmatprep.subr.bf16.mxu0 0
        %1453 = vmatpush1.bf16.xpose.msra.mxu0 0
        %1454 = vmatprep.subr.bf16.mxu0 0
        %1455 = vmatpush1.bf16.xpose.msra.mxu0 0
        %1456 = vmatprep.subr.bf16.mxu0 0
        %1457 = vmatpush1.bf16.xpose.msra.mxu0 0
        %1458 = vmatprep.subr.bf16.mxu0 0
        %1459 = vmatpush1.bf16.xpose.msra.mxu0 0
        %1460 = vmatprep.subr.bf16.mxu0 0
        %1461 = vmatpush1.bf16.xpose.msra.mxu0 0
        %1462 = vmatprep.subr.bf16.mxu0 0
        %1463 = vmatpush1.bf16.xpose.msra.mxu0 0
        %1464 = vmatprep.subr.bf16.mxu0 0
        %1465 = vmatpush1.bf16.xpose.msra.mxu0 0
        %1466 = vmatprep.subr.bf16.mxu0 0
        %1467 = vmatpush1.bf16.xpose.msra.mxu0 0
        %1468 = vmatprep.subr.bf16.mxu0 0
        %1469 = vmatpush1.bf16.xpose.msra.mxu0 0
        %1470 = vmatprep.subr.bf16.mxu0 0
        %1471 = vmatpush1.bf16.xpose.msra.mxu0 0
        %1472 = vmatprep.subr.bf16.mxu0 0
        %1473 = vmatpush1.bf16.xpose.msra.mxu0 0
        %1474 = vmatprep.subr.bf16.mxu0 0
        %1475 = vmatpush1.bf16.xpose.msra.mxu0 0
        %1476 = vmatprep.subr.bf16.mxu0 0
        %1477 = vmatpush1.bf16.xpose.msra.mxu0 0
        %1478 = vmatprep.subr.bf16.mxu0 0
        %1479 = vmatpush1.bf16.xpose.msra.mxu0 0
        %1480 = vmatprep.subr.bf16.mxu0 0
        %1481 = vmatpush1.bf16.xpose.msra.mxu0 0
        %1482 = vmatprep.mubr.bf16.mxu0 0
        %1483 = vmatmul.mubr.bf16.gmra.mrb[0].mxu0 %v1445
        %v1484 = vpop.f32.mrb[0].mxu0
        %v1485 = vadd.f32 0.0, %v1484
        %v1486 = vpop.f32.mrb[0].mxu0
        %v1487 = vpop.f32.mrb[0].mxu0
        %v1488 = vadd.f32 0.0, %v1487
        %v1489 = vpop.f32.mrb[0].mxu0
        %1490 = vdwg.mxu0
        %v1491 = vmul.f32 %v1485, 0.17677669
        %v1492 = vmul.f32 %v1488, 0.17677669
        %v1493 = vsel %vm1099, %v1491, -inf
        %1494 = vmax.xlane.f32.xlu0 %v1493
        %v1495 = vpop.xlane.xlu0 %1494
        %v1496 = vsel %vm1099, %v1492, -inf
        %1497 = vmax.xlane.f32.xlu0 %v1496
        %v1498 = vpop.xlane.xlu0 %1497
        %v1499 = vsub.f32 %v1491, %v1495
        %v1500 = vsub.f32 %v1492, %v1498
        %v1501 = vmul.f32 %v1499, 1.442695
        %v1502 = vpow.pop %v1501
        %v1503 = vmul.f32 %v1500, 1.442695
        %v1504 = vpow.pop %v1503
        %v1505 = vsel %vm1099, %v1502, 0.0
        %1506 = vadd.xlane.f32.xlu0 %v1505
        %v1507 = vpop.xlane.xlu0 %1506
        %v1508 = vsel %vm1099, %v1504, 0.0
        %1509 = vadd.xlane.f32.xlu0 %v1508
        %v1510 = vpop.xlane.xlu0 %1509
        %v1511 = vrcp.pop %v1507
        %v1512 = vrcp.pop %v1510
        %v1513 = vmul.f32 %v1502, %v1511
        %v1514 = vmul.f32 %v1504, %v1512
        %v1515 = vpack.c.bf16 %v1514, %v1513
        %1516 = vrot.lane.b32.xlu0 %v1045, 32
        %v1517 = vpop.permute.xlu0 %1516
        %v1520 = vsel %vm1099, %v1515, 0
        %1522 = vmatprep.subr.bf16.mxu0 0
        %1523 = vmatpush1.bf16.msra.mxu0 %v1517
        %1524 = vmatprep.subr.bf16.mxu0 0
        %1525 = vmatpush1.bf16.msra.mxu0 0
        %1526 = vmatprep.subr.bf16.mxu0 0
        %1527 = vmatpush1.bf16.msra.mxu0 0
        %1528 = vmatprep.subr.bf16.mxu0 0
        %1529 = vmatpush1.bf16.msra.mxu0 0
        %1530 = vmatprep.subr.bf16.mxu0 0
        %1531 = vmatpush1.bf16.msra.mxu0 0
        %1532 = vmatprep.subr.bf16.mxu0 0
        %1533 = vmatpush1.bf16.msra.mxu0 0
        %1534 = vmatprep.subr.bf16.mxu0 0
        %1535 = vmatpush1.bf16.msra.mxu0 0
        %1536 = vmatprep.subr.bf16.mxu0 0
        %1537 = vmatpush1.bf16.msra.mxu0 0
        %1538 = vmatprep.subr.bf16.mxu0 0
        %1539 = vmatpush1.bf16.msra.mxu0 0
        %1540 = vmatprep.subr.bf16.mxu0 0
        %1541 = vmatpush1.bf16.msra.mxu0 0
        %1542 = vmatprep.subr.bf16.mxu0 0
        %1543 = vmatpush1.bf16.msra.mxu0 0
        %1544 = vmatprep.subr.bf16.mxu0 0
        %1545 = vmatpush1.bf16.msra.mxu0 0
        %1546 = vmatprep.subr.bf16.mxu0 0
        %1547 = vmatpush1.bf16.msra.mxu0 0
        %1548 = vmatprep.subr.bf16.mxu0 0
        %1549 = vmatpush1.bf16.msra.mxu0 0
        %1550 = vmatprep.subr.bf16.mxu0 0
        %1551 = vmatpush1.bf16.msra.mxu0 0
        %1552 = vmatprep.subr.bf16.mxu0 0
        %1553 = vmatpush1.bf16.msra.mxu0 0
        %1554 = vmatprep.mubr.bf16.mxu0 0
        %1555 = vmatmul.mubr.bf16.gmra.mrb[0].mxu0 %v1520
        %v1556 = vpop.f32.mrb[0].mxu0
        %v1557 = vadd.f32 0.0, %v1556
        %v1558 = vpop.f32.mrb[0].mxu0
        %v1559 = vpop.f32.mrb[0].mxu0
        %v1560 = vadd.f32 0.0, %v1559
        %v1561 = vpop.f32.mrb[0].mxu0
        %1562 = vdwg.mxu0
        %1565 = vrot.lane.b32.xlu0 %v1557, 96
        %v1566 = vpop.permute.xlu0 %1565
        %1567 = vrot.lane.b32.xlu0 %v1560, 96
        %v1568 = vpop.permute.xlu0 %1567
        %vm1571 = vcmask 1048320
        %1572 = vst.msk [vmem:[#allocation3] sm:$0xff] %vm1571, %v1566
        %1573 = vst.msk [vmem:[#allocation3 + $0x8] sm:$0xff] %vm1571, %v1568
        %v1575 = vsel %vm1049, %v1046, 0
        %v1578 = vsel %vm1049, %v1047, 0
        %1580 = vmatprep.subr.bf16.mxu0 0
        %1581 = vmatpush1.bf16.xpose.msra.mxu0 %v1578
        %1582 = vmatprep.subr.bf16.mxu0 0
        %1583 = vmatpush1.bf16.xpose.msra.mxu0 0
        %1584 = vmatprep.subr.bf16.mxu0 0
        %1585 = vmatpush1.bf16.xpose.msra.mxu0 0
        %1586 = vmatprep.subr.bf16.mxu0 0
        %1587 = vmatpush1.bf16.xpose.msra.mxu0 0
        %1588 = vmatprep.subr.bf16.mxu0 0
        %1589 = vmatpush1.bf16.xpose.msra.mxu0 0
        %1590 = vmatprep.subr.bf16.mxu0 0
        %1591 = vmatpush1.bf16.xpose.msra.mxu0 0
        %1592 = vmatprep.subr.bf16.mxu0 0
        %1593 = vmatpush1.bf16.xpose.msra.mxu0 0
        %1594 = vmatprep.subr.bf16.mxu0 0
        %1595 = vmatpush1.bf16.xpose.msra.mxu0 0
        %1596 = vmatprep.subr.bf16.mxu0 0
        %1597 = vmatpush1.bf16.xpose.msra.mxu0 0
        %1598 = vmatprep.subr.bf16.mxu0 0
        %1599 = vmatpush1.bf16.xpose.msra.mxu0 0
        %1600 = vmatprep.subr.bf16.mxu0 0
        %1601 = vmatpush1.bf16.xpose.msra.mxu0 0
        %1602 = vmatprep.subr.bf16.mxu0 0
        %1603 = vmatpush1.bf16.xpose.msra.mxu0 0
        %1604 = vmatprep.subr.bf16.mxu0 0
        %1605 = vmatpush1.bf16.xpose.msra.mxu0 0
        %1606 = vmatprep.subr.bf16.mxu0 0
        %1607 = vmatpush1.bf16.xpose.msra.mxu0 0
        %1608 = vmatprep.subr.bf16.mxu0 0
        %1609 = vmatpush1.bf16.xpose.msra.mxu0 0
        %1610 = vmatprep.subr.bf16.mxu0 0
        %1611 = vmatpush1.bf16.xpose.msra.mxu0 0
        %1612 = vmatprep.mubr.bf16.mxu0 0
        %1613 = vmatmul.mubr.bf16.gmra.mrb[0].mxu0 %v1575
        %v1614 = vpop.f32.mrb[0].mxu0
        %v1615 = vadd.f32 0.0, %v1614
        %v1616 = vpop.f32.mrb[0].mxu0
        %v1617 = vpop.f32.mrb[0].mxu0
        %v1618 = vadd.f32 0.0, %v1617
        %v1619 = vpop.f32.mrb[0].mxu0
        %1620 = vdwg.mxu0
        %v1621 = vmul.f32 %v1615, 0.17677669
        %v1622 = vmul.f32 %v1618, 0.17677669
        %v1623 = vsel %vm1099, %v1621, -inf
        %1624 = vmax.xlane.f32.xlu0 %v1623
        %v1625 = vpop.xlane.xlu0 %1624
        %v1626 = vsel %vm1099, %v1622, -inf
        %1627 = vmax.xlane.f32.xlu0 %v1626
        %v1628 = vpop.xlane.xlu0 %1627
        %v1629 = vsub.f32 %v1621, %v1625
        %v1630 = vsub.f32 %v1622, %v1628
        %v1631 = vmul.f32 %v1629, 1.442695
        %v1632 = vpow.pop %v1631
        %v1633 = vmul.f32 %v1630, 1.442695
        %v1634 = vpow.pop %v1633
        %v1635 = vsel %vm1099, %v1632, 0.0
        %1636 = vadd.xlane.f32.xlu0 %v1635
        %v1637 = vpop.xlane.xlu0 %1636
        %v1638 = vsel %vm1099, %v1634, 0.0
        %1639 = vadd.xlane.f32.xlu0 %v1638
        %v1640 = vpop.xlane.xlu0 %1639
        %v1641 = vrcp.pop %v1637
        %v1642 = vrcp.pop %v1640
        %v1643 = vmul.f32 %v1632, %v1641
        %v1644 = vmul.f32 %v1634, %v1642
        %v1645 = vpack.c.bf16 %v1644, %v1643
        %v1647 = vsel %vm1099, %v1645, 0
        %1649 = vmatprep.subr.bf16.mxu0 0
        %1650 = vmatpush1.bf16.msra.mxu0 %v1048
        %1651 = vmatprep.subr.bf16.mxu0 0
        %1652 = vmatpush1.bf16.msra.mxu0 0
        %1653 = vmatprep.subr.bf16.mxu0 0
        %1654 = vmatpush1.bf16.msra.mxu0 0
        %1655 = vmatprep.subr.bf16.mxu0 0
        %1656 = vmatpush1.bf16.msra.mxu0 0
        %1657 = vmatprep.subr.bf16.mxu0 0
        %1658 = vmatpush1.bf16.msra.mxu0 0
        %1659 = vmatprep.subr.bf16.mxu0 0
        %1660 = vmatpush1.bf16.msra.mxu0 0
        %1661 = vmatprep.subr.bf16.mxu0 0
        %1662 = vmatpush1.bf16.msra.mxu0 0
        %1663 = vmatprep.subr.bf16.mxu0 0
        %1664 = vmatpush1.bf16.msra.mxu0 0
        %1665 = vmatprep.subr.bf16.mxu0 0
        %1666 = vmatpush1.bf16.msra.mxu0 0
        %1667 = vmatprep.subr.bf16.mxu0 0
        %1668 = vmatpush1.bf16.msra.mxu0 0
        %1669 = vmatprep.subr.bf16.mxu0 0
        %1670 = vmatpush1.bf16.msra.mxu0 0
        %1671 = vmatprep.subr.bf16.mxu0 0
        %1672 = vmatpush1.bf16.msra.mxu0 0
        %1673 = vmatprep.subr.bf16.mxu0 0
        %1674 = vmatpush1.bf16.msra.mxu0 0
        %1675 = vmatprep.subr.bf16.mxu0 0
        %1676 = vmatpush1.bf16.msra.mxu0 0
        %1677 = vmatprep.subr.bf16.mxu0 0
        %1678 = vmatpush1.bf16.msra.mxu0 0
        %1679 = vmatprep.subr.bf16.mxu0 0
        %1680 = vmatpush1.bf16.msra.mxu0 0
        %1681 = vmatprep.mubr.bf16.mxu0 0
        %1682 = vmatmul.mubr.bf16.gmra.mrb[0].mxu0 %v1647
        %v1683 = vpop.f32.mrb[0].mxu0
        %v1684 = vadd.f32 0.0, %v1683
        %v1685 = vpop.f32.mrb[0].mxu0
        %v1686 = vpop.f32.mrb[0].mxu0
        %v1687 = vadd.f32 0.0, %v1686
        %v1688 = vpop.f32.mrb[0].mxu0
        %1689 = vdwg.mxu0
        %1690 = vst.msk [vmem:[#allocation3 + $0x10] sm:$0xff] %vm1049, %v1684
        %1691 = vst.msk [vmem:[#allocation3 + $0x18] sm:$0xff] %vm1049, %v1687
        %1693 = vrot.lane.b32.xlu0 %v1046, 96
        %v1694 = vpop.permute.xlu0 %1693
        %1696 = vrot.lane.b32.xlu0 %v1047, 96
        %v1697 = vpop.permute.xlu0 %1696
        %v1699 = vsel %vm1049, %v1694, 0
        %v1702 = vsel %vm1049, %v1697, 0
        %1704 = vmatprep.subr.bf16.mxu0 0
        %1705 = vmatpush1.bf16.xpose.msra.mxu0 %v1702
        %1706 = vmatprep.subr.bf16.mxu0 0
        %1707 = vmatpush1.bf16.xpose.msra.mxu0 0
        %1708 = vmatprep.subr.bf16.mxu0 0
        %1709 = vmatpush1.bf16.xpose.msra.mxu0 0
        %1710 = vmatprep.subr.bf16.mxu0 0
        %1711 = vmatpush1.bf16.xpose.msra.mxu0 0
        %1712 = vmatprep.subr.bf16.mxu0 0
        %1713 = vmatpush1.bf16.xpose.msra.mxu0 0
        %1714 = vmatprep.subr.bf16.mxu0 0
        %1715 = vmatpush1.bf16.xpose.msra.mxu0 0
        %1716 = vmatprep.subr.bf16.mxu0 0
        %1717 = vmatpush1.bf16.xpose.msra.mxu0 0
        %1718 = vmatprep.subr.bf16.mxu0 0
        %1719 = vmatpush1.bf16.xpose.msra.mxu0 0
        %1720 = vmatprep.subr.bf16.mxu0 0
        %1721 = vmatpush1.bf16.xpose.msra.mxu0 0
        %1722 = vmatprep.subr.bf16.mxu0 0
        %1723 = vmatpush1.bf16.xpose.msra.mxu0 0
        %1724 = vmatprep.subr.bf16.mxu0 0
        %1725 = vmatpush1.bf16.xpose.msra.mxu0 0
        %1726 = vmatprep.subr.bf16.mxu0 0
        %1727 = vmatpush1.bf16.xpose.msra.mxu0 0
        %1728 = vmatprep.subr.bf16.mxu0 0
        %1729 = vmatpush1.bf16.xpose.msra.mxu0 0
        %1730 = vmatprep.subr.bf16.mxu0 0
        %1731 = vmatpush1.bf16.xpose.msra.mxu0 0
        %1732 = vmatprep.subr.bf16.mxu0 0
        %1733 = vmatpush1.bf16.xpose.msra.mxu0 0
        %1734 = vmatprep.subr.bf16.mxu0 0
        %1735 = vmatpush1.bf16.xpose.msra.mxu0 0
        %1736 = vmatprep.mubr.bf16.mxu0 0
        %1737 = vmatmul.mubr.bf16.gmra.mrb[0].mxu0 %v1699
        %v1738 = vpop.f32.mrb[0].mxu0
        %v1739 = vadd.f32 0.0, %v1738
        %v1740 = vpop.f32.mrb[0].mxu0
        %v1741 = vpop.f32.mrb[0].mxu0
        %v1742 = vadd.f32 0.0, %v1741
        %v1743 = vpop.f32.mrb[0].mxu0
        %1744 = vdwg.mxu0
        %v1745 = vmul.f32 %v1739, 0.17677669
        %v1746 = vmul.f32 %v1742, 0.17677669
        %v1747 = vsel %vm1099, %v1745, -inf
        %1748 = vmax.xlane.f32.xlu0 %v1747
        %v1749 = vpop.xlane.xlu0 %1748
        %v1750 = vsel %vm1099, %v1746, -inf
        %1751 = vmax.xlane.f32.xlu0 %v1750
        %v1752 = vpop.xlane.xlu0 %1751
        %v1753 = vsub.f32 %v1745, %v1749
        %v1754 = vsub.f32 %v1746, %v1752
        %v1755 = vmul.f32 %v1753, 1.442695
        %v1756 = vpow.pop %v1755
        %v1757 = vmul.f32 %v1754, 1.442695
        %v1758 = vpow.pop %v1757
        %v1759 = vsel %vm1099, %v1756, 0.0
        %1760 = vadd.xlane.f32.xlu0 %v1759
        %v1761 = vpop.xlane.xlu0 %1760
        %v1762 = vsel %vm1099, %v1758, 0.0
        %1763 = vadd.xlane.f32.xlu0 %v1762
        %v1764 = vpop.xlane.xlu0 %1763
        %v1765 = vrcp.pop %v1761
        %v1766 = vrcp.pop %v1764
        %v1767 = vmul.f32 %v1756, %v1765
        %v1768 = vmul.f32 %v1758, %v1766
        %v1769 = vpack.c.bf16 %v1768, %v1767
        %1771 = vrot.lane.b32.xlu0 %v1048, 96
        %v1772 = vpop.permute.xlu0 %1771
        %v1775 = vsel %vm1099, %v1769, 0
        %1777 = vmatprep.subr.bf16.mxu0 0
        %1778 = vmatpush1.bf16.msra.mxu0 %v1772
        %1779 = vmatprep.subr.bf16.mxu0 0
        %1780 = vmatpush1.bf16.msra.mxu0 0
        %1781 = vmatprep.subr.bf16.mxu0 0
        %1782 = vmatpush1.bf16.msra.mxu0 0
        %1783 = vmatprep.subr.bf16.mxu0 0
        %1784 = vmatpush1.bf16.msra.mxu0 0
        %1785 = vmatprep.subr.bf16.mxu0 0
        %1786 = vmatpush1.bf16.msra.mxu0 0
        %1787 = vmatprep.subr.bf16.mxu0 0
        %1788 = vmatpush1.bf16.msra.mxu0 0
        %1789 = vmatprep.subr.bf16.mxu0 0
        %1790 = vmatpush1.bf16.msra.mxu0 0
        %1791 = vmatprep.subr.bf16.mxu0 0
        %1792 = vmatpush1.bf16.msra.mxu0 0
        %1793 = vmatprep.subr.bf16.mxu0 0
        %1794 = vmatpush1.bf16.msra.mxu0 0
        %1795 = vmatprep.subr.bf16.mxu0 0
        %1796 = vmatpush1.bf16.msra.mxu0 0
        %1797 = vmatprep.subr.bf16.mxu0 0
        %1798 = vmatpush1.bf16.msra.mxu0 0
        %1799 = vmatprep.subr.bf16.mxu0 0
        %1800 = vmatpush1.bf16.msra.mxu0 0
        %1801 = vmatprep.subr.bf16.mxu0 0
        %1802 = vmatpush1.bf16.msra.mxu0 0
        %1803 = vmatprep.subr.bf16.mxu0 0
        %1804 = vmatpush1.bf16.msra.mxu0 0
        %1805 = vmatprep.subr.bf16.mxu0 0
        %1806 = vmatpush1.bf16.msra.mxu0 0
        %1807 = vmatprep.subr.bf16.mxu0 0
        %1808 = vmatpush1.bf16.msra.mxu0 0
        %1809 = vmatprep.mubr.bf16.mxu0 0
        %1810 = vmatmul.mubr.bf16.gmra.mrb[0].mxu0 %v1775
        %v1811 = vpop.f32.mrb[0].mxu0
        %v1812 = vadd.f32 0.0, %v1811
        %v1813 = vpop.f32.mrb[0].mxu0
        %v1814 = vpop.f32.mrb[0].mxu0
        %v1815 = vadd.f32 0.0, %v1814
        %v1816 = vpop.f32.mrb[0].mxu0
        %1817 = vdwg.mxu0
        %1820 = vrot.lane.b32.xlu0 %v1812, 32
        %v1821 = vpop.permute.xlu0 %1820
        %1822 = vrot.lane.b32.xlu0 %v1815, 32
        %v1823 = vpop.permute.xlu0 %1822
        %1826 = vst.msk [vmem:[#allocation3 + $0x10] sm:$0xff] %vm1303, %v1821
        %1827 = vst.msk [vmem:[#allocation3 + $0x18] sm:$0xff] %vm1303, %v1823
        %1828 = vrot.lane.b32.xlu0 %v1046, 64
        %v1829 = vpop.permute.xlu0 %1828
        %1830 = vrot.lane.b32.xlu0 %v1047, 64
        %v1831 = vpop.permute.xlu0 %1830
        %v1833 = vsel %vm1049, %v1829, 0
        %v1836 = vsel %vm1049, %v1831, 0
        %1838 = vmatprep.subr.bf16.mxu0 0
        %1839 = vmatpush1.bf16.xpose.msra.mxu0 %v1836
        %1840 = vmatprep.subr.bf16.mxu0 0
        %1841 = vmatpush1.bf16.xpose.msra.mxu0 0
        %1842 = vmatprep.subr.bf16.mxu0 0
        %1843 = vmatpush1.bf16.xpose.msra.mxu0 0
        %1844 = vmatprep.subr.bf16.mxu0 0
        %1845 = vmatpush1.bf16.xpose.msra.mxu0 0
        %1846 = vmatprep.subr.bf16.mxu0 0
        %1847 = vmatpush1.bf16.xpose.msra.mxu0 0
        %1848 = vmatprep.subr.bf16.mxu0 0
        %1849 = vmatpush1.bf16.xpose.msra.mxu0 0
        %1850 = vmatprep.subr.bf16.mxu0 0
        %1851 = vmatpush1.bf16.xpose.msra.mxu0 0
        %1852 = vmatprep.subr.bf16.mxu0 0
        %1853 = vmatpush1.bf16.xpose.msra.mxu0 0
        %1854 = vmatprep.subr.bf16.mxu0 0
        %1855 = vmatpush1.bf16.xpose.msra.mxu0 0
        %1856 = vmatprep.subr.bf16.mxu0 0
        %1857 = vmatpush1.bf16.xpose.msra.mxu0 0
        %1858 = vmatprep.subr.bf16.mxu0 0
        %1859 = vmatpush1.bf16.xpose.msra.mxu0 0
        %1860 = vmatprep.subr.bf16.mxu0 0
        %1861 = vmatpush1.bf16.xpose.msra.mxu0 0
        %1862 = vmatprep.subr.bf16.mxu0 0
        %1863 = vmatpush1.bf16.xpose.msra.mxu0 0
        %1864 = vmatprep.subr.bf16.mxu0 0
        %1865 = vmatpush1.bf16.xpose.msra.mxu0 0
        %1866 = vmatprep.subr.bf16.mxu0 0
        %1867 = vmatpush1.bf16.xpose.msra.mxu0 0
        %1868 = vmatprep.subr.bf16.mxu0 0
        %1869 = vmatpush1.bf16.xpose.msra.mxu0 0
        %1870 = vmatprep.mubr.bf16.mxu0 0
        %1871 = vmatmul.mubr.bf16.gmra.mrb[0].mxu0 %v1833
        %v1872 = vpop.f32.mrb[0].mxu0
        %v1873 = vadd.f32 0.0, %v1872
        %v1874 = vpop.f32.mrb[0].mxu0
        %v1875 = vpop.f32.mrb[0].mxu0
        %v1876 = vadd.f32 0.0, %v1875
        %v1877 = vpop.f32.mrb[0].mxu0
        %1878 = vdwg.mxu0
        %v1879 = vmul.f32 %v1873, 0.17677669
        %v1880 = vmul.f32 %v1876, 0.17677669
        %v1881 = vsel %vm1099, %v1879, -inf
        %1882 = vmax.xlane.f32.xlu0 %v1881
        %v1883 = vpop.xlane.xlu0 %1882
        %v1884 = vsel %vm1099, %v1880, -inf
        %1885 = vmax.xlane.f32.xlu0 %v1884
        %v1886 = vpop.xlane.xlu0 %1885
        %v1887 = vsub.f32 %v1879, %v1883
        %v1888 = vsub.f32 %v1880, %v1886
        %v1889 = vmul.f32 %v1887, 1.442695
        %v1890 = vpow.pop %v1889
        %v1891 = vmul.f32 %v1888, 1.442695
        %v1892 = vpow.pop %v1891
        %v1893 = vsel %vm1099, %v1890, 0.0
        %1894 = vadd.xlane.f32.xlu0 %v1893
        %v1895 = vpop.xlane.xlu0 %1894
        %v1896 = vsel %vm1099, %v1892, 0.0
        %1897 = vadd.xlane.f32.xlu0 %v1896
        %v1898 = vpop.xlane.xlu0 %1897
        %v1899 = vrcp.pop %v1895
        %v1900 = vrcp.pop %v1898
        %v1901 = vmul.f32 %v1890, %v1899
        %v1902 = vmul.f32 %v1892, %v1900
        %v1903 = vpack.c.bf16 %v1902, %v1901
        %1904 = vrot.lane.b32.xlu0 %v1048, 64
        %v1905 = vpop.permute.xlu0 %1904
        %v1908 = vsel %vm1099, %v1903, 0
        %1910 = vmatprep.subr.bf16.mxu0 0
        %1911 = vmatpush1.bf16.msra.mxu0 %v1905
        %1912 = vmatprep.subr.bf16.mxu0 0
        %1913 = vmatpush1.bf16.msra.mxu0 0
        %1914 = vmatprep.subr.bf16.mxu0 0
        %1915 = vmatpush1.bf16.msra.mxu0 0
        %1916 = vmatprep.subr.bf16.mxu0 0
        %1917 = vmatpush1.bf16.msra.mxu0 0
        %1918 = vmatprep.subr.bf16.mxu0 0
        %1919 = vmatpush1.bf16.msra.mxu0 0
        %1920 = vmatprep.subr.bf16.mxu0 0
        %1921 = vmatpush1.bf16.msra.mxu0 0
        %1922 = vmatprep.subr.bf16.mxu0 0
        %1923 = vmatpush1.bf16.msra.mxu0 0
        %1924 = vmatprep.subr.bf16.mxu0 0
        %1925 = vmatpush1.bf16.msra.mxu0 0
        %1926 = vmatprep.subr.bf16.mxu0 0
        %1927 = vmatpush1.bf16.msra.mxu0 0
        %1928 = vmatprep.subr.bf16.mxu0 0
        %1929 = vmatpush1.bf16.msra.mxu0 0
        %1930 = vmatprep.subr.bf16.mxu0 0
        %1931 = vmatpush1.bf16.msra.mxu0 0
        %1932 = vmatprep.subr.bf16.mxu0 0
        %1933 = vmatpush1.bf16.msra.mxu0 0
        %1934 = vmatprep.subr.bf16.mxu0 0
        %1935 = vmatpush1.bf16.msra.mxu0 0
        %1936 = vmatprep.subr.bf16.mxu0 0
        %1937 = vmatpush1.bf16.msra.mxu0 0
        %1938 = vmatprep.subr.bf16.mxu0 0
        %1939 = vmatpush1.bf16.msra.mxu0 0
        %1940 = vmatprep.subr.bf16.mxu0 0
        %1941 = vmatpush1.bf16.msra.mxu0 0
        %1942 = vmatprep.mubr.bf16.mxu0 0
        %1943 = vmatmul.mubr.bf16.gmra.mrb[0].mxu0 %v1908
        %v1944 = vpop.f32.mrb[0].mxu0
        %v1945 = vadd.f32 0.0, %v1944
        %v1946 = vpop.f32.mrb[0].mxu0
        %v1947 = vpop.f32.mrb[0].mxu0
        %v1948 = vadd.f32 0.0, %v1947
        %v1949 = vpop.f32.mrb[0].mxu0
        %1950 = vdwg.mxu0
        %1953 = vrot.lane.b32.xlu0 %v1945, 64
        %v1954 = vpop.permute.xlu0 %1953
        %1955 = vrot.lane.b32.xlu0 %v1948, 64
        %v1956 = vpop.permute.xlu0 %1955
        %1959 = vst.msk [vmem:[#allocation3 + $0x10] sm:$0xff] %vm1437, %v1954
        %1960 = vst.msk [vmem:[#allocation3 + $0x18] sm:$0xff] %vm1437, %v1956
        %1961 = vrot.lane.b32.xlu0 %v1046, 32
        %v1962 = vpop.permute.xlu0 %1961
        %1963 = vrot.lane.b32.xlu0 %v1047, 32
        %v1964 = vpop.permute.xlu0 %1963
        %v1966 = vsel %vm1049, %v1962, 0
        %v1969 = vsel %vm1049, %v1964, 0
        %1971 = vmatprep.subr.bf16.mxu0 0
        %1972 = vmatpush1.bf16.xpose.msra.mxu0 %v1969
        %1973 = vmatprep.subr.bf16.mxu0 0
        %1974 = vmatpush1.bf16.xpose.msra.mxu0 0
        %1975 = vmatprep.subr.bf16.mxu0 0
        %1976 = vmatpush1.bf16.xpose.msra.mxu0 0
        %1977 = vmatprep.subr.bf16.mxu0 0
        %1978 = vmatpush1.bf16.xpose.msra.mxu0 0
        %1979 = vmatprep.subr.bf16.mxu0 0
        %1980 = vmatpush1.bf16.xpose.msra.mxu0 0
        %1981 = vmatprep.subr.bf16.mxu0 0
        %1982 = vmatpush1.bf16.xpose.msra.mxu0 0
        %1983 = vmatprep.subr.bf16.mxu0 0
        %1984 = vmatpush1.bf16.xpose.msra.mxu0 0
        %1985 = vmatprep.subr.bf16.mxu0 0
        %1986 = vmatpush1.bf16.xpose.msra.mxu0 0
        %1987 = vmatprep.subr.bf16.mxu0 0
        %1988 = vmatpush1.bf16.xpose.msra.mxu0 0
        %1989 = vmatprep.subr.bf16.mxu0 0
        %1990 = vmatpush1.bf16.xpose.msra.mxu0 0
        %1991 = vmatprep.subr.bf16.mxu0 0
        %1992 = vmatpush1.bf16.xpose.msra.mxu0 0
        %1993 = vmatprep.subr.bf16.mxu0 0
        %1994 = vmatpush1.bf16.xpose.msra.mxu0 0
        %1995 = vmatprep.subr.bf16.mxu0 0
        %1996 = vmatpush1.bf16.xpose.msra.mxu0 0
        %1997 = vmatprep.subr.bf16.mxu0 0
        %1998 = vmatpush1.bf16.xpose.msra.mxu0 0
        %1999 = vmatprep.subr.bf16.mxu0 0
        %2000 = vmatpush1.bf16.xpose.msra.mxu0 0
        %2001 = vmatprep.subr.bf16.mxu0 0
        %2002 = vmatpush1.bf16.xpose.msra.mxu0 0
        %2003 = vmatprep.mubr.bf16.mxu0 0
        %2004 = vmatmul.mubr.bf16.gmra.mrb[0].mxu0 %v1966
        %v2005 = vpop.f32.mrb[0].mxu0
        %v2006 = vadd.f32 0.0, %v2005
        %v2007 = vpop.f32.mrb[0].mxu0
        %v2008 = vpop.f32.mrb[0].mxu0
        %v2009 = vadd.f32 0.0, %v2008
        %v2010 = vpop.f32.mrb[0].mxu0
        %2011 = vdwg.mxu0
        %v2012 = vmul.f32 %v2006, 0.17677669
        %v2013 = vmul.f32 %v2009, 0.17677669
        %v2014 = vsel %vm1099, %v2012, -inf
        %2015 = vmax.xlane.f32.xlu0 %v2014
        %v2016 = vpop.xlane.xlu0 %2015
        %v2017 = vsel %vm1099, %v2013, -inf
        %2018 = vmax.xlane.f32.xlu0 %v2017
        %v2019 = vpop.xlane.xlu0 %2018
        %v2020 = vsub.f32 %v2012, %v2016
        %v2021 = vsub.f32 %v2013, %v2019
        %v2022 = vmul.f32 %v2020, 1.442695
        %v2023 = vpow.pop %v2022
        %v2024 = vmul.f32 %v2021, 1.442695
        %v2025 = vpow.pop %v2024
        %v2026 = vsel %vm1099, %v2023, 0.0
        %2027 = vadd.xlane.f32.xlu0 %v2026
        %v2028 = vpop.xlane.xlu0 %2027
        %v2029 = vsel %vm1099, %v2025, 0.0
        %2030 = vadd.xlane.f32.xlu0 %v2029
        %v2031 = vpop.xlane.xlu0 %2030
        %v2032 = vrcp.pop %v2028
        %v2033 = vrcp.pop %v2031
        %v2034 = vmul.f32 %v2023, %v2032
        %v2035 = vmul.f32 %v2025, %v2033
        %v2036 = vpack.c.bf16 %v2035, %v2034
        %2037 = vrot.lane.b32.xlu0 %v1048, 32
        %v2038 = vpop.permute.xlu0 %2037
        %v2041 = vsel %vm1099, %v2036, 0
        %2043 = vmatprep.subr.bf16.mxu0 0
        %2044 = vmatpush1.bf16.msra.mxu0 %v2038
        %2045 = vmatprep.subr.bf16.mxu0 0
        %2046 = vmatpush1.bf16.msra.mxu0 0
        %2047 = vmatprep.subr.bf16.mxu0 0
        %2048 = vmatpush1.bf16.msra.mxu0 0
        %2049 = vmatprep.subr.bf16.mxu0 0
        %2050 = vmatpush1.bf16.msra.mxu0 0
        %2051 = vmatprep.subr.bf16.mxu0 0
        %2052 = vmatpush1.bf16.msra.mxu0 0
        %2053 = vmatprep.subr.bf16.mxu0 0
        %2054 = vmatpush1.bf16.msra.mxu0 0
        %2055 = vmatprep.subr.bf16.mxu0 0
        %2056 = vmatpush1.bf16.msra.mxu0 0
        %2057 = vmatprep.subr.bf16.mxu0 0
        %2058 = vmatpush1.bf16.msra.mxu0 0
        %2059 = vmatprep.subr.bf16.mxu0 0
        %2060 = vmatpush1.bf16.msra.mxu0 0
        %2061 = vmatprep.subr.bf16.mxu0 0
        %2062 = vmatpush1.bf16.msra.mxu0 0
        %2063 = vmatprep.subr.bf16.mxu0 0
        %2064 = vmatpush1.bf16.msra.mxu0 0
        %2065 = vmatprep.subr.bf16.mxu0 0
        %2066 = vmatpush1.bf16.msra.mxu0 0
        %2067 = vmatprep.subr.bf16.mxu0 0
        %2068 = vmatpush1.bf16.msra.mxu0 0
        %2069 = vmatprep.subr.bf16.mxu0 0
        %2070 = vmatpush1.bf16.msra.mxu0 0
        %2071 = vmatprep.subr.bf16.mxu0 0
        %2072 = vmatpush1.bf16.msra.mxu0 0
        %2073 = vmatprep.subr.bf16.mxu0 0
        %2074 = vmatpush1.bf16.msra.mxu0 0
        %2075 = vmatprep.mubr.bf16.mxu0 0
        %2076 = vmatmul.mubr.bf16.gmra.mrb[0].mxu0 %v2041
        %v2077 = vpop.f32.mrb[0].mxu0
        %v2078 = vadd.f32 0.0, %v2077
        %v2079 = vpop.f32.mrb[0].mxu0
        %v2080 = vpop.f32.mrb[0].mxu0
        %v2081 = vadd.f32 0.0, %v2080
        %v2082 = vpop.f32.mrb[0].mxu0
        %2083 = vdwg.mxu0
        %2086 = vrot.lane.b32.xlu0 %v2078, 96
        %v2087 = vpop.permute.xlu0 %2086
        %2088 = vrot.lane.b32.xlu0 %v2081, 96
        %v2089 = vpop.permute.xlu0 %2088
        %2092 = vst.msk [vmem:[#allocation3 + $0x10] sm:$0xff] %vm1571, %v2087
        %2093 = vst.msk [vmem:[#allocation3 + $0x18] sm:$0xff] %vm1571, %v2089
        %v2094 = vld [vmem:[#allocation3] sm:$0xff]
        %v2095 = vld [vmem:[#allocation3 + $0x8] sm:$0xff]
        %v2096 = vld [vmem:[#allocation3 + $0x10] sm:$0xff]
        %v2097 = vld [vmem:[#allocation3 + $0x18] sm:$0xff]
        %v2098 = vpack.c.bf16 %v2095, %v2094
        %v2099 = vpack.c.bf16 %v2097, %v2096
        %v2100 = vld [vmem:[%s610] sm:$0xf]
        %v2101 = vld [vmem:[%s610 + $0x4] sm:$0xf]
        %v2102 = vld [vmem:[%s610 + $0x8] sm:$0xf]
        %v2103 = vld [vmem:[%s610 + $0xc] sm:$0xf]
        %v2104 = vld [vmem:[%s610 + $0x10] sm:$0xf]
        %v2105 = vld [vmem:[%s610 + $0x14] sm:$0xf]
        %v2106 = vld [vmem:[%s610 + $0x18] sm:$0xf]
        %v2107 = vld [vmem:[%s610 + $0x1c] sm:$0xf]
        %v2108 = vld [vmem:[%s610 + $0x20] sm:$0xf]
        %v2109 = vld [vmem:[%s610 + $0x24] sm:$0xf]
        %v2110 = vld [vmem:[%s610 + $0x28] sm:$0xf]
        %v2111 = vld [vmem:[%s610 + $0x2c] sm:$0xf]
        %v2112 = vld [vmem:[%s610 + $0x30] sm:$0xf]
        %v2113 = vld [vmem:[%s610 + $0x34] sm:$0xf]
        %v2114 = vld [vmem:[%s610 + $0x38] sm:$0xf]
        %v2115 = vld [vmem:[%s610 + $0x3c] sm:$0xf]
        %v2116 = vld [vmem:[%s724] sm:$0x1]
        %v2118 = vlaneseq
        %v2119 = vshrl.u32 %v2118, 7
        %v2120 = vsub.s32 0, %v2119
        %v2121 = vrot.slane %v2116, %v2120
        %v2139 = vunpack.c.l.b16 %v2100
        %v2140 = vunpack.c.l.b16 %v2101
        %v2141 = vunpack.c.l.b16 %v2102
        %v2142 = vunpack.c.l.b16 %v2103
        %v2143 = vunpack.c.l.b16 %v2104
        %v2144 = vunpack.c.l.b16 %v2105
        %v2145 = vunpack.c.l.b16 %v2106
        %v2146 = vunpack.c.l.b16 %v2107
        %v2147 = vunpack.c.l.b16 %v2108
        %v2148 = vunpack.c.l.b16 %v2109
        %v2149 = vunpack.c.l.b16 %v2110
        %v2150 = vunpack.c.l.b16 %v2111
        %v2151 = vunpack.c.l.b16 %v2112
        %v2152 = vunpack.c.l.b16 %v2113
        %v2153 = vunpack.c.l.b16 %v2114
        %v2154 = vunpack.c.l.b16 %v2115
        %v2155 = vpack.c.b16 %v2140, %v2139
        %v2156 = vpack.c.b16 %v2142, %v2141
        %v2157 = vpack.c.b16 %v2144, %v2143
        %v2158 = vpack.c.b16 %v2146, %v2145
        %v2159 = vpack.c.b16 %v2148, %v2147
        %v2160 = vpack.c.b16 %v2150, %v2149
        %v2161 = vpack.c.b16 %v2152, %v2151
        %v2162 = vpack.c.b16 %v2154, %v2153
        %2171 = vmatprep.subr.bf16.mxu0 0
        %2172 = vmatpush1.bf16.msra.mxu0 %v2155
        %2173 = vmatprep.subr.bf16.mxu0 0
        %2174 = vmatpush1.bf16.msra.mxu0 %v2156
        %2175 = vmatprep.subr.bf16.mxu0 0
        %2176 = vmatpush1.bf16.msra.mxu0 %v2157
        %2177 = vmatprep.subr.bf16.mxu0 0
        %2178 = vmatpush1.bf16.msra.mxu0 %v2158
        %2179 = vmatprep.subr.bf16.mxu0 0
        %2180 = vmatpush1.bf16.msra.mxu0 %v2159
        %2181 = vmatprep.subr.bf16.mxu0 0
        %2182 = vmatpush1.bf16.msra.mxu0 %v2160
        %2183 = vmatprep.subr.bf16.mxu0 0
        %2184 = vmatpush1.bf16.msra.mxu0 %v2161
        %2185 = vmatprep.subr.bf16.mxu0 0
        %2186 = vmatpush1.bf16.msra.mxu0 %v2162
        %2187 = vmatprep.subr.bf16.mxu0 0
        %2188 = vmatpush1.bf16.msra.mxu0 0
        %2189 = vmatprep.subr.bf16.mxu0 0
        %2190 = vmatpush1.bf16.msra.mxu0 0
        %2191 = vmatprep.subr.bf16.mxu0 0
        %2192 = vmatpush1.bf16.msra.mxu0 0
        %2193 = vmatprep.subr.bf16.mxu0 0
        %2194 = vmatpush1.bf16.msra.mxu0 0
        %2195 = vmatprep.subr.bf16.mxu0 0
        %2196 = vmatpush1.bf16.msra.mxu0 0
        %2197 = vmatprep.subr.bf16.mxu0 0
        %2198 = vmatpush1.bf16.msra.mxu0 0
        %2199 = vmatprep.subr.bf16.mxu0 0
        %2200 = vmatpush1.bf16.msra.mxu0 0
        %2201 = vmatprep.subr.bf16.mxu0 0
        %2202 = vmatpush1.bf16.msra.mxu0 0
        %2203 = vmatprep.mubr.bf16.mxu0 0
        %2204 = vmatmul.mubr.bf16.gmra.mrb[0].mxu0 %v2098
        %v2205 = vpop.f32.mrb[0].mxu0
        %v2206 = vadd.f32 %v2121, %v2205
        %v2207 = vpop.f32.mrb[0].mxu0
        %v2208 = vpop.f32.mrb[0].mxu0
        %v2209 = vadd.f32 %v2121, %v2208
        %v2210 = vpop.f32.mrb[0].mxu0
        %2211 = vmatprep.mubr.bf16.mxu0 0
        %2212 = vmatmul.mubr.bf16.gmra.mrb[0].mxu0 %v2099
        %v2213 = vpop.f32.mrb[0].mxu0
        %v2214 = vadd.f32 %v2121, %v2213
        %v2215 = vpop.f32.mrb[0].mxu0
        %v2216 = vpop.f32.mrb[0].mxu0
        %v2217 = vadd.f32 %v2121, %v2216
        %v2218 = vpop.f32.mrb[0].mxu0
        %2219 = vdwg.mxu0
        %v2220 = vadd.f32 %v758, %v2206
        %v2221 = vadd.f32 %v759, %v2209
        %v2222 = vadd.f32 %v760, %v2214
        %v2223 = vadd.f32 %v761, %v2217
        %2224 = vadd.xlane.f32.xlu0 %v2220
        %v2225 = vpop.xlane.xlu0 %2224
        %2226 = vadd.xlane.f32.xlu0 %v2221
        %v2227 = vpop.xlane.xlu0 %2226
        %2228 = vadd.xlane.f32.xlu0 %v2222
        %v2229 = vpop.xlane.xlu0 %2228
        %2230 = vadd.xlane.f32.xlu0 %v2223
        %v2231 = vpop.xlane.xlu0 %2230
        %v2232 = vrcp.pop 128.0
        %v2233 = vmul.f32 %v2225, %v2232
        %v2234 = vmul.f32 %v2227, %v2232
        %v2235 = vmul.f32 %v2229, %v2232
        %v2236 = vmul.f32 %v2231, %v2232
        %v2237 = vsub.f32 %v2220, %v2233
        %v2238 = vsub.f32 %v2221, %v2234
        %v2239 = vsub.f32 %v2222, %v2235
        %v2240 = vsub.f32 %v2223, %v2236
        %v2241 = vmul.f32 %v2237, %v2237
        %v2242 = vmul.f32 %v2238, %v2238
        %v2243 = vmul.f32 %v2239, %v2239
        %v2244 = vmul.f32 %v2240, %v2240
        %2245 = vadd.xlane.f32.xlu0 %v2241
        %v2246 = vpop.xlane.xlu0 %2245
        %2247 = vadd.xlane.f32.xlu0 %v2242
        %v2248 = vpop.xlane.xlu0 %2247
        %2249 = vadd.xlane.f32.xlu0 %v2243
        %v2250 = vpop.xlane.xlu0 %2249
        %2251 = vadd.xlane.f32.xlu0 %v2244
        %v2252 = vpop.xlane.xlu0 %2251
        %v2253 = vmul.f32 %v2246, %v2232
        %v2254 = vmul.f32 %v2248, %v2232
        %v2255 = vmul.f32 %v2250, %v2232
        %v2256 = vmul.f32 %v2252, %v2232
        %v2257 = vadd.f32 %v2253, 1e-05
        %v2258 = vadd.f32 %v2254, 1e-05
        %v2259 = vadd.f32 %v2255, 1e-05
        %v2260 = vadd.f32 %v2256, 1e-05
        %v2261 = vrsqrt.pop %v2257
        %v2262 = vrsqrt.pop %v2258
        %v2263 = vrsqrt.pop %v2259
        %v2264 = vrsqrt.pop %v2260
        %v2265 = vmul.f32 %v2237, %v2261
        %v2266 = vmul.f32 %v2238, %v2262
        %v2267 = vmul.f32 %v2239, %v2263
        %v2268 = vmul.f32 %v2240, %v2264
        %v2269 = vld [vmem:[%s727] sm:$0x1]
        %v2271 = vlaneseq
        %v2272 = vshrl.u32 %v2271, 7
        %v2273 = vsub.s32 0, %v2272
        %v2274 = vrot.slane %v2269, %v2273
        %v2276 = vmul.f32 %v2265, %v2274
        %v2277 = vmul.f32 %v2266, %v2274
        %v2278 = vmul.f32 %v2267, %v2274
        %v2279 = vmul.f32 %v2268, %v2274
        %v2280 = vld [vmem:[%s730] sm:$0x1]
        %v2282 = vlaneseq
        %v2283 = vshrl.u32 %v2282, 7
        %v2284 = vsub.s32 0, %v2283
        %v2285 = vrot.slane %v2280, %v2284
        %v2287 = vadd.f32 %v2276, %v2285
        %v2288 = vadd.f32 %v2277, %v2285
        %v2289 = vadd.f32 %v2278, %v2285
        %v2290 = vadd.f32 %v2279, %v2285
        %v2291 = vpack.c.bf16 %v2288, %v2287
        %v2292 = vpack.c.bf16 %v2290, %v2289
        %v2293 = vld [vmem:[%s619] sm:$0xff]
        %v2294 = vld [vmem:[%s619 + $0x8] sm:$0xff]
        %v2295 = vld [vmem:[%s619 + $0x10] sm:$0xff]
        %v2296 = vld [vmem:[%s619 + $0x18] sm:$0xff]
        %v2297 = vld [vmem:[%s619 + $0x20] sm:$0xff]
        %v2298 = vld [vmem:[%s619 + $0x28] sm:$0xff]
        %v2299 = vld [vmem:[%s619 + $0x30] sm:$0xff]
        %v2300 = vld [vmem:[%s619 + $0x38] sm:$0xff]
        %v2301 = vld [vmem:[%s619 + $0x40] sm:$0xff]
        %v2302 = vld [vmem:[%s619 + $0x48] sm:$0xff]
        %v2303 = vld [vmem:[%s619 + $0x50] sm:$0xff]
        %v2304 = vld [vmem:[%s619 + $0x58] sm:$0xff]
        %v2305 = vld [vmem:[%s619 + $0x60] sm:$0xff]
        %v2306 = vld [vmem:[%s619 + $0x68] sm:$0xff]
        %v2307 = vld [vmem:[%s619 + $0x70] sm:$0xff]
        %v2308 = vld [vmem:[%s619 + $0x78] sm:$0xff]
        %v2309 = vld [vmem:[%s734] sm:$0x3]
        %v2311 = vlaneseq
        %v2312 = vshrl.u32 %v2311, 7
        %v2313 = vsub.s32 0, %v2312
        %v2314 = vrot.slane %v2309, %v2313
        %v2315 = vlaneseq
        %v2316 = vshrl.u32 %v2315, 7
        %v2317 = vsub.s32 1, %v2316
        %v2318 = vrot.slane %v2309, %v2317
        %v2337 = vunpack.c.l.b16 %v2293
        %v2338 = vunpack.c.h.b16 %v2293
        %v2339 = vunpack.c.l.b16 %v2294
        %v2340 = vunpack.c.h.b16 %v2294
        %v2341 = vunpack.c.l.b16 %v2295
        %v2342 = vunpack.c.h.b16 %v2295
        %v2343 = vunpack.c.l.b16 %v2296
        %v2344 = vunpack.c.h.b16 %v2296
        %v2345 = vunpack.c.l.b16 %v2297
        %v2346 = vunpack.c.h.b16 %v2297
        %v2347 = vunpack.c.l.b16 %v2298
        %v2348 = vunpack.c.h.b16 %v2298
        %v2349 = vunpack.c.l.b16 %v2299
        %v2350 = vunpack.c.h.b16 %v2299
        %v2351 = vunpack.c.l.b16 %v2300
        %v2352 = vunpack.c.h.b16 %v2300
        %v2353 = vunpack.c.l.b16 %v2301
        %v2354 = vunpack.c.h.b16 %v2301
        %v2355 = vunpack.c.l.b16 %v2302
        %v2356 = vunpack.c.h.b16 %v2302
        %v2357 = vunpack.c.l.b16 %v2303
        %v2358 = vunpack.c.h.b16 %v2303
        %v2359 = vunpack.c.l.b16 %v2304
        %v2360 = vunpack.c.h.b16 %v2304
        %v2361 = vunpack.c.l.b16 %v2305
        %v2362 = vunpack.c.h.b16 %v2305
        %v2363 = vunpack.c.l.b16 %v2306
        %v2364 = vunpack.c.h.b16 %v2306
        %v2365 = vunpack.c.l.b16 %v2307
        %v2366 = vunpack.c.h.b16 %v2307
        %v2367 = vunpack.c.l.b16 %v2308
        %v2368 = vunpack.c.h.b16 %v2308
        %v2369 = vpack.c.b16 %v2339, %v2337
        %v2370 = vpack.c.b16 %v2340, %v2338
        %v2371 = vpack.c.b16 %v2343, %v2341
        %v2372 = vpack.c.b16 %v2344, %v2342
        %v2373 = vpack.c.b16 %v2347, %v2345
        %v2374 = vpack.c.b16 %v2348, %v2346
        %v2375 = vpack.c.b16 %v2351, %v2349
        %v2376 = vpack.c.b16 %v2352, %v2350
        %v2377 = vpack.c.b16 %v2355, %v2353
        %v2378 = vpack.c.b16 %v2356, %v2354
        %v2379 = vpack.c.b16 %v2359, %v2357
        %v2380 = vpack.c.b16 %v2360, %v2358
        %v2381 = vpack.c.b16 %v2363, %v2361
        %v2382 = vpack.c.b16 %v2364, %v2362
        %v2383 = vpack.c.b16 %v2367, %v2365
        %v2384 = vpack.c.b16 %v2368, %v2366
        %2401 = vmatprep.subr.bf16.mxu0 %v2370
        %2402 = vmatpush1.bf16.msra.mxu0 %v2369
        %2403 = vmatprep.subr.bf16.mxu0 %v2372
        %2404 = vmatpush1.bf16.msra.mxu0 %v2371
        %2405 = vmatprep.subr.bf16.mxu0 %v2374
        %2406 = vmatpush1.bf16.msra.mxu0 %v2373
        %2407 = vmatprep.subr.bf16.mxu0 %v2376
        %2408 = vmatpush1.bf16.msra.mxu0 %v2375
        %2409 = vmatprep.subr.bf16.mxu0 %v2378
        %2410 = vmatpush1.bf16.msra.mxu0 %v2377
        %2411 = vmatprep.subr.bf16.mxu0 %v2380
        %2412 = vmatpush1.bf16.msra.mxu0 %v2379
        %2413 = vmatprep.subr.bf16.mxu0 %v2382
        %2414 = vmatpush1.bf16.msra.mxu0 %v2381
        %2415 = vmatprep.subr.bf16.mxu0 %v2384
        %2416 = vmatpush1.bf16.msra.mxu0 %v2383
        %2417 = vmatprep.subr.bf16.mxu0 0
        %2418 = vmatpush1.bf16.msra.mxu0 0
        %2419 = vmatprep.subr.bf16.mxu0 0
        %2420 = vmatpush1.bf16.msra.mxu0 0
        %2421 = vmatprep.subr.bf16.mxu0 0
        %2422 = vmatpush1.bf16.msra.mxu0 0
        %2423 = vmatprep.subr.bf16.mxu0 0
        %2424 = vmatpush1.bf16.msra.mxu0 0
        %2425 = vmatprep.subr.bf16.mxu0 0
        %2426 = vmatpush1.bf16.msra.mxu0 0
        %2427 = vmatprep.subr.bf16.mxu0 0
        %2428 = vmatpush1.bf16.msra.mxu0 0
        %2429 = vmatprep.subr.bf16.mxu0 0
        %2430 = vmatpush1.bf16.msra.mxu0 0
        %2431 = vmatprep.subr.bf16.mxu0 0
        %2432 = vmatpush1.bf16.msra.mxu0 0
        %2433 = vmatprep.mubr.bf16.mxu0 0
        %2434 = vmatmul.mubr.bf16.gmra.mrb[0].mxu0 %v2291
        %v2435 = vpop.f32.mrb[0].mxu0
        %v2436 = vadd.f32 %v2314, %v2435
        %v2437 = vpop.f32.mrb[0].mxu0
        %v2438 = vadd.f32 %v2318, %v2437
        %v2439 = vpop.f32.mrb[0].mxu0
        %v2440 = vadd.f32 %v2314, %v2439
        %v2441 = vpop.f32.mrb[0].mxu0
        %v2442 = vadd.f32 %v2318, %v2441
        %2443 = vmatprep.mubr.bf16.mxu0 0
        %2444 = vmatmul.mubr.bf16.gmra.mrb[0].mxu0 %v2292
        %v2445 = vpop.f32.mrb[0].mxu0
        %v2446 = vadd.f32 %v2314, %v2445
        %v2447 = vpop.f32.mrb[0].mxu0
        %v2448 = vadd.f32 %v2318, %v2447
        %v2449 = vpop.f32.mrb[0].mxu0
        %v2450 = vadd.f32 %v2314, %v2449
        %v2451 = vpop.f32.mrb[0].mxu0
        %v2452 = vadd.f32 %v2318, %v2451
        %2453 = vdwg.mxu0
        %v2454 = vmax.f32 %v2436, 0.0
        %v2455 = vmax.f32 %v2438, 0.0
        %v2456 = vmax.f32 %v2440, 0.0
        %v2457 = vmax.f32 %v2442, 0.0
        %v2458 = vmax.f32 %v2446, 0.0
        %v2459 = vmax.f32 %v2448, 0.0
        %v2460 = vmax.f32 %v2450, 0.0
        %v2461 = vmax.f32 %v2452, 0.0
        %v2462 = vpack.c.bf16 %v2456, %v2454
        %v2463 = vpack.c.bf16 %v2457, %v2455
        %v2464 = vpack.c.bf16 %v2460, %v2458
        %v2465 = vpack.c.bf16 %v2461, %v2459
        %v2466 = vld [vmem:[%s628] sm:$0xf]
        %v2467 = vld [vmem:[%s628 + $0x4] sm:$0xf]
        %v2468 = vld [vmem:[%s628 + $0x8] sm:$0xf]
        %v2469 = vld [vmem:[%s628 + $0xc] sm:$0xf]
        %v2470 = vld [vmem:[%s628 + $0x10] sm:$0xf]
        %v2471 = vld [vmem:[%s628 + $0x14] sm:$0xf]
        %v2472 = vld [vmem:[%s628 + $0x18] sm:$0xf]
        %v2473 = vld [vmem:[%s628 + $0x1c] sm:$0xf]
        %v2474 = vld [vmem:[%s628 + $0x20] sm:$0xf]
        %v2475 = vld [vmem:[%s628 + $0x24] sm:$0xf]
        %v2476 = vld [vmem:[%s628 + $0x28] sm:$0xf]
        %v2477 = vld [vmem:[%s628 + $0x2c] sm:$0xf]
        %v2478 = vld [vmem:[%s628 + $0x30] sm:$0xf]
        %v2479 = vld [vmem:[%s628 + $0x34] sm:$0xf]
        %v2480 = vld [vmem:[%s628 + $0x38] sm:$0xf]
        %v2481 = vld [vmem:[%s628 + $0x3c] sm:$0xf]
        %v2482 = vld [vmem:[%s628 + $0x40] sm:$0xf]
        %v2483 = vld [vmem:[%s628 + $0x44] sm:$0xf]
        %v2484 = vld [vmem:[%s628 + $0x48] sm:$0xf]
        %v2485 = vld [vmem:[%s628 + $0x4c] sm:$0xf]
        %v2486 = vld [vmem:[%s628 + $0x50] sm:$0xf]
        %v2487 = vld [vmem:[%s628 + $0x54] sm:$0xf]
        %v2488 = vld [vmem:[%s628 + $0x58] sm:$0xf]
        %v2489 = vld [vmem:[%s628 + $0x5c] sm:$0xf]
        %v2490 = vld [vmem:[%s628 + $0x60] sm:$0xf]
        %v2491 = vld [vmem:[%s628 + $0x64] sm:$0xf]
        %v2492 = vld [vmem:[%s628 + $0x68] sm:$0xf]
        %v2493 = vld [vmem:[%s628 + $0x6c] sm:$0xf]
        %v2494 = vld [vmem:[%s628 + $0x70] sm:$0xf]
        %v2495 = vld [vmem:[%s628 + $0x74] sm:$0xf]
        %v2496 = vld [vmem:[%s628 + $0x78] sm:$0xf]
        %v2497 = vld [vmem:[%s628 + $0x7c] sm:$0xf]
        %v2498 = vld [vmem:[%s737] sm:$0x1]
        %v2500 = vlaneseq
        %v2501 = vshrl.u32 %v2500, 7
        %v2502 = vsub.s32 0, %v2501
        %v2503 = vrot.slane %v2498, %v2502
        %v2537 = vunpack.c.l.b16 %v2466
        %v2538 = vunpack.c.l.b16 %v2467
        %v2539 = vunpack.c.l.b16 %v2468
        %v2540 = vunpack.c.l.b16 %v2469
        %v2541 = vunpack.c.l.b16 %v2470
        %v2542 = vunpack.c.l.b16 %v2471
        %v2543 = vunpack.c.l.b16 %v2472
        %v2544 = vunpack.c.l.b16 %v2473
        %v2545 = vunpack.c.l.b16 %v2474
        %v2546 = vunpack.c.l.b16 %v2475
        %v2547 = vunpack.c.l.b16 %v2476
        %v2548 = vunpack.c.l.b16 %v2477
        %v2549 = vunpack.c.l.b16 %v2478
        %v2550 = vunpack.c.l.b16 %v2479
        %v2551 = vunpack.c.l.b16 %v2480
        %v2552 = vunpack.c.l.b16 %v2481
        %v2553 = vunpack.c.l.b16 %v2482
        %v2554 = vunpack.c.l.b16 %v2483
        %v2555 = vunpack.c.l.b16 %v2484
        %v2556 = vunpack.c.l.b16 %v2485
        %v2557 = vunpack.c.l.b16 %v2486
        %v2558 = vunpack.c.l.b16 %v2487
        %v2559 = vunpack.c.l.b16 %v2488
        %v2560 = vunpack.c.l.b16 %v2489
        %v2561 = vunpack.c.l.b16 %v2490
        %v2562 = vunpack.c.l.b16 %v2491
        %v2563 = vunpack.c.l.b16 %v2492
        %v2564 = vunpack.c.l.b16 %v2493
        %v2565 = vunpack.c.l.b16 %v2494
        %v2566 = vunpack.c.l.b16 %v2495
        %v2567 = vunpack.c.l.b16 %v2496
        %v2568 = vunpack.c.l.b16 %v2497
        %v2569 = vpack.c.b16 %v2538, %v2537
        %v2570 = vpack.c.b16 %v2540, %v2539
        %v2571 = vpack.c.b16 %v2542, %v2541
        %v2572 = vpack.c.b16 %v2544, %v2543
        %v2573 = vpack.c.b16 %v2546, %v2545
        %v2574 = vpack.c.b16 %v2548, %v2547
        %v2575 = vpack.c.b16 %v2550, %v2549
        %v2576 = vpack.c.b16 %v2552, %v2551
        %v2577 = vpack.c.b16 %v2554, %v2553
        %v2578 = vpack.c.b16 %v2556, %v2555
        %v2579 = vpack.c.b16 %v2558, %v2557
        %v2580 = vpack.c.b16 %v2560, %v2559
        %v2581 = vpack.c.b16 %v2562, %v2561
        %v2582 = vpack.c.b16 %v2564, %v2563
        %v2583 = vpack.c.b16 %v2566, %v2565
        %v2584 = vpack.c.b16 %v2568, %v2567
        %2601 = vmatprep.subr.bf16.mxu0 0
        %2602 = vmatpush1.bf16.msra.mxu0 %v2569
        %2603 = vmatprep.subr.bf16.mxu0 0
        %2604 = vmatpush1.bf16.msra.mxu0 %v2570
        %2605 = vmatprep.subr.bf16.mxu0 0
        %2606 = vmatpush1.bf16.msra.mxu0 %v2571
        %2607 = vmatprep.subr.bf16.mxu0 0
        %2608 = vmatpush1.bf16.msra.mxu0 %v2572
        %2609 = vmatprep.subr.bf16.mxu0 0
        %2610 = vmatpush1.bf16.msra.mxu0 %v2573
        %2611 = vmatprep.subr.bf16.mxu0 0
        %2612 = vmatpush1.bf16.msra.mxu0 %v2574
        %2613 = vmatprep.subr.bf16.mxu0 0
        %2614 = vmatpush1.bf16.msra.mxu0 %v2575
        %2615 = vmatprep.subr.bf16.mxu0 0
        %2616 = vmatpush1.bf16.msra.mxu0 %v2576
        %2617 = vmatprep.subr.bf16.mxu0 0
        %2618 = vmatpush1.bf16.msra.mxu0 %v2577
        %2619 = vmatprep.subr.bf16.mxu0 0
        %2620 = vmatpush1.bf16.msra.mxu0 %v2578
        %2621 = vmatprep.subr.bf16.mxu0 0
        %2622 = vmatpush1.bf16.msra.mxu0 %v2579
        %2623 = vmatprep.subr.bf16.mxu0 0
        %2624 = vmatpush1.bf16.msra.mxu0 %v2580
        %2625 = vmatprep.subr.bf16.mxu0 0
        %2626 = vmatpush1.bf16.msra.mxu0 %v2581
        %2627 = vmatprep.subr.bf16.mxu0 0
        %2628 = vmatpush1.bf16.msra.mxu0 %v2582
        %2629 = vmatprep.subr.bf16.mxu0 0
        %2630 = vmatpush1.bf16.msra.mxu0 %v2583
        %2631 = vmatprep.subr.bf16.mxu0 0
        %2632 = vmatpush1.bf16.msra.mxu0 %v2584
        %2633 = vmatprep.mubr.bf16.mxu0 %v2463
        %2634 = vmatmul.mubr.bf16.gmra.mrb[0].mxu0 %v2462
        %v2635 = vpop.f32.mrb[0].mxu0
        %v2636 = vadd.f32 %v2503, %v2635
        %v2637 = vpop.f32.mrb[0].mxu0
        %v2638 = vpop.f32.mrb[0].mxu0
        %v2639 = vadd.f32 %v2503, %v2638
        %v2640 = vpop.f32.mrb[0].mxu0
        %2641 = vmatprep.mubr.bf16.mxu0 %v2465
        %2642 = vmatmul.mubr.bf16.gmra.mrb[0].mxu0 %v2464
        %v2643 = vpop.f32.mrb[0].mxu0
        %v2644 = vadd.f32 %v2503, %v2643
        %v2645 = vpop.f32.mrb[0].mxu0
        %v2646 = vpop.f32.mrb[0].mxu0
        %v2647 = vadd.f32 %v2503, %v2646
        %v2648 = vpop.f32.mrb[0].mxu0
        %2649 = vdwg.mxu0
        %v2650 = vadd.f32 %v2287, %v2636
        %v2651 = vadd.f32 %v2288, %v2639
        %v2652 = vadd.f32 %v2289, %v2644
        %v2653 = vadd.f32 %v2290, %v2647
        %2654 = vadd.xlane.f32.xlu0 %v2650
        %v2655 = vpop.xlane.xlu0 %2654
        %2656 = vadd.xlane.f32.xlu0 %v2651
        %v2657 = vpop.xlane.xlu0 %2656
        %2658 = vadd.xlane.f32.xlu0 %v2652
        %v2659 = vpop.xlane.xlu0 %2658
        %2660 = vadd.xlane.f32.xlu0 %v2653
        %v2661 = vpop.xlane.xlu0 %2660
        %v2662 = vmul.f32 %v2655, %v2232
        %v2663 = vmul.f32 %v2657, %v2232
        %v2664 = vmul.f32 %v2659, %v2232
        %v2665 = vmul.f32 %v2661, %v2232
        %v2666 = vsub.f32 %v2650, %v2662
        %v2667 = vsub.f32 %v2651, %v2663
        %v2668 = vsub.f32 %v2652, %v2664
        %v2669 = vsub.f32 %v2653, %v2665
        %v2670 = vmul.f32 %v2666, %v2666
        %v2671 = vmul.f32 %v2667, %v2667
        %v2672 = vmul.f32 %v2668, %v2668
        %v2673 = vmul.f32 %v2669, %v2669
        %2674 = vadd.xlane.f32.xlu0 %v2670
        %v2675 = vpop.xlane.xlu0 %2674
        %2676 = vadd.xlane.f32.xlu0 %v2671
        %v2677 = vpop.xlane.xlu0 %2676
        %2678 = vadd.xlane.f32.xlu0 %v2672
        %v2679 = vpop.xlane.xlu0 %2678
        %2680 = vadd.xlane.f32.xlu0 %v2673
        %v2681 = vpop.xlane.xlu0 %2680
        %v2682 = vmul.f32 %v2675, %v2232
        %v2683 = vmul.f32 %v2677, %v2232
        %v2684 = vmul.f32 %v2679, %v2232
        %v2685 = vmul.f32 %v2681, %v2232
        %v2686 = vadd.f32 %v2682, 1e-05
        %v2687 = vadd.f32 %v2683, 1e-05
        %v2688 = vadd.f32 %v2684, 1e-05
        %v2689 = vadd.f32 %v2685, 1e-05
        %v2690 = vrsqrt.pop %v2686
        %v2691 = vrsqrt.pop %v2687
        %v2692 = vrsqrt.pop %v2688
        %v2693 = vrsqrt.pop %v2689
        %v2694 = vmul.f32 %v2666, %v2690
        %v2695 = vmul.f32 %v2667, %v2691
        %v2696 = vmul.f32 %v2668, %v2692
        %v2697 = vmul.f32 %v2669, %v2693
        %v2698 = vld [vmem:[%s740] sm:$0x1]
        %v2700 = vlaneseq
        %v2701 = vshrl.u32 %v2700, 7
        %v2702 = vsub.s32 0, %v2701
        %v2703 = vrot.slane %v2698, %v2702
        %v2705 = vmul.f32 %v2694, %v2703
        %v2706 = vmul.f32 %v2695, %v2703
        %v2707 = vmul.f32 %v2696, %v2703
        %v2708 = vmul.f32 %v2697, %v2703
        %v2709 = vld [vmem:[%s743] sm:$0x1]
        %v2711 = vlaneseq
        %v2712 = vshrl.u32 %v2711, 7
        %v2713 = vsub.s32 0, %v2712
        %v2714 = vrot.slane %v2709, %v2713
        %v2716 = vadd.f32 %v2705, %v2714
        %v2717 = vadd.f32 %v2706, %v2714
        %v2718 = vadd.f32 %v2707, %v2714
        %v2719 = vadd.f32 %v2708, %v2714
        %2720 = vst [vmem:[#allocation2] sm:$0xff] %v2716
        %2721 = vst [vmem:[#allocation2 + $0x8] sm:$0xff] %v2717
        %2722 = vst [vmem:[#allocation2 + $0x10] sm:$0xff] %v2718
        %2723 = vst [vmem:[#allocation2 + $0x18] sm:$0xff] %v2719
        %p2724 = scmp.eq.s32.totalorder %s41, 1
        // Predicated region
        $region97: #{tpu_custom_call.1} parent=71 // pred_check
          %p2725 = pneg %p2724
        $region98: #{tpu_custom_call.1} parent=71 // pred_check_branch
          %2727 = sbr.rel (%p2725) target = $region100
        $region99: #{tpu_custom_call.1} parent=71 // pred_region
          %2728 = vst [vmem:[%s716] sm:$0xff] %v2716
          %2729 = vst [vmem:[%s716 + $0x8] sm:$0xff] %v2717
          %2730 = vst [vmem:[%s716 + $0x10] sm:$0xff] %v2718
          %2731 = vst [vmem:[%s716 + $0x18] sm:$0xff] %v2719
        $region100: #{tpu_custom_call.1} parent=71 // pred_fallthru
          _
        %s2732 = sand.u32 %s394, 1
        %s2733 = scalar_lea.sflag [#allocation6], %s2732
        %s2734 = sand.u32 %s394, 1
        %s2735 = smul.addr %s2734, 32
        %s2736 = scalar_lea.vmem [#allocation13], %s2735
        // Predicated region
        $region101: #{tpu_custom_call.1} parent=71 // pred_check
          %p2737 = pneg %p404
        $region102: #{tpu_custom_call.1} parent=71 // pred_check_branch
          %2739 = sbr.rel (%p2737) target = $region104
        $region103: #{tpu_custom_call.1} parent=71 // pred_region
          %s2740 = smul.u32 4, %s40
          %s2742 = ssub.s32 512, 512
          %2743 = vsyncadd %s2733, %s2742
          %s2744 = smul.addr %s2740, 128
          %s2745 = scalar_lea.hbm %s13, %s2744
          %s2746 = sshll.u32 %s2736, 4
          %s2747 = int_to_ptr.vmem [resolvable:$true] %s2746
          %2752 = dma.vmem_to_hbm [thread:$0]  %s2747, 512, %s2745, %s2733, 128, 128, 8
        $region104: #{tpu_custom_call.1} parent=71 // pred_fallthru
          _
      $region72: #{tpu_custom_call.1} parent=5 // pred_fallthru
        _
      %p2753 = scmp.le.s32.totalorder 2, %s31
      // Predicated region
      $region105: #{tpu_custom_call.1} parent=5 // pred_check
        %p2754 = pneg %p2753
      $region106: #{tpu_custom_call.1} parent=5 // pred_check_branch
        %2756 = sbr.rel (%p2754) target = $region108
      $region107: #{tpu_custom_call.1} parent=5 // pred_region
        %s2757 = ssub.s32 %s31, 2
        // Predicated region
        $region109: #{tpu_custom_call.1} parent=107 // pred_check
          %p2758 = pneg %p410
        $region110: #{tpu_custom_call.1} parent=107 // pred_check_branch
          %2760 = sbr.rel (%p2758) target = $region112
        $region111: #{tpu_custom_call.1} parent=107 // pred_region
          %s2761 = sand.u32 %s395, 1
          %s2762 = scalar_lea.sflag [#allocation6], %s2761
          %s2763 = sand.u32 %s395, 1
          %s2764 = smul.addr %s2763, 32
          %s2765 = scalar_lea.vmem [#allocation13], %s2764
          %2766 = dma.done %s2762, 512
        $region112: #{tpu_custom_call.1} parent=107 // pred_fallthru
          _
      $region108: #{tpu_custom_call.1} parent=5 // pred_fallthru
        _
    $region6: #{tpu_custom_call.1} parent=1 // loop_footer
      %s35 = sadd.s32 1, %s31
    $region7: #{tpu_custom_call.1} parent=1 // loop_footer_branch
      %30 = sbr.rel target = $region3
    $region8: #{tpu_custom_call.1} parent=1 // loop_exit
      _
    %2767 = vsyncpa [#allocation5], 1
    %s2768 = scalar_lea.sflag [#allocation5], 1
    %2769 = vsyncpa %s2768, 1
    %2770 = vsyncpa [#allocation8], 1
    %s2771 = scalar_lea.sflag [#allocation8], 1
    %2772 = vsyncpa %s2771, 1
    %2773 = vsyncpa [#allocation11], 1
    %s2774 = scalar_lea.sflag [#allocation11], 1
    %2775 = vsyncpa %s2774, 1
    %2776 = vsyncpa [#allocation6], 1
    %s2777 = scalar_lea.sflag [#allocation6], 1
    %2778 = vsyncpa %s2777, 1

</llo_original>
